<compile_context>
chip_gen: v6e
topology: v6e:2x2x1
jax: 0.10.0
libtpu: 0.0.40
codegen_flags: <defaults>
</compile_context>

<pallas_src>
import functools

import jax
import jax.numpy as jnp
from jax.experimental import pallas as pl
from jax.experimental.pallas import tpu as pltpu

# Matmul operand dtype (accumulation is always f32 via preferred_element_type).
MM_DTYPE = jnp.bfloat16


# ----------------------------- in-kernel helpers -----------------------------

def _layernorm(x, gamma, beta, eps=1e-5):
    mu = jnp.mean(x, axis=-1, keepdims=True)
    var = jnp.mean((x - mu) ** 2, axis=-1, keepdims=True)
    return (x - mu) * jax.lax.rsqrt(var + eps) * gamma + beta


def _gelu_tanh(x):
    # TODO(synk): PyTorch nn.GELU() default is the exact erf form; tanh
    # approximation used here (max abs err ~1e-3) for robust TPU lowering.
    return 0.5 * x * (1.0 + jnp.tanh(0.7978845608028654 * (x + 0.044715 * x * x * x)))


# --------------------------------- kernel ------------------------------------

def block_kernel(x_ref, g1_ref, be1_ref, wq_ref, wk_ref, wv_ref, wp_ref, bp_ref,
                 g2_ref, be2_ref, w1_ref, b1_ref, dww_ref, dwb_ref, w2_ref,
                 b2_ref, cmask_ref, out_ref, *, num_heads, scale, H, W):
    """Fused LN1+MHSA+proj+residual and LN2+fc1+dwconv3x3+GELU+fc2+residual."""
    x = x_ref[0]                                              # (N, C) f32
    N = H * W

    # ---------------- attention branch ----------------
    xn = _layernorm(x, g1_ref[...], be1_ref[...])             # f32 stats
    xn_m = xn.astype(MM_DTYPE)

    attn_acc = jnp.zeros_like(x)
    for h in range(num_heads):
        # Per-head weights indexed on the leading axis -> no lane-dim slicing.
        qh = jnp.dot(xn_m, wq_ref[h], preferred_element_type=jnp.float32)  # (N, hd)
        kh = jnp.dot(xn_m, wk_ref[h], preferred_element_type=jnp.float32)
        vh = jnp.dot(xn_m, wv_ref[h], preferred_element_type=jnp.float32)

        q_s = (qh * scale).astype(MM_DTYPE)
        s = jax.lax.dot_general(q_s, kh.astype(MM_DTYPE),
                                (((1,), (1,)), ((), ())),
                                preferred_element_type=jnp.float32)        # (N, N)
        s = s - jnp.max(s, axis=-1, keepdims=True)
        p = jnp.exp(s)
        p = p * pl.reciprocal(jnp.sum(p, axis=-1, keepdims=True), approx=True)

        oh = jnp.dot(p.astype(MM_DTYPE), vh.astype(MM_DTYPE),
                     preferred_element_type=jnp.float32)                   # (N, hd)
        # Accumulate directly into the projection (no head concatenation).
        attn_acc = attn_acc + jnp.dot(oh.astype(MM_DTYPE), wp_ref[h],
                                      preferred_element_type=jnp.float32)  # (N, C)

    y1 = x + attn_acc + bp_ref[...]                           # residual 1 (f32)

    # ---------------- MLP branch ----------------
    yn = _layernorm(y1, g2_ref[...], be2_ref[...])
    h1 = jnp.dot(yn.astype(MM_DTYPE), w1_ref[...],
                 preferred_element_type=jnp.float32) + b1_ref[...]         # (N, Hd)

    # 3x3 depthwise conv on the flattened (N, Hd) layout: each non-center tap
    # is a static sublane roll (XLU) + mask/weight multiply (VPU).  The edge
    # masks zero every wrapped-around / out-of-image contribution.
    acc = h1 * dww_ref[4] + dwb_ref[...]                      # center tap (dy=dx=0)
    t = 0
    for dy in (-1, 0, 1):
        for dx in (-1, 0, 1):
            if not (dy == 0 and dx == 0):
                d = dy * W + dx                                # token-index offset
                shifted = pltpu.roll(h1, shift=(-d) % N, axis=0)  # shifted[n] = h1[n+d]
                acc = acc + shifted * cmask_ref[t] * dww_ref[t]
            t += 1

    act = _gelu_tanh(acc)
    out_ref[0] = y1 + jnp.dot(act.astype(MM_DTYPE), w2_ref[...],
                              preferred_element_type=jnp.float32) + b2_ref[...]


# --------------------------------- wrapper -----------------------------------

def block_forward(x, H, W, p, num_heads):
    B, N, C = x.shape
    assert N == H * W
    head_dim = C // num_heads
    scale = head_dim ** (-0.5)
    Hd = p["w1"].shape[1]

    # ---- trace-time weight preprocessing (runs once, outside the kernel) ----
    def per_head_in_out(w):        # (C, num_heads*hd) -> (num_heads, C, hd)
        return jnp.transpose(w.reshape(C, num_heads, head_dim), (1, 0, 2)).astype(MM_DTYPE)

    wq_h = per_head_in_out(p["wq"])
    wk_h = per_head_in_out(p["wkv"][:, :C])      # slice the WEIGHT, not the activation
    wv_h = per_head_in_out(p["wkv"][:, C:])
    wp_h = p["wp"].reshape(num_heads, head_dim, C).astype(MM_DTYPE)
    w1 = p["w1"].astype(MM_DTYPE)
    w2 = p["w2"].astype(MM_DTYPE)
    dww = p["dww"].reshape(9, 1, Hd)             # tap index = (dy+1)*3 + (dx+1)

    # Valid-position masks for the 9 conv taps (trace-time constants, (9,N,1)).
    ys = jnp.arange(N, dtype=jnp.int32) // W
    xs = jnp.arange(N, dtype=jnp.int32) % W
    masks = []
    for dy in (-1, 0, 1):
        for dx in (-1, 0, 1):
            m = ((ys + dy >= 0) & (ys + dy < H) & (xs + dx >= 0) & (xs + dx < W))
            masks.append(m.astype(jnp.float32))
    cmask = jnp.stack(masks, axis=0).reshape(9, N, 1)

    full = lambda a: pl.BlockSpec(a.shape, lambda b, _nd=a.ndim: (0,) * _nd)
    tok_c = pl.BlockSpec((1, N, C), lambda b: (b, 0, 0))

    kernel = functools.partial(block_kernel, num_heads=num_heads,
                               scale=scale, H=H, W=W)
    args = (x, p["g1"], p["be1"], wq_h, wk_h, wv_h, wp_h, p["bp"],
            p["g2"], p["be2"], w1, p["b1"], dww, p["dwb"], w2, p["b2"], cmask)

    # One fused kernel, grid over batch.  B=2 keeps per-step work large; for
    # big models, block several batches per step / tile N for v7x's 2 TCs.
    return pl.pallas_call(
        kernel,
        out_shape=jax.ShapeDtypeStruct((B, N, C), jnp.float32),
        grid=(B,),
        in_specs=[tok_c] + [full(a) for a in args[1:]],
        out_specs=tok_c,
        compiler_params=pltpu.CompilerParams(dimension_semantics=("parallel",)),
    )(*args)


# ------------------------------- param setup ----------------------------------

def init_params(key, C, num_heads, mlp_ratio=4.0):
    """Deterministic synthetic parameters matching the PyTorch module's shapes.

    Linear weights are stored as (in, out) (i.e. torch W.T); the depthwise conv
    weight (Hd, 1, 3, 3) is stored as (9, Hd) with index ky*3+kx.
    """
    Hd = int(C * mlp_ratio)
    ks = jax.random.split(key, 10)
    n = lambda k, shape: (0.02 * jax.random.normal(k, shape)).astype(jnp.float32)
    return dict(
        g1=jnp.ones((1, C), jnp.float32), be1=jnp.zeros((1, C), jnp.float32),
        wq=n(ks[0], (C, C)),                 # q: Linear(dim, dim, bias=False)
        wkv=n(ks[1], (C, 2 * C)),            # kv: Linear(dim, 2*dim, bias=False)
        wp=n(ks[2], (C, C)), bp=n(ks[3], (1, C)),   # proj: Linear(dim, dim)
        g2=jnp.ones((1, C), jnp.float32), be2=jnp.zeros((1, C), jnp.float32),
        w1=n(ks[4], (C, Hd)), b1=n(ks[5], (1, Hd)),  # fc1
        dww=n(ks[6], (9, Hd)), dwb=n(ks[7], (1, Hd)),  # depthwise 3x3 conv
        w2=n(ks[8], (Hd, C)), b2=n(ks[9], (1, C)),   # fc2
    )


if __name__ == "__main__":
    B, C, num_heads, H, W = 2, 32, 4, 8, 8
    N = H * W

    key = jax.random.PRNGKey(0)
    kx, kp = jax.random.split(key)
    x = jax.random.normal(kx, (B, N, C), jnp.float32)
    params = init_params(kp, C, num_heads)

    out = block_forward(x, H, W, params, num_heads)
    out = jax.block_until_ready(out)
    assert out.shape == (B, N, C) and out.dtype == jnp.float32
    assert bool(jnp.all(jnp.isfinite(out)))
    print("KERNEL_OK")
</pallas_src>

<mosaic_0001>
module attributes {stable_mosaic.version = 11 : i64} {
  func.func @block_kernel(%arg0: i32, %arg1: memref<1x64x32xf32, #tpu.memory_space<vmem>>, %arg2: memref<1x32xf32, #tpu.memory_space<vmem>>, %arg3: memref<1x32xf32, #tpu.memory_space<vmem>>, %arg4: memref<4x32x8xbf16, #tpu.memory_space<vmem>>, %arg5: memref<4x32x8xbf16, #tpu.memory_space<vmem>>, %arg6: memref<4x32x8xbf16, #tpu.memory_space<vmem>>, %arg7: memref<4x8x32xbf16, #tpu.memory_space<vmem>>, %arg8: memref<1x32xf32, #tpu.memory_space<vmem>>, %arg9: memref<1x32xf32, #tpu.memory_space<vmem>>, %arg10: memref<1x32xf32, #tpu.memory_space<vmem>>, %arg11: memref<32x128xbf16, #tpu.memory_space<vmem>>, %arg12: memref<1x128xf32, #tpu.memory_space<vmem>>, %arg13: memref<9x1x128xf32, #tpu.memory_space<vmem>>, %arg14: memref<1x128xf32, #tpu.memory_space<vmem>>, %arg15: memref<128x32xbf16, #tpu.memory_space<vmem>>, %arg16: memref<1x32xf32, #tpu.memory_space<vmem>>, %arg17: memref<9x64x1xf32, #tpu.memory_space<vmem>>, %arg18: memref<1x64x32xf32, #tpu.memory_space<vmem>>) attributes {dimension_semantics = [#tpu.dimension_semantics<parallel>], iteration_bounds = array<i64: 2>, scalar_prefetch = 0 : i64, scratch_operands = 0 : i64, tpu.core_type = #tpu.core_type<tc>, window_params = [{transform_indices = @transform_0, window_bounds = array<i64: 1, 64, 32>}, {pipeline_mode = #tpu.pipeline_mode<synchronous>, transform_indices = @transform_1, window_bounds = array<i64: 1, 32>}, {pipeline_mode = #tpu.pipeline_mode<synchronous>, transform_indices = @transform_2, window_bounds = array<i64: 1, 32>}, {pipeline_mode = #tpu.pipeline_mode<synchronous>, transform_indices = @transform_3, window_bounds = array<i64: 4, 32, 8>}, {pipeline_mode = #tpu.pipeline_mode<synchronous>, transform_indices = @transform_4, window_bounds = array<i64: 4, 32, 8>}, {pipeline_mode = #tpu.pipeline_mode<synchronous>, transform_indices = @transform_5, window_bounds = array<i64: 4, 32, 8>}, {pipeline_mode = #tpu.pipeline_mode<synchronous>, transform_indices = @transform_6, window_bounds = array<i64: 4, 8, 32>}, {pipeline_mode = #tpu.pipeline_mode<synchronous>, transform_indices = @transform_7, window_bounds = array<i64: 1, 32>}, {pipeline_mode = #tpu.pipeline_mode<synchronous>, transform_indices = @transform_8, window_bounds = array<i64: 1, 32>}, {pipeline_mode = #tpu.pipeline_mode<synchronous>, transform_indices = @transform_9, window_bounds = array<i64: 1, 32>}, {pipeline_mode = #tpu.pipeline_mode<synchronous>, transform_indices = @transform_10, window_bounds = array<i64: 32, 128>}, {pipeline_mode = #tpu.pipeline_mode<synchronous>, transform_indices = @transform_11, window_bounds = array<i64: 1, 128>}, {pipeline_mode = #tpu.pipeline_mode<synchronous>, transform_indices = @transform_12, window_bounds = array<i64: 9, 1, 128>}, {pipeline_mode = #tpu.pipeline_mode<synchronous>, transform_indices = @transform_13, window_bounds = array<i64: 1, 128>}, {pipeline_mode = #tpu.pipeline_mode<synchronous>, transform_indices = @transform_14, window_bounds = array<i64: 128, 32>}, {pipeline_mode = #tpu.pipeline_mode<synchronous>, transform_indices = @transform_15, window_bounds = array<i64: 1, 32>}, {pipeline_mode = #tpu.pipeline_mode<synchronous>, transform_indices = @transform_16, window_bounds = array<i64: 9, 64, 1>}, {transform_indices = @transform_17, window_bounds = array<i64: 1, 64, 32>}]} {
    %c0 = arith.constant 0 : index
    %c0_0 = arith.constant 0 : index
    %c0_1 = arith.constant 0 : index
    %0 = vector.load %arg1[%c0, %c0_0, %c0_1] : memref<1x64x32xf32, #tpu.memory_space<vmem>>, vector<1x64x32xf32>
    %1 = vector.shape_cast %0 : vector<1x64x32xf32> to vector<64x32xf32>
    %c0_2 = arith.constant 0 : index
    %c0_3 = arith.constant 0 : index
    %2 = vector.load %arg2[%c0_2, %c0_3] : memref<1x32xf32, #tpu.memory_space<vmem>>, vector<1x32xf32>
    %c0_4 = arith.constant 0 : index
    %c0_5 = arith.constant 0 : index
    %3 = vector.load %arg3[%c0_4, %c0_5] : memref<1x32xf32, #tpu.memory_space<vmem>>, vector<1x32xf32>
    %cst = arith.constant dense<0.000000e+00> : vector<64xf32>
    %4 = vector.multi_reduction <add>, %1, %cst [1] : vector<64x32xf32> to vector<64xf32>
    %5 = vector.shape_cast %4 : vector<64xf32> to vector<64x1xf32>
    %cst_6 = arith.constant 3.200000e+01 : f32
    %6 = vector.broadcast %cst_6 : f32 to vector<64x1xf32>
    %7 = arith.divf %5, %6 : vector<64x1xf32>
    %8 = vector.broadcast %7 : vector<64x1xf32> to vector<64x32xf32>
    %9 = arith.subf %1, %8 : vector<64x32xf32>
    %10 = arith.mulf %9, %9 : vector<64x32xf32>
    %cst_7 = arith.constant dense<0.000000e+00> : vector<64xf32>
    %11 = vector.multi_reduction <add>, %10, %cst_7 [1] : vector<64x32xf32> to vector<64xf32>
    %12 = vector.shape_cast %11 : vector<64xf32> to vector<64x1xf32>
    %cst_8 = arith.constant 3.200000e+01 : f32
    %13 = vector.broadcast %cst_8 : f32 to vector<64x1xf32>
    %14 = arith.divf %12, %13 : vector<64x1xf32>
    %15 = vector.broadcast %7 : vector<64x1xf32> to vector<64x32xf32>
    %16 = arith.subf %1, %15 : vector<64x32xf32>
    %cst_9 = arith.constant 9.99999974E-6 : f32
    %17 = vector.broadcast %cst_9 : f32 to vector<64x1xf32>
    %18 = arith.addf %14, %17 : vector<64x1xf32>
    %19 = math.rsqrt %18 : vector<64x1xf32>
    %20 = vector.broadcast %19 : vector<64x1xf32> to vector<64x32xf32>
    %21 = arith.mulf %16, %20 : vector<64x32xf32>
    %22 = vector.broadcast %2 : vector<1x32xf32> to vector<64x32xf32>
    %23 = arith.mulf %21, %22 : vector<64x32xf32>
    %24 = vector.broadcast %3 : vector<1x32xf32> to vector<64x32xf32>
    %25 = arith.addf %23, %24 : vector<64x32xf32>
    %26 = arith.truncf %25 : vector<64x32xf32> to vector<64x32xbf16>
    %cst_10 = arith.constant 0.000000e+00 : f32
    %27 = vector.broadcast %cst_10 : f32 to vector<64x32xf32>
    %c0_11 = arith.constant 0 : index
    %c0_12 = arith.constant 0 : index
    %c0_13 = arith.constant 0 : index
    %28 = vector.load %arg4[%c0_11, %c0_12, %c0_13] : memref<4x32x8xbf16, #tpu.memory_space<vmem>>, vector<1x32x8xbf16>
    %29 = vector.shape_cast %28 : vector<1x32x8xbf16> to vector<32x8xbf16>
    %cst_14 = arith.constant dense<0.000000e+00> : vector<64x8xf32>
    %30 = tpu.matmul %26, %29, %cst_14 {dimension_numbers = #tpu.dot_dimension_numbers<[1], [0], [0], [1], [0, 0, 1, 1], [], []>} : vector<64x32xbf16>, vector<32x8xbf16>, vector<64x8xf32> -> vector<64x8xf32>
    %c0_15 = arith.constant 0 : index
    %c0_16 = arith.constant 0 : index
    %c0_17 = arith.constant 0 : index
    %31 = vector.load %arg5[%c0_15, %c0_16, %c0_17] : memref<4x32x8xbf16, #tpu.memory_space<vmem>>, vector<1x32x8xbf16>
    %32 = vector.shape_cast %31 : vector<1x32x8xbf16> to vector<32x8xbf16>
    %cst_18 = arith.constant dense<0.000000e+00> : vector<64x8xf32>
    %33 = tpu.matmul %26, %32, %cst_18 {dimension_numbers = #tpu.dot_dimension_numbers<[1], [0], [0], [1], [0, 0, 1, 1], [], []>} : vector<64x32xbf16>, vector<32x8xbf16>, vector<64x8xf32> -> vector<64x8xf32>
    %c0_19 = arith.constant 0 : index
    %c0_20 = arith.constant 0 : index
    %c0_21 = arith.constant 0 : index
    %34 = vector.load %arg6[%c0_19, %c0_20, %c0_21] : memref<4x32x8xbf16, #tpu.memory_space<vmem>>, vector<1x32x8xbf16>
    %35 = vector.shape_cast %34 : vector<1x32x8xbf16> to vector<32x8xbf16>
    %cst_22 = arith.constant dense<0.000000e+00> : vector<64x8xf32>
    %36 = tpu.matmul %26, %35, %cst_22 {dimension_numbers = #tpu.dot_dimension_numbers<[1], [0], [0], [1], [0, 0, 1, 1], [], []>} : vector<64x32xbf16>, vector<32x8xbf16>, vector<64x8xf32> -> vector<64x8xf32>
    %cst_23 = arith.constant 0.353553385 : f32
    %37 = vector.broadcast %cst_23 : f32 to vector<64x8xf32>
    %38 = arith.mulf %30, %37 : vector<64x8xf32>
    %39 = arith.truncf %38 : vector<64x8xf32> to vector<64x8xbf16>
    %40 = arith.truncf %33 : vector<64x8xf32> to vector<64x8xbf16>
    %cst_24 = arith.constant dense<0.000000e+00> : vector<64x64xf32>
    %41 = tpu.matmul %39, %40, %cst_24 {dimension_numbers = #tpu.dot_dimension_numbers<[1], [1], [0], [0], [0, 0, 1, 0], [], []>} : vector<64x8xbf16>, vector<64x8xbf16>, vector<64x64xf32> -> vector<64x64xf32>
    %cst_25 = arith.constant dense<0xFF800000> : vector<64xf32>
    %42 = vector.multi_reduction <maximumf>, %41, %cst_25 [1] : vector<64x64xf32> to vector<64xf32>
    %43 = vector.shape_cast %42 : vector<64xf32> to vector<64x1xf32>
    %44 = vector.broadcast %43 : vector<64x1xf32> to vector<64x64xf32>
    %45 = arith.subf %41, %44 : vector<64x64xf32>
    %46 = math.exp %45 : vector<64x64xf32>
    %cst_26 = arith.constant dense<0.000000e+00> : vector<64xf32>
    %47 = vector.multi_reduction <add>, %46, %cst_26 [1] : vector<64x64xf32> to vector<64xf32>
    %48 = vector.shape_cast %47 : vector<64xf32> to vector<64x1xf32>
    %49 = tpu.reciprocal %48 {approx = true} : vector<64x1xf32> -> vector<64x1xf32>
    %50 = vector.broadcast %49 : vector<64x1xf32> to vector<64x64xf32>
    %51 = arith.mulf %46, %50 : vector<64x64xf32>
    %52 = arith.truncf %51 : vector<64x64xf32> to vector<64x64xbf16>
    %53 = arith.truncf %36 : vector<64x8xf32> to vector<64x8xbf16>
    %cst_27 = arith.constant dense<0.000000e+00> : vector<64x8xf32>
    %54 = tpu.matmul %52, %53, %cst_27 {dimension_numbers = #tpu.dot_dimension_numbers<[1], [0], [0], [1], [0, 0, 1, 1], [], []>} : vector<64x64xbf16>, vector<64x8xbf16>, vector<64x8xf32> -> vector<64x8xf32>
    %55 = arith.truncf %54 : vector<64x8xf32> to vector<64x8xbf16>
    %c0_28 = arith.constant 0 : index
    %c0_29 = arith.constant 0 : index
    %c0_30 = arith.constant 0 : index
    %56 = vector.load %arg7[%c0_28, %c0_29, %c0_30] : memref<4x8x32xbf16, #tpu.memory_space<vmem>>, vector<1x8x32xbf16>
    %57 = vector.shape_cast %56 : vector<1x8x32xbf16> to vector<8x32xbf16>
    %cst_31 = arith.constant dense<0.000000e+00> : vector<64x32xf32>
    %58 = tpu.matmul %55, %57, %cst_31 {dimension_numbers = #tpu.dot_dimension_numbers<[1], [0], [0], [1], [0, 0, 1, 1], [], []>} : vector<64x8xbf16>, vector<8x32xbf16>, vector<64x32xf32> -> vector<64x32xf32>
    %59 = arith.addf %27, %58 : vector<64x32xf32>
    %c1 = arith.constant 1 : index
    %c0_32 = arith.constant 0 : index
    %c0_33 = arith.constant 0 : index
    %60 = vector.load %arg4[%c1, %c0_32, %c0_33] : memref<4x32x8xbf16, #tpu.memory_space<vmem>>, vector<1x32x8xbf16>
    %61 = vector.shape_cast %60 : vector<1x32x8xbf16> to vector<32x8xbf16>
    %cst_34 = arith.constant dense<0.000000e+00> : vector<64x8xf32>
    %62 = tpu.matmul %26, %61, %cst_34 {dimension_numbers = #tpu.dot_dimension_numbers<[1], [0], [0], [1], [0, 0, 1, 1], [], []>} : vector<64x32xbf16>, vector<32x8xbf16>, vector<64x8xf32> -> vector<64x8xf32>
    %c1_35 = arith.constant 1 : index
    %c0_36 = arith.constant 0 : index
    %c0_37 = arith.constant 0 : index
    %63 = vector.load %arg5[%c1_35, %c0_36, %c0_37] : memref<4x32x8xbf16, #tpu.memory_space<vmem>>, vector<1x32x8xbf16>
    %64 = vector.shape_cast %63 : vector<1x32x8xbf16> to vector<32x8xbf16>
    %cst_38 = arith.constant dense<0.000000e+00> : vector<64x8xf32>
    %65 = tpu.matmul %26, %64, %cst_38 {dimension_numbers = #tpu.dot_dimension_numbers<[1], [0], [0], [1], [0, 0, 1, 1], [], []>} : vector<64x32xbf16>, vector<32x8xbf16>, vector<64x8xf32> -> vector<64x8xf32>
    %c1_39 = arith.constant 1 : index
    %c0_40 = arith.constant 0 : index
    %c0_41 = arith.constant 0 : index
    %66 = vector.load %arg6[%c1_39, %c0_40, %c0_41] : memref<4x32x8xbf16, #tpu.memory_space<vmem>>, vector<1x32x8xbf16>
    %67 = vector.shape_cast %66 : vector<1x32x8xbf16> to vector<32x8xbf16>
    %cst_42 = arith.constant dense<0.000000e+00> : vector<64x8xf32>
    %68 = tpu.matmul %26, %67, %cst_42 {dimension_numbers = #tpu.dot_dimension_numbers<[1], [0], [0], [1], [0, 0, 1, 1], [], []>} : vector<64x32xbf16>, vector<32x8xbf16>, vector<64x8xf32> -> vector<64x8xf32>
    %cst_43 = arith.constant 0.353553385 : f32
    %69 = vector.broadcast %cst_43 : f32 to vector<64x8xf32>
    %70 = arith.mulf %62, %69 : vector<64x8xf32>
    %71 = arith.truncf %70 : vector<64x8xf32> to vector<64x8xbf16>
    %72 = arith.truncf %65 : vector<64x8xf32> to vector<64x8xbf16>
    %cst_44 = arith.constant dense<0.000000e+00> : vector<64x64xf32>
    %73 = tpu.matmul %71, %72, %cst_44 {dimension_numbers = #tpu.dot_dimension_numbers<[1], [1], [0], [0], [0, 0, 1, 0], [], []>} : vector<64x8xbf16>, vector<64x8xbf16>, vector<64x64xf32> -> vector<64x64xf32>
    %cst_45 = arith.constant dense<0xFF800000> : vector<64xf32>
    %74 = vector.multi_reduction <maximumf>, %73, %cst_45 [1] : vector<64x64xf32> to vector<64xf32>
    %75 = vector.shape_cast %74 : vector<64xf32> to vector<64x1xf32>
    %76 = vector.broadcast %75 : vector<64x1xf32> to vector<64x64xf32>
    %77 = arith.subf %73, %76 : vector<64x64xf32>
    %78 = math.exp %77 : vector<64x64xf32>
    %cst_46 = arith.constant dense<0.000000e+00> : vector<64xf32>
    %79 = vector.multi_reduction <add>, %78, %cst_46 [1] : vector<64x64xf32> to vector<64xf32>
    %80 = vector.shape_cast %79 : vector<64xf32> to vector<64x1xf32>
    %81 = tpu.reciprocal %80 {approx = true} : vector<64x1xf32> -> vector<64x1xf32>
    %82 = vector.broadcast %81 : vector<64x1xf32> to vector<64x64xf32>
    %83 = arith.mulf %78, %82 : vector<64x64xf32>
    %84 = arith.truncf %83 : vector<64x64xf32> to vector<64x64xbf16>
    %85 = arith.truncf %68 : vector<64x8xf32> to vector<64x8xbf16>
    %cst_47 = arith.constant dense<0.000000e+00> : vector<64x8xf32>
    %86 = tpu.matmul %84, %85, %cst_47 {dimension_numbers = #tpu.dot_dimension_numbers<[1], [0], [0], [1], [0, 0, 1, 1], [], []>} : vector<64x64xbf16>, vector<64x8xbf16>, vector<64x8xf32> -> vector<64x8xf32>
    %87 = arith.truncf %86 : vector<64x8xf32> to vector<64x8xbf16>
    %c1_48 = arith.constant 1 : index
    %c0_49 = arith.constant 0 : index
    %c0_50 = arith.constant 0 : index
    %88 = vector.load %arg7[%c1_48, %c0_49, %c0_50] : memref<4x8x32xbf16, #tpu.memory_space<vmem>>, vector<1x8x32xbf16>
    %89 = vector.shape_cast %88 : vector<1x8x32xbf16> to vector<8x32xbf16>
    %cst_51 = arith.constant dense<0.000000e+00> : vector<64x32xf32>
    %90 = tpu.matmul %87, %89, %cst_51 {dimension_numbers = #tpu.dot_dimension_numbers<[1], [0], [0], [1], [0, 0, 1, 1], [], []>} : vector<64x8xbf16>, vector<8x32xbf16>, vector<64x32xf32> -> vector<64x32xf32>
    %91 = arith.addf %59, %90 : vector<64x32xf32>
    %c2 = arith.constant 2 : index
    %c0_52 = arith.constant 0 : index
    %c0_53 = arith.constant 0 : index
    %92 = vector.load %arg4[%c2, %c0_52, %c0_53] : memref<4x32x8xbf16, #tpu.memory_space<vmem>>, vector<1x32x8xbf16>
    %93 = vector.shape_cast %92 : vector<1x32x8xbf16> to vector<32x8xbf16>
    %cst_54 = arith.constant dense<0.000000e+00> : vector<64x8xf32>
    %94 = tpu.matmul %26, %93, %cst_54 {dimension_numbers = #tpu.dot_dimension_numbers<[1], [0], [0], [1], [0, 0, 1, 1], [], []>} : vector<64x32xbf16>, vector<32x8xbf16>, vector<64x8xf32> -> vector<64x8xf32>
    %c2_55 = arith.constant 2 : index
    %c0_56 = arith.constant 0 : index
    %c0_57 = arith.constant 0 : index
    %95 = vector.load %arg5[%c2_55, %c0_56, %c0_57] : memref<4x32x8xbf16, #tpu.memory_space<vmem>>, vector<1x32x8xbf16>
    %96 = vector.shape_cast %95 : vector<1x32x8xbf16> to vector<32x8xbf16>
    %cst_58 = arith.constant dense<0.000000e+00> : vector<64x8xf32>
    %97 = tpu.matmul %26, %96, %cst_58 {dimension_numbers = #tpu.dot_dimension_numbers<[1], [0], [0], [1], [0, 0, 1, 1], [], []>} : vector<64x32xbf16>, vector<32x8xbf16>, vector<64x8xf32> -> vector<64x8xf32>
    %c2_59 = arith.constant 2 : index
    %c0_60 = arith.constant 0 : index
    %c0_61 = arith.constant 0 : index
    %98 = vector.load %arg6[%c2_59, %c0_60, %c0_61] : memref<4x32x8xbf16, #tpu.memory_space<vmem>>, vector<1x32x8xbf16>
    %99 = vector.shape_cast %98 : vector<1x32x8xbf16> to vector<32x8xbf16>
    %cst_62 = arith.constant dense<0.000000e+00> : vector<64x8xf32>
    %100 = tpu.matmul %26, %99, %cst_62 {dimension_numbers = #tpu.dot_dimension_numbers<[1], [0], [0], [1], [0, 0, 1, 1], [], []>} : vector<64x32xbf16>, vector<32x8xbf16>, vector<64x8xf32> -> vector<64x8xf32>
    %cst_63 = arith.constant 0.353553385 : f32
    %101 = vector.broadcast %cst_63 : f32 to vector<64x8xf32>
    %102 = arith.mulf %94, %101 : vector<64x8xf32>
    %103 = arith.truncf %102 : vector<64x8xf32> to vector<64x8xbf16>
    %104 = arith.truncf %97 : vector<64x8xf32> to vector<64x8xbf16>
    %cst_64 = arith.constant dense<0.000000e+00> : vector<64x64xf32>
    %105 = tpu.matmul %103, %104, %cst_64 {dimension_numbers = #tpu.dot_dimension_numbers<[1], [1], [0], [0], [0, 0, 1, 0], [], []>} : vector<64x8xbf16>, vector<64x8xbf16>, vector<64x64xf32> -> vector<64x64xf32>
    %cst_65 = arith.constant dense<0xFF800000> : vector<64xf32>
    %106 = vector.multi_reduction <maximumf>, %105, %cst_65 [1] : vector<64x64xf32> to vector<64xf32>
    %107 = vector.shape_cast %106 : vector<64xf32> to vector<64x1xf32>
    %108 = vector.broadcast %107 : vector<64x1xf32> to vector<64x64xf32>
    %109 = arith.subf %105, %108 : vector<64x64xf32>
    %110 = math.exp %109 : vector<64x64xf32>
    %cst_66 = arith.constant dense<0.000000e+00> : vector<64xf32>
    %111 = vector.multi_reduction <add>, %110, %cst_66 [1] : vector<64x64xf32> to vector<64xf32>
    %112 = vector.shape_cast %111 : vector<64xf32> to vector<64x1xf32>
    %113 = tpu.reciprocal %112 {approx = true} : vector<64x1xf32> -> vector<64x1xf32>
    %114 = vector.broadcast %113 : vector<64x1xf32> to vector<64x64xf32>
    %115 = arith.mulf %110, %114 : vector<64x64xf32>
    %116 = arith.truncf %115 : vector<64x64xf32> to vector<64x64xbf16>
    %117 = arith.truncf %100 : vector<64x8xf32> to vector<64x8xbf16>
    %cst_67 = arith.constant dense<0.000000e+00> : vector<64x8xf32>
    %118 = tpu.matmul %116, %117, %cst_67 {dimension_numbers = #tpu.dot_dimension_numbers<[1], [0], [0], [1], [0, 0, 1, 1], [], []>} : vector<64x64xbf16>, vector<64x8xbf16>, vector<64x8xf32> -> vector<64x8xf32>
    %119 = arith.truncf %118 : vector<64x8xf32> to vector<64x8xbf16>
    %c2_68 = arith.constant 2 : index
    %c0_69 = arith.constant 0 : index
    %c0_70 = arith.constant 0 : index
    %120 = vector.load %arg7[%c2_68, %c0_69, %c0_70] : memref<4x8x32xbf16, #tpu.memory_space<vmem>>, vector<1x8x32xbf16>
    %121 = vector.shape_cast %120 : vector<1x8x32xbf16> to vector<8x32xbf16>
    %cst_71 = arith.constant dense<0.000000e+00> : vector<64x32xf32>
    %122 = tpu.matmul %119, %121, %cst_71 {dimension_numbers = #tpu.dot_dimension_numbers<[1], [0], [0], [1], [0, 0, 1, 1], [], []>} : vector<64x8xbf16>, vector<8x32xbf16>, vector<64x32xf32> -> vector<64x32xf32>
    %123 = arith.addf %91, %122 : vector<64x32xf32>
    %c3 = arith.constant 3 : index
    %c0_72 = arith.constant 0 : index
    %c0_73 = arith.constant 0 : index
    %124 = vector.load %arg4[%c3, %c0_72, %c0_73] : memref<4x32x8xbf16, #tpu.memory_space<vmem>>, vector<1x32x8xbf16>
    %125 = vector.shape_cast %124 : vector<1x32x8xbf16> to vector<32x8xbf16>
    %cst_74 = arith.constant dense<0.000000e+00> : vector<64x8xf32>
    %126 = tpu.matmul %26, %125, %cst_74 {dimension_numbers = #tpu.dot_dimension_numbers<[1], [0], [0], [1], [0, 0, 1, 1], [], []>} : vector<64x32xbf16>, vector<32x8xbf16>, vector<64x8xf32> -> vector<64x8xf32>
    %c3_75 = arith.constant 3 : index
    %c0_76 = arith.constant 0 : index
    %c0_77 = arith.constant 0 : index
    %127 = vector.load %arg5[%c3_75, %c0_76, %c0_77] : memref<4x32x8xbf16, #tpu.memory_space<vmem>>, vector<1x32x8xbf16>
    %128 = vector.shape_cast %127 : vector<1x32x8xbf16> to vector<32x8xbf16>
    %cst_78 = arith.constant dense<0.000000e+00> : vector<64x8xf32>
    %129 = tpu.matmul %26, %128, %cst_78 {dimension_numbers = #tpu.dot_dimension_numbers<[1], [0], [0], [1], [0, 0, 1, 1], [], []>} : vector<64x32xbf16>, vector<32x8xbf16>, vector<64x8xf32> -> vector<64x8xf32>
    %c3_79 = arith.constant 3 : index
    %c0_80 = arith.constant 0 : index
    %c0_81 = arith.constant 0 : index
    %130 = vector.load %arg6[%c3_79, %c0_80, %c0_81] : memref<4x32x8xbf16, #tpu.memory_space<vmem>>, vector<1x32x8xbf16>
    %131 = vector.shape_cast %130 : vector<1x32x8xbf16> to vector<32x8xbf16>
    %cst_82 = arith.constant dense<0.000000e+00> : vector<64x8xf32>
    %132 = tpu.matmul %26, %131, %cst_82 {dimension_numbers = #tpu.dot_dimension_numbers<[1], [0], [0], [1], [0, 0, 1, 1], [], []>} : vector<64x32xbf16>, vector<32x8xbf16>, vector<64x8xf32> -> vector<64x8xf32>
    %cst_83 = arith.constant 0.353553385 : f32
    %133 = vector.broadcast %cst_83 : f32 to vector<64x8xf32>
    %134 = arith.mulf %126, %133 : vector<64x8xf32>
    %135 = arith.truncf %134 : vector<64x8xf32> to vector<64x8xbf16>
    %136 = arith.truncf %129 : vector<64x8xf32> to vector<64x8xbf16>
    %cst_84 = arith.constant dense<0.000000e+00> : vector<64x64xf32>
    %137 = tpu.matmul %135, %136, %cst_84 {dimension_numbers = #tpu.dot_dimension_numbers<[1], [1], [0], [0], [0, 0, 1, 0], [], []>} : vector<64x8xbf16>, vector<64x8xbf16>, vector<64x64xf32> -> vector<64x64xf32>
    %cst_85 = arith.constant dense<0xFF800000> : vector<64xf32>
    %138 = vector.multi_reduction <maximumf>, %137, %cst_85 [1] : vector<64x64xf32> to vector<64xf32>
    %139 = vector.shape_cast %138 : vector<64xf32> to vector<64x1xf32>
    %140 = vector.broadcast %139 : vector<64x1xf32> to vector<64x64xf32>
    %141 = arith.subf %137, %140 : vector<64x64xf32>
    %142 = math.exp %141 : vector<64x64xf32>
    %cst_86 = arith.constant dense<0.000000e+00> : vector<64xf32>
    %143 = vector.multi_reduction <add>, %142, %cst_86 [1] : vector<64x64xf32> to vector<64xf32>
    %144 = vector.shape_cast %143 : vector<64xf32> to vector<64x1xf32>
    %145 = tpu.reciprocal %144 {approx = true} : vector<64x1xf32> -> vector<64x1xf32>
    %146 = vector.broadcast %145 : vector<64x1xf32> to vector<64x64xf32>
    %147 = arith.mulf %142, %146 : vector<64x64xf32>
    %148 = arith.truncf %147 : vector<64x64xf32> to vector<64x64xbf16>
    %149 = arith.truncf %132 : vector<64x8xf32> to vector<64x8xbf16>
    %cst_87 = arith.constant dense<0.000000e+00> : vector<64x8xf32>
    %150 = tpu.matmul %148, %149, %cst_87 {dimension_numbers = #tpu.dot_dimension_numbers<[1], [0], [0], [1], [0, 0, 1, 1], [], []>} : vector<64x64xbf16>, vector<64x8xbf16>, vector<64x8xf32> -> vector<64x8xf32>
    %151 = arith.truncf %150 : vector<64x8xf32> to vector<64x8xbf16>
    %c3_88 = arith.constant 3 : index
    %c0_89 = arith.constant 0 : index
    %c0_90 = arith.constant 0 : index
    %152 = vector.load %arg7[%c3_88, %c0_89, %c0_90] : memref<4x8x32xbf16, #tpu.memory_space<vmem>>, vector<1x8x32xbf16>
    %153 = vector.shape_cast %152 : vector<1x8x32xbf16> to vector<8x32xbf16>
    %cst_91 = arith.constant dense<0.000000e+00> : vector<64x32xf32>
    %154 = tpu.matmul %151, %153, %cst_91 {dimension_numbers = #tpu.dot_dimension_numbers<[1], [0], [0], [1], [0, 0, 1, 1], [], []>} : vector<64x8xbf16>, vector<8x32xbf16>, vector<64x32xf32> -> vector<64x32xf32>
    %155 = arith.addf %123, %154 : vector<64x32xf32>
    %156 = arith.addf %1, %155 : vector<64x32xf32>
    %c0_92 = arith.constant 0 : index
    %c0_93 = arith.constant 0 : index
    %157 = vector.load %arg8[%c0_92, %c0_93] : memref<1x32xf32, #tpu.memory_space<vmem>>, vector<1x32xf32>
    %158 = vector.broadcast %157 : vector<1x32xf32> to vector<64x32xf32>
    %159 = arith.addf %156, %158 : vector<64x32xf32>
    %c0_94 = arith.constant 0 : index
    %c0_95 = arith.constant 0 : index
    %160 = vector.load %arg9[%c0_94, %c0_95] : memref<1x32xf32, #tpu.memory_space<vmem>>, vector<1x32xf32>
    %c0_96 = arith.constant 0 : index
    %c0_97 = arith.constant 0 : index
    %161 = vector.load %arg10[%c0_96, %c0_97] : memref<1x32xf32, #tpu.memory_space<vmem>>, vector<1x32xf32>
    %cst_98 = arith.constant dense<0.000000e+00> : vector<64xf32>
    %162 = vector.multi_reduction <add>, %159, %cst_98 [1] : vector<64x32xf32> to vector<64xf32>
    %163 = vector.shape_cast %162 : vector<64xf32> to vector<64x1xf32>
    %cst_99 = arith.constant 3.200000e+01 : f32
    %164 = vector.broadcast %cst_99 : f32 to vector<64x1xf32>
    %165 = arith.divf %163, %164 : vector<64x1xf32>
    %166 = vector.broadcast %165 : vector<64x1xf32> to vector<64x32xf32>
    %167 = arith.subf %159, %166 : vector<64x32xf32>
    %168 = arith.mulf %167, %167 : vector<64x32xf32>
    %cst_100 = arith.constant dense<0.000000e+00> : vector<64xf32>
    %169 = vector.multi_reduction <add>, %168, %cst_100 [1] : vector<64x32xf32> to vector<64xf32>
    %170 = vector.shape_cast %169 : vector<64xf32> to vector<64x1xf32>
    %cst_101 = arith.constant 3.200000e+01 : f32
    %171 = vector.broadcast %cst_101 : f32 to vector<64x1xf32>
    %172 = arith.divf %170, %171 : vector<64x1xf32>
    %173 = vector.broadcast %165 : vector<64x1xf32> to vector<64x32xf32>
    %174 = arith.subf %159, %173 : vector<64x32xf32>
    %cst_102 = arith.constant 9.99999974E-6 : f32
    %175 = vector.broadcast %cst_102 : f32 to vector<64x1xf32>
    %176 = arith.addf %172, %175 : vector<64x1xf32>
    %177 = math.rsqrt %176 : vector<64x1xf32>
    %178 = vector.broadcast %177 : vector<64x1xf32> to vector<64x32xf32>
    %179 = arith.mulf %174, %178 : vector<64x32xf32>
    %180 = vector.broadcast %160 : vector<1x32xf32> to vector<64x32xf32>
    %181 = arith.mulf %179, %180 : vector<64x32xf32>
    %182 = vector.broadcast %161 : vector<1x32xf32> to vector<64x32xf32>
    %183 = arith.addf %181, %182 : vector<64x32xf32>
    %184 = arith.truncf %183 : vector<64x32xf32> to vector<64x32xbf16>
    %c0_103 = arith.constant 0 : index
    %c0_104 = arith.constant 0 : index
    %185 = vector.load %arg11[%c0_103, %c0_104] : memref<32x128xbf16, #tpu.memory_space<vmem>>, vector<32x128xbf16>
    %cst_105 = arith.constant dense<0.000000e+00> : vector<64x128xf32>
    %186 = tpu.matmul %184, %185, %cst_105 {dimension_numbers = #tpu.dot_dimension_numbers<[1], [0], [0], [1], [0, 0, 1, 1], [], []>} : vector<64x32xbf16>, vector<32x128xbf16>, vector<64x128xf32> -> vector<64x128xf32>
    %c0_106 = arith.constant 0 : index
    %c0_107 = arith.constant 0 : index
    %187 = vector.load %arg12[%c0_106, %c0_107] : memref<1x128xf32, #tpu.memory_space<vmem>>, vector<1x128xf32>
    %188 = vector.broadcast %187 : vector<1x128xf32> to vector<64x128xf32>
    %189 = arith.addf %186, %188 : vector<64x128xf32>
    %c4 = arith.constant 4 : index
    %c0_108 = arith.constant 0 : index
    %c0_109 = arith.constant 0 : index
    %190 = vector.load %arg13[%c4, %c0_108, %c0_109] : memref<9x1x128xf32, #tpu.memory_space<vmem>>, vector<1x1x128xf32>
    %191 = vector.shape_cast %190 : vector<1x1x128xf32> to vector<1x128xf32>
    %192 = vector.broadcast %191 : vector<1x128xf32> to vector<64x128xf32>
    %193 = arith.mulf %189, %192 : vector<64x128xf32>
    %c0_110 = arith.constant 0 : index
    %c0_111 = arith.constant 0 : index
    %194 = vector.load %arg14[%c0_110, %c0_111] : memref<1x128xf32, #tpu.memory_space<vmem>>, vector<1x128xf32>
    %195 = vector.broadcast %194 : vector<1x128xf32> to vector<64x128xf32>
    %196 = arith.addf %193, %195 : vector<64x128xf32>
    %c9_i32 = arith.constant 9 : i32
    %197 = tpu.dynamic_rotate %189 by %c9_i32 dim 0 : vector<64x128xf32>, i32 -> vector<64x128xf32>
    %c0_112 = arith.constant 0 : index
    %c0_113 = arith.constant 0 : index
    %c0_114 = arith.constant 0 : index
    %198 = vector.load %arg17[%c0_112, %c0_113, %c0_114] : memref<9x64x1xf32, #tpu.memory_space<vmem>>, vector<1x64x1xf32>
    %199 = vector.shape_cast %198 : vector<1x64x1xf32> to vector<64x1xf32>
    %200 = vector.broadcast %199 : vector<64x1xf32> to vector<64x128xf32>
    %201 = arith.mulf %197, %200 : vector<64x128xf32>
    %c0_115 = arith.constant 0 : index
    %c0_116 = arith.constant 0 : index
    %c0_117 = arith.constant 0 : index
    %202 = vector.load %arg13[%c0_115, %c0_116, %c0_117] : memref<9x1x128xf32, #tpu.memory_space<vmem>>, vector<1x1x128xf32>
    %203 = vector.shape_cast %202 : vector<1x1x128xf32> to vector<1x128xf32>
    %204 = vector.broadcast %203 : vector<1x128xf32> to vector<64x128xf32>
    %205 = arith.mulf %201, %204 : vector<64x128xf32>
    %206 = arith.addf %196, %205 : vector<64x128xf32>
    %c8_i32 = arith.constant 8 : i32
    %207 = tpu.dynamic_rotate %189 by %c8_i32 dim 0 : vector<64x128xf32>, i32 -> vector<64x128xf32>
    %c1_118 = arith.constant 1 : index
    %c0_119 = arith.constant 0 : index
    %c0_120 = arith.constant 0 : index
    %208 = vector.load %arg17[%c1_118, %c0_119, %c0_120] : memref<9x64x1xf32, #tpu.memory_space<vmem>>, vector<1x64x1xf32>
    %209 = vector.shape_cast %208 : vector<1x64x1xf32> to vector<64x1xf32>
    %210 = vector.broadcast %209 : vector<64x1xf32> to vector<64x128xf32>
    %211 = arith.mulf %207, %210 : vector<64x128xf32>
    %c1_121 = arith.constant 1 : index
    %c0_122 = arith.constant 0 : index
    %c0_123 = arith.constant 0 : index
    %212 = vector.load %arg13[%c1_121, %c0_122, %c0_123] : memref<9x1x128xf32, #tpu.memory_space<vmem>>, vector<1x1x128xf32>
    %213 = vector.shape_cast %212 : vector<1x1x128xf32> to vector<1x128xf32>
    %214 = vector.broadcast %213 : vector<1x128xf32> to vector<64x128xf32>
    %215 = arith.mulf %211, %214 : vector<64x128xf32>
    %216 = arith.addf %206, %215 : vector<64x128xf32>
    %c7_i32 = arith.constant 7 : i32
    %217 = tpu.dynamic_rotate %189 by %c7_i32 dim 0 : vector<64x128xf32>, i32 -> vector<64x128xf32>
    %c2_124 = arith.constant 2 : index
    %c0_125 = arith.constant 0 : index
    %c0_126 = arith.constant 0 : index
    %218 = vector.load %arg17[%c2_124, %c0_125, %c0_126] : memref<9x64x1xf32, #tpu.memory_space<vmem>>, vector<1x64x1xf32>
    %219 = vector.shape_cast %218 : vector<1x64x1xf32> to vector<64x1xf32>
    %220 = vector.broadcast %219 : vector<64x1xf32> to vector<64x128xf32>
    %221 = arith.mulf %217, %220 : vector<64x128xf32>
    %c2_127 = arith.constant 2 : index
    %c0_128 = arith.constant 0 : index
    %c0_129 = arith.constant 0 : index
    %222 = vector.load %arg13[%c2_127, %c0_128, %c0_129] : memref<9x1x128xf32, #tpu.memory_space<vmem>>, vector<1x1x128xf32>
    %223 = vector.shape_cast %222 : vector<1x1x128xf32> to vector<1x128xf32>
    %224 = vector.broadcast %223 : vector<1x128xf32> to vector<64x128xf32>
    %225 = arith.mulf %221, %224 : vector<64x128xf32>
    %226 = arith.addf %216, %225 : vector<64x128xf32>
    %c1_i32 = arith.constant 1 : i32
    %227 = tpu.dynamic_rotate %189 by %c1_i32 dim 0 : vector<64x128xf32>, i32 -> vector<64x128xf32>
    %c3_130 = arith.constant 3 : index
    %c0_131 = arith.constant 0 : index
    %c0_132 = arith.constant 0 : index
    %228 = vector.load %arg17[%c3_130, %c0_131, %c0_132] : memref<9x64x1xf32, #tpu.memory_space<vmem>>, vector<1x64x1xf32>
    %229 = vector.shape_cast %228 : vector<1x64x1xf32> to vector<64x1xf32>
    %230 = vector.broadcast %229 : vector<64x1xf32> to vector<64x128xf32>
    %231 = arith.mulf %227, %230 : vector<64x128xf32>
    %c3_133 = arith.constant 3 : index
    %c0_134 = arith.constant 0 : index
    %c0_135 = arith.constant 0 : index
    %232 = vector.load %arg13[%c3_133, %c0_134, %c0_135] : memref<9x1x128xf32, #tpu.memory_space<vmem>>, vector<1x1x128xf32>
    %233 = vector.shape_cast %232 : vector<1x1x128xf32> to vector<1x128xf32>
    %234 = vector.broadcast %233 : vector<1x128xf32> to vector<64x128xf32>
    %235 = arith.mulf %231, %234 : vector<64x128xf32>
    %236 = arith.addf %226, %235 : vector<64x128xf32>
    %c63_i32 = arith.constant 63 : i32
    %237 = tpu.dynamic_rotate %189 by %c63_i32 dim 0 : vector<64x128xf32>, i32 -> vector<64x128xf32>
    %c5 = arith.constant 5 : index
    %c0_136 = arith.constant 0 : index
    %c0_137 = arith.constant 0 : index
    %238 = vector.load %arg17[%c5, %c0_136, %c0_137] : memref<9x64x1xf32, #tpu.memory_space<vmem>>, vector<1x64x1xf32>
    %239 = vector.shape_cast %238 : vector<1x64x1xf32> to vector<64x1xf32>
    %240 = vector.broadcast %239 : vector<64x1xf32> to vector<64x128xf32>
    %241 = arith.mulf %237, %240 : vector<64x128xf32>
    %c5_138 = arith.constant 5 : index
    %c0_139 = arith.constant 0 : index
    %c0_140 = arith.constant 0 : index
    %242 = vector.load %arg13[%c5_138, %c0_139, %c0_140] : memref<9x1x128xf32, #tpu.memory_space<vmem>>, vector<1x1x128xf32>
    %243 = vector.shape_cast %242 : vector<1x1x128xf32> to vector<1x128xf32>
    %244 = vector.broadcast %243 : vector<1x128xf32> to vector<64x128xf32>
    %245 = arith.mulf %241, %244 : vector<64x128xf32>
    %246 = arith.addf %236, %245 : vector<64x128xf32>
    %c57_i32 = arith.constant 57 : i32
    %247 = tpu.dynamic_rotate %189 by %c57_i32 dim 0 : vector<64x128xf32>, i32 -> vector<64x128xf32>
    %c6 = arith.constant 6 : index
    %c0_141 = arith.constant 0 : index
    %c0_142 = arith.constant 0 : index
    %248 = vector.load %arg17[%c6, %c0_141, %c0_142] : memref<9x64x1xf32, #tpu.memory_space<vmem>>, vector<1x64x1xf32>
    %249 = vector.shape_cast %248 : vector<1x64x1xf32> to vector<64x1xf32>
    %250 = vector.broadcast %249 : vector<64x1xf32> to vector<64x128xf32>
    %251 = arith.mulf %247, %250 : vector<64x128xf32>
    %c6_143 = arith.constant 6 : index
    %c0_144 = arith.constant 0 : index
    %c0_145 = arith.constant 0 : index
    %252 = vector.load %arg13[%c6_143, %c0_144, %c0_145] : memref<9x1x128xf32, #tpu.memory_space<vmem>>, vector<1x1x128xf32>
    %253 = vector.shape_cast %252 : vector<1x1x128xf32> to vector<1x128xf32>
    %254 = vector.broadcast %253 : vector<1x128xf32> to vector<64x128xf32>
    %255 = arith.mulf %251, %254 : vector<64x128xf32>
    %256 = arith.addf %246, %255 : vector<64x128xf32>
    %c56_i32 = arith.constant 56 : i32
    %257 = tpu.dynamic_rotate %189 by %c56_i32 dim 0 : vector<64x128xf32>, i32 -> vector<64x128xf32>
    %c7 = arith.constant 7 : index
    %c0_146 = arith.constant 0 : index
    %c0_147 = arith.constant 0 : index
    %258 = vector.load %arg17[%c7, %c0_146, %c0_147] : memref<9x64x1xf32, #tpu.memory_space<vmem>>, vector<1x64x1xf32>
    %259 = vector.shape_cast %258 : vector<1x64x1xf32> to vector<64x1xf32>
    %260 = vector.broadcast %259 : vector<64x1xf32> to vector<64x128xf32>
    %261 = arith.mulf %257, %260 : vector<64x128xf32>
    %c7_148 = arith.constant 7 : index
    %c0_149 = arith.constant 0 : index
    %c0_150 = arith.constant 0 : index
    %262 = vector.load %arg13[%c7_148, %c0_149, %c0_150] : memref<9x1x128xf32, #tpu.memory_space<vmem>>, vector<1x1x128xf32>
    %263 = vector.shape_cast %262 : vector<1x1x128xf32> to vector<1x128xf32>
    %264 = vector.broadcast %263 : vector<1x128xf32> to vector<64x128xf32>
    %265 = arith.mulf %261, %264 : vector<64x128xf32>
    %266 = arith.addf %256, %265 : vector<64x128xf32>
    %c55_i32 = arith.constant 55 : i32
    %267 = tpu.dynamic_rotate %189 by %c55_i32 dim 0 : vector<64x128xf32>, i32 -> vector<64x128xf32>
    %c8 = arith.constant 8 : index
    %c0_151 = arith.constant 0 : index
    %c0_152 = arith.constant 0 : index
    %268 = vector.load %arg17[%c8, %c0_151, %c0_152] : memref<9x64x1xf32, #tpu.memory_space<vmem>>, vector<1x64x1xf32>
    %269 = vector.shape_cast %268 : vector<1x64x1xf32> to vector<64x1xf32>
    %270 = vector.broadcast %269 : vector<64x1xf32> to vector<64x128xf32>
    %271 = arith.mulf %267, %270 : vector<64x128xf32>
    %c8_153 = arith.constant 8 : index
    %c0_154 = arith.constant 0 : index
    %c0_155 = arith.constant 0 : index
    %272 = vector.load %arg13[%c8_153, %c0_154, %c0_155] : memref<9x1x128xf32, #tpu.memory_space<vmem>>, vector<1x1x128xf32>
    %273 = vector.shape_cast %272 : vector<1x1x128xf32> to vector<1x128xf32>
    %274 = vector.broadcast %273 : vector<1x128xf32> to vector<64x128xf32>
    %275 = arith.mulf %271, %274 : vector<64x128xf32>
    %276 = arith.addf %266, %275 : vector<64x128xf32>
    %cst_156 = arith.constant 5.000000e-01 : f32
    %277 = vector.broadcast %cst_156 : f32 to vector<64x128xf32>
    %278 = arith.mulf %277, %276 : vector<64x128xf32>
    %cst_157 = arith.constant 4.471500e-02 : f32
    %279 = vector.broadcast %cst_157 : f32 to vector<64x128xf32>
    %280 = arith.mulf %279, %276 : vector<64x128xf32>
    %281 = arith.mulf %280, %276 : vector<64x128xf32>
    %282 = arith.mulf %281, %276 : vector<64x128xf32>
    %283 = arith.addf %276, %282 : vector<64x128xf32>
    %cst_158 = arith.constant 0.797884583 : f32
    %284 = vector.broadcast %cst_158 : f32 to vector<64x128xf32>
    %285 = arith.mulf %284, %283 : vector<64x128xf32>
    %286 = math.tanh %285 : vector<64x128xf32>
    %cst_159 = arith.constant 1.000000e+00 : f32
    %287 = vector.broadcast %cst_159 : f32 to vector<64x128xf32>
    %288 = arith.addf %287, %286 : vector<64x128xf32>
    %289 = arith.mulf %278, %288 : vector<64x128xf32>
    %290 = arith.truncf %289 : vector<64x128xf32> to vector<64x128xbf16>
    %c0_160 = arith.constant 0 : index
    %c0_161 = arith.constant 0 : index
    %291 = vector.load %arg15[%c0_160, %c0_161] : memref<128x32xbf16, #tpu.memory_space<vmem>>, vector<128x32xbf16>
    %cst_162 = arith.constant dense<0.000000e+00> : vector<64x32xf32>
    %292 = tpu.matmul %290, %291, %cst_162 {dimension_numbers = #tpu.dot_dimension_numbers<[1], [0], [0], [1], [0, 0, 1, 1], [], []>} : vector<64x128xbf16>, vector<128x32xbf16>, vector<64x32xf32> -> vector<64x32xf32>
    %293 = arith.addf %159, %292 : vector<64x32xf32>
    %c0_163 = arith.constant 0 : index
    %c0_164 = arith.constant 0 : index
    %294 = vector.load %arg16[%c0_163, %c0_164] : memref<1x32xf32, #tpu.memory_space<vmem>>, vector<1x32xf32>
    %295 = vector.broadcast %294 : vector<1x32xf32> to vector<64x32xf32>
    %296 = arith.addf %293, %295 : vector<64x32xf32>
    %c0_165 = arith.constant 0 : index
    %c0_166 = arith.constant 0 : index
    %c0_167 = arith.constant 0 : index
    %297 = vector.load %arg18[%c0_165, %c0_166, %c0_167] : memref<1x64x32xf32, #tpu.memory_space<vmem>>, vector<1x64x32xf32>
    %298 = vector.shape_cast %297 : vector<1x64x32xf32> to vector<64x32xf32>
    %299 = vector.shape_cast %296 : vector<64x32xf32> to vector<1x64x32xf32>
    tpu.vector_store %arg18[%c0_165, %c0_166, %c0_167], %299 {strides = array<i32>} : memref<1x64x32xf32, #tpu.memory_space<vmem>>, vector<1x64x32xf32>,
    return
  }
  func.func @transform_0(%arg0: i32) -> (i32, i32, i32) {
    %c0_i32 = arith.constant 0 : i32
    %c0_i32_0 = arith.constant 0 : i32
    %c0_i32_1 = arith.constant 0 : i32
    return %arg0, %c0_i32, %c0_i32_0 : i32, i32, i32
  }
  func.func @transform_1(%arg0: i32) -> (i32, i32) {
    %c0_i32 = arith.constant 0 : i32
    %c0_i32_0 = arith.constant 0 : i32
    %c0_i32_1 = arith.constant 0 : i32
    return %c0_i32, %c0_i32_0 : i32, i32
  }
  func.func @transform_2(%arg0: i32) -> (i32, i32) {
    %c0_i32 = arith.constant 0 : i32
    %c0_i32_0 = arith.constant 0 : i32
    %c0_i32_1 = arith.constant 0 : i32
    return %c0_i32, %c0_i32_0 : i32, i32
  }
  func.func @transform_3(%arg0: i32) -> (i32, i32, i32) {
    %c0_i32 = arith.constant 0 : i32
    %c0_i32_0 = arith.constant 0 : i32
    %c0_i32_1 = arith.constant 0 : i32
    %c0_i32_2 = arith.constant 0 : i32
    return %c0_i32, %c0_i32_0, %c0_i32_1 : i32, i32, i32
  }
  func.func @transform_4(%arg0: i32) -> (i32, i32, i32) {
    %c0_i32 = arith.constant 0 : i32
    %c0_i32_0 = arith.constant 0 : i32
    %c0_i32_1 = arith.constant 0 : i32
    %c0_i32_2 = arith.constant 0 : i32
    return %c0_i32, %c0_i32_0, %c0_i32_1 : i32, i32, i32
  }
  func.func @transform_5(%arg0: i32) -> (i32, i32, i32) {
    %c0_i32 = arith.constant 0 : i32
    %c0_i32_0 = arith.constant 0 : i32
    %c0_i32_1 = arith.constant 0 : i32
    %c0_i32_2 = arith.constant 0 : i32
    return %c0_i32, %c0_i32_0, %c0_i32_1 : i32, i32, i32
  }
  func.func @transform_6(%arg0: i32) -> (i32, i32, i32) {
    %c0_i32 = arith.constant 0 : i32
    %c0_i32_0 = arith.constant 0 : i32
    %c0_i32_1 = arith.constant 0 : i32
    %c0_i32_2 = arith.constant 0 : i32
    return %c0_i32, %c0_i32_0, %c0_i32_1 : i32, i32, i32
  }
  func.func @transform_7(%arg0: i32) -> (i32, i32) {
    %c0_i32 = arith.constant 0 : i32
    %c0_i32_0 = arith.constant 0 : i32
    %c0_i32_1 = arith.constant 0 : i32
    return %c0_i32, %c0_i32_0 : i32, i32
  }
  func.func @transform_8(%arg0: i32) -> (i32, i32) {
    %c0_i32 = arith.constant 0 : i32
    %c0_i32_0 = arith.constant 0 : i32
    %c0_i32_1 = arith.constant 0 : i32
    return %c0_i32, %c0_i32_0 : i32, i32
  }
  func.func @transform_9(%arg0: i32) -> (i32, i32) {
    %c0_i32 = arith.constant 0 : i32
    %c0_i32_0 = arith.constant 0 : i32
    %c0_i32_1 = arith.constant 0 : i32
    return %c0_i32, %c0_i32_0 : i32, i32
  }
  func.func @transform_10(%arg0: i32) -> (i32, i32) {
    %c0_i32 = arith.constant 0 : i32
    %c0_i32_0 = arith.constant 0 : i32
    %c0_i32_1 = arith.constant 0 : i32
    return %c0_i32, %c0_i32_0 : i32, i32
  }
  func.func @transform_11(%arg0: i32) -> (i32, i32) {
    %c0_i32 = arith.constant 0 : i32
    %c0_i32_0 = arith.constant 0 : i32
    %c0_i32_1 = arith.constant 0 : i32
    return %c0_i32, %c0_i32_0 : i32, i32
  }
  func.func @transform_12(%arg0: i32) -> (i32, i32, i32) {
    %c0_i32 = arith.constant 0 : i32
    %c0_i32_0 = arith.constant 0 : i32
    %c0_i32_1 = arith.constant 0 : i32
    %c0_i32_2 = arith.constant 0 : i32
    return %c0_i32, %c0_i32_0, %c0_i32_1 : i32, i32, i32
  }
  func.func @transform_13(%arg0: i32) -> (i32, i32) {
    %c0_i32 = arith.constant 0 : i32
    %c0_i32_0 = arith.constant 0 : i32
    %c0_i32_1 = arith.constant 0 : i32
    return %c0_i32, %c0_i32_0 : i32, i32
  }
  func.func @transform_14(%arg0: i32) -> (i32, i32) {
    %c0_i32 = arith.constant 0 : i32
    %c0_i32_0 = arith.constant 0 : i32
    %c0_i32_1 = arith.constant 0 : i32
    return %c0_i32, %c0_i32_0 : i32, i32
  }
  func.func @transform_15(%arg0: i32) -> (i32, i32) {
    %c0_i32 = arith.constant 0 : i32
    %c0_i32_0 = arith.constant 0 : i32
    %c0_i32_1 = arith.constant 0 : i32
    return %c0_i32, %c0_i32_0 : i32, i32
  }
  func.func @transform_16(%arg0: i32) -> (i32, i32, i32) {
    %c0_i32 = arith.constant 0 : i32
    %c0_i32_0 = arith.constant 0 : i32
    %c0_i32_1 = arith.constant 0 : i32
    %c0_i32_2 = arith.constant 0 : i32
    return %c0_i32, %c0_i32_0, %c0_i32_1 : i32, i32, i32
  }
  func.func @transform_17(%arg0: i32) -> (i32, i32, i32) {
    %c0_i32 = arith.constant 0 : i32
    %c0_i32_0 = arith.constant 0 : i32
    %c0_i32_1 = arith.constant 0 : i32
    return %arg0, %c0_i32, %c0_i32_0 : i32, i32, i32
  }
}

</mosaic_0001>

<llo_original>
// kernel: tpu_custom_call.1
$region0: #{tpu_custom_call.1}
  #allocation0 [shape = 'u32[]', space=smem, size = 0x4, offset = 0x4, fixed_abs, tag = 'smem constant byte address 0x4 - core index']
  #allocation1 [shape = 'u32[144,128]{1,0:T(1,128)}', space=vmem, size = 0x12000, scoped, tag = 'internal scratch']
  %s0 = inlined_call_operand.vmem [shape: f32[2,64,32], index: 0, kind: input, shape index: {}]
  %s1 = inlined_call_operand.vmem [shape: f32[1,32], index: 1, kind: input, shape index: {}]
  %s2 = inlined_call_operand.vmem [shape: f32[1,32], index: 2, kind: input, shape index: {}]
  %s3 = inlined_call_operand.vmem [shape: bf16[4,32,8], index: 3, kind: input, shape index: {}]
  %s4 = inlined_call_operand.vmem [shape: bf16[4,32,8], index: 4, kind: input, shape index: {}]
  %s5 = inlined_call_operand.vmem [shape: bf16[4,32,8], index: 5, kind: input, shape index: {}]
  %s6 = inlined_call_operand.vmem [shape: bf16[4,8,32], index: 6, kind: input, shape index: {}]
  %s7 = inlined_call_operand.vmem [shape: f32[1,32], index: 7, kind: input, shape index: {}]
  %s8 = inlined_call_operand.vmem [shape: f32[1,32], index: 8, kind: input, shape index: {}]
  %s9 = inlined_call_operand.vmem [shape: f32[1,32], index: 9, kind: input, shape index: {}]
  %s10 = inlined_call_operand.vmem [shape: bf16[32,128], index: 10, kind: input, shape index: {}]
  %s11 = inlined_call_operand.vmem [shape: f32[1,128], index: 11, kind: input, shape index: {}]
  %s12 = inlined_call_operand.vmem [shape: f32[9,1,128], index: 12, kind: input, shape index: {}]
  %s13 = inlined_call_operand.vmem [shape: f32[1,128], index: 13, kind: input, shape index: {}]
  %s14 = inlined_call_operand.vmem [shape: bf16[128,32], index: 14, kind: input, shape index: {}]
  %s15 = inlined_call_operand.vmem [shape: f32[1,32], index: 15, kind: input, shape index: {}]
  %s16 = inlined_call_operand.vmem [shape: f32[9,64,1], index: 16, kind: input, shape index: {}]
  %s17 = inlined_call_operand.vmem [shape: f32[2,64,32], index: 17, kind: output, shape index: {}]
  %s18 = sld [smem:[#allocation0]]
  $region101: #{tpu_custom_call.1} parent=0
    _
  %s20 = ssub.s32 1, %s18
  %s21 = scalar_select 0, %s20, %s18
  loop: start=0, step=1, limit=4
  $region2: #{tpu_custom_call.1} parent=0 // loop_pre_header
    _
  $region3: #{tpu_custom_call.1} parent=0 // loop_header
    %s23 = sphi 0, %s27
    %p24 = scmp.ge.s32.totalorder %s23, 4
    %s33 = sphi 0, %s35
    %s36 = sphi 0, %s33
    %s37 = sphi 0, %s36
    %s53 = sphi 0, %s37
    %s57 = sphi 0, %s57
    %s59 = sphi 0, %s57
    %s60 = sphi 0, %s59
    %s74 = sphi 0, %s60
    %s78 = sphi 0, %s78
    %s80 = sphi 0, %s78
    %s81 = sphi 0, %s80
    %s95 = sphi 0, %s81
    %s99 = sphi 0, %s99
    %s101 = sphi 0, %s99
    %s102 = sphi 0, %s101
    %s116 = sphi 0, %s102
    %s120 = sphi 0, %s120
    %s122 = sphi 0, %s120
    %s123 = sphi 0, %s122
    %s137 = sphi 0, %s123
    %s141 = sphi 0, %s141
    %s143 = sphi 0, %s141
    %s144 = sphi 0, %s143
    %s158 = sphi 0, %s144
    %s162 = sphi 0, %s162
    %s164 = sphi 0, %s162
    %s165 = sphi 0, %s164
    %s179 = sphi 0, %s165
    %s183 = sphi 0, %s183
    %s185 = sphi 0, %s183
    %s186 = sphi 0, %s185
    %s200 = sphi 0, %s186
    %s204 = sphi 0, %s204
    %s206 = sphi 0, %s204
    %s207 = sphi 0, %s206
    %s221 = sphi 0, %s207
    %s225 = sphi 0, %s225
    %s227 = sphi 0, %s225
    %s228 = sphi 0, %s227
    %s242 = sphi 0, %s228
    %s246 = sphi 0, %s246
    %s248 = sphi 0, %s246
    %s249 = sphi 0, %s248
    %s263 = sphi 0, %s249
    %s267 = sphi 0, %s267
    %s269 = sphi 0, %s267
    %s270 = sphi 0, %s269
    %s284 = sphi 0, %s270
    %s288 = sphi 0, %s288
    %s290 = sphi 0, %s288
    %s291 = sphi 0, %s290
    %s305 = sphi 0, %s291
    %s309 = sphi 0, %s309
    %s311 = sphi 0, %s309
    %s312 = sphi 0, %s311
    %s326 = sphi 0, %s312
    %s330 = sphi 0, %s330
    %s332 = sphi 0, %s330
    %s333 = sphi 0, %s332
    %s347 = sphi 0, %s333
    %s351 = sphi 0, %s351
    %s353 = sphi 0, %s351
    %s354 = sphi 0, %s353
    %s368 = sphi 0, %s354
    %s372 = sphi 0, %s372
    %s374 = sphi 0, %s372
    %s375 = sphi 0, %s374
    %s389 = sphi 0, %s375
    %s395 = sphi 0, %s397
    %s398 = sphi 0, %s395
    %s399 = sphi 0, %s398
    %s415 = sphi 0, %s399
  $region4: #{tpu_custom_call.1} parent=0 // loop_header_branch
    %26 = sbr.rel (%p24) target = $region8
  $region5: #{tpu_custom_call.1} parent=0 // loop_body
    %s28 = ssub.s32 %s23, 1
    %s29 = ssub.s32 %s23, 2
    %s30 = sadd.s32 %s23, 1
    %s31 = ssub.s32 %s23, %s30
    %p32 = scmp.eq.s32.totalorder %s31, 0
    %s34 = sadd.s32 %s33, 1
    %s35 = scalar_select %p32, %s33, %s34
    %p38 = pneg %p32
    %p39 = scmp.eq.s32.totalorder %s23, 1
    %p40 = por %p38, %p39
    %p41 = scmp.ne.s32.totalorder %s33, %s36
    %p42 = scmp.eq.s32.totalorder %s23, 0
    %p43 = por %p41, %p42
    %p44 = scmp.ne.s32.totalorder %s33, %s36
    %p45 = scmp.eq.s32.totalorder %s28, 1
    %p46 = por %p44, %p45
    %p47 = scmp.ne.s32.totalorder %s36, %s37
    %p48 = scmp.eq.s32.totalorder %s28, 0
    %p49 = por %p47, %p48
    %p50 = scmp.ne.s32.totalorder %s36, %s37
    %p51 = scmp.eq.s32.totalorder %s29, 1
    %p52 = por %p50, %p51
    %p54 = scmp.ne.s32.totalorder %s37, %s53
    %p55 = scmp.eq.s32.totalorder %s29, 0
    %p56 = por %p54, %p55
    %s58 = sadd.s32 %s57, 1
    %p61 = scmp.eq.s32.totalorder %s23, 1
    %p62 = scmp.ne.s32.totalorder %s57, %s59
    %p63 = scmp.eq.s32.totalorder %s23, 0
    %p64 = por %p62, %p63
    %p65 = scmp.ne.s32.totalorder %s57, %s59
    %p66 = scmp.eq.s32.totalorder %s28, 1
    %p67 = por %p65, %p66
    %p68 = scmp.ne.s32.totalorder %s59, %s60
    %p69 = scmp.eq.s32.totalorder %s28, 0
    %p70 = por %p68, %p69
    %p71 = scmp.ne.s32.totalorder %s59, %s60
    %p72 = scmp.eq.s32.totalorder %s29, 1
    %p73 = por %p71, %p72
    %p75 = scmp.ne.s32.totalorder %s60, %s74
    %p76 = scmp.eq.s32.totalorder %s29, 0
    %p77 = por %p75, %p76
    %s79 = sadd.s32 %s78, 1
    %p82 = scmp.eq.s32.totalorder %s23, 1
    %p83 = scmp.ne.s32.totalorder %s78, %s80
    %p84 = scmp.eq.s32.totalorder %s23, 0
    %p85 = por %p83, %p84
    %p86 = scmp.ne.s32.totalorder %s78, %s80
    %p87 = scmp.eq.s32.totalorder %s28, 1
    %p88 = por %p86, %p87
    %p89 = scmp.ne.s32.totalorder %s80, %s81
    %p90 = scmp.eq.s32.totalorder %s28, 0
    %p91 = por %p89, %p90
    %p92 = scmp.ne.s32.totalorder %s80, %s81
    %p93 = scmp.eq.s32.totalorder %s29, 1
    %p94 = por %p92, %p93
    %p96 = scmp.ne.s32.totalorder %s81, %s95
    %p97 = scmp.eq.s32.totalorder %s29, 0
    %p98 = por %p96, %p97
    %s100 = sadd.s32 %s99, 1
    %p103 = scmp.eq.s32.totalorder %s23, 1
    %p104 = scmp.ne.s32.totalorder %s99, %s101
    %p105 = scmp.eq.s32.totalorder %s23, 0
    %p106 = por %p104, %p105
    %p107 = scmp.ne.s32.totalorder %s99, %s101
    %p108 = scmp.eq.s32.totalorder %s28, 1
    %p109 = por %p107, %p108
    %p110 = scmp.ne.s32.totalorder %s101, %s102
    %p111 = scmp.eq.s32.totalorder %s28, 0
    %p112 = por %p110, %p111
    %p113 = scmp.ne.s32.totalorder %s101, %s102
    %p114 = scmp.eq.s32.totalorder %s29, 1
    %p115 = por %p113, %p114
    %p117 = scmp.ne.s32.totalorder %s102, %s116
    %p118 = scmp.eq.s32.totalorder %s29, 0
    %p119 = por %p117, %p118
    %s121 = sadd.s32 %s120, 1
    %p124 = scmp.eq.s32.totalorder %s23, 1
    %p125 = scmp.ne.s32.totalorder %s120, %s122
    %p126 = scmp.eq.s32.totalorder %s23, 0
    %p127 = por %p125, %p126
    %p128 = scmp.ne.s32.totalorder %s120, %s122
    %p129 = scmp.eq.s32.totalorder %s28, 1
    %p130 = por %p128, %p129
    %p131 = scmp.ne.s32.totalorder %s122, %s123
    %p132 = scmp.eq.s32.totalorder %s28, 0
    %p133 = por %p131, %p132
    %p134 = scmp.ne.s32.totalorder %s122, %s123
    %p135 = scmp.eq.s32.totalorder %s29, 1
    %p136 = por %p134, %p135
    %p138 = scmp.ne.s32.totalorder %s123, %s137
    %p139 = scmp.eq.s32.totalorder %s29, 0
    %p140 = por %p138, %p139
    %s142 = sadd.s32 %s141, 1
    %p145 = scmp.eq.s32.totalorder %s23, 1
    %p146 = scmp.ne.s32.totalorder %s141, %s143
    %p147 = scmp.eq.s32.totalorder %s23, 0
    %p148 = por %p146, %p147
    %p149 = scmp.ne.s32.totalorder %s141, %s143
    %p150 = scmp.eq.s32.totalorder %s28, 1
    %p151 = por %p149, %p150
    %p152 = scmp.ne.s32.totalorder %s143, %s144
    %p153 = scmp.eq.s32.totalorder %s28, 0
    %p154 = por %p152, %p153
    %p155 = scmp.ne.s32.totalorder %s143, %s144
    %p156 = scmp.eq.s32.totalorder %s29, 1
    %p157 = por %p155, %p156
    %p159 = scmp.ne.s32.totalorder %s144, %s158
    %p160 = scmp.eq.s32.totalorder %s29, 0
    %p161 = por %p159, %p160
    %s163 = sadd.s32 %s162, 1
    %p166 = scmp.eq.s32.totalorder %s23, 1
    %p167 = scmp.ne.s32.totalorder %s162, %s164
    %p168 = scmp.eq.s32.totalorder %s23, 0
    %p169 = por %p167, %p168
    %p170 = scmp.ne.s32.totalorder %s162, %s164
    %p171 = scmp.eq.s32.totalorder %s28, 1
    %p172 = por %p170, %p171
    %p173 = scmp.ne.s32.totalorder %s164, %s165
    %p174 = scmp.eq.s32.totalorder %s28, 0
    %p175 = por %p173, %p174
    %p176 = scmp.ne.s32.totalorder %s164, %s165
    %p177 = scmp.eq.s32.totalorder %s29, 1
    %p178 = por %p176, %p177
    %p180 = scmp.ne.s32.totalorder %s165, %s179
    %p181 = scmp.eq.s32.totalorder %s29, 0
    %p182 = por %p180, %p181
    %s184 = sadd.s32 %s183, 1
    %p187 = scmp.eq.s32.totalorder %s23, 1
    %p188 = scmp.ne.s32.totalorder %s183, %s185
    %p189 = scmp.eq.s32.totalorder %s23, 0
    %p190 = por %p188, %p189
    %p191 = scmp.ne.s32.totalorder %s183, %s185
    %p192 = scmp.eq.s32.totalorder %s28, 1
    %p193 = por %p191, %p192
    %p194 = scmp.ne.s32.totalorder %s185, %s186
    %p195 = scmp.eq.s32.totalorder %s28, 0
    %p196 = por %p194, %p195
    %p197 = scmp.ne.s32.totalorder %s185, %s186
    %p198 = scmp.eq.s32.totalorder %s29, 1
    %p199 = por %p197, %p198
    %p201 = scmp.ne.s32.totalorder %s186, %s200
    %p202 = scmp.eq.s32.totalorder %s29, 0
    %p203 = por %p201, %p202
    %s205 = sadd.s32 %s204, 1
    %p208 = scmp.eq.s32.totalorder %s23, 1
    %p209 = scmp.ne.s32.totalorder %s204, %s206
    %p210 = scmp.eq.s32.totalorder %s23, 0
    %p211 = por %p209, %p210
    %p212 = scmp.ne.s32.totalorder %s204, %s206
    %p213 = scmp.eq.s32.totalorder %s28, 1
    %p214 = por %p212, %p213
    %p215 = scmp.ne.s32.totalorder %s206, %s207
    %p216 = scmp.eq.s32.totalorder %s28, 0
    %p217 = por %p215, %p216
    %p218 = scmp.ne.s32.totalorder %s206, %s207
    %p219 = scmp.eq.s32.totalorder %s29, 1
    %p220 = por %p218, %p219
    %p222 = scmp.ne.s32.totalorder %s207, %s221
    %p223 = scmp.eq.s32.totalorder %s29, 0
    %p224 = por %p222, %p223
    %s226 = sadd.s32 %s225, 1
    %p229 = scmp.eq.s32.totalorder %s23, 1
    %p230 = scmp.ne.s32.totalorder %s225, %s227
    %p231 = scmp.eq.s32.totalorder %s23, 0
    %p232 = por %p230, %p231
    %p233 = scmp.ne.s32.totalorder %s225, %s227
    %p234 = scmp.eq.s32.totalorder %s28, 1
    %p235 = por %p233, %p234
    %p236 = scmp.ne.s32.totalorder %s227, %s228
    %p237 = scmp.eq.s32.totalorder %s28, 0
    %p238 = por %p236, %p237
    %p239 = scmp.ne.s32.totalorder %s227, %s228
    %p240 = scmp.eq.s32.totalorder %s29, 1
    %p241 = por %p239, %p240
    %p243 = scmp.ne.s32.totalorder %s228, %s242
    %p244 = scmp.eq.s32.totalorder %s29, 0
    %p245 = por %p243, %p244
    %s247 = sadd.s32 %s246, 1
    %p250 = scmp.eq.s32.totalorder %s23, 1
    %p251 = scmp.ne.s32.totalorder %s246, %s248
    %p252 = scmp.eq.s32.totalorder %s23, 0
    %p253 = por %p251, %p252
    %p254 = scmp.ne.s32.totalorder %s246, %s248
    %p255 = scmp.eq.s32.totalorder %s28, 1
    %p256 = por %p254, %p255
    %p257 = scmp.ne.s32.totalorder %s248, %s249
    %p258 = scmp.eq.s32.totalorder %s28, 0
    %p259 = por %p257, %p258
    %p260 = scmp.ne.s32.totalorder %s248, %s249
    %p261 = scmp.eq.s32.totalorder %s29, 1
    %p262 = por %p260, %p261
    %p264 = scmp.ne.s32.totalorder %s249, %s263
    %p265 = scmp.eq.s32.totalorder %s29, 0
    %p266 = por %p264, %p265
    %s268 = sadd.s32 %s267, 1
    %p271 = scmp.eq.s32.totalorder %s23, 1
    %p272 = scmp.ne.s32.totalorder %s267, %s269
    %p273 = scmp.eq.s32.totalorder %s23, 0
    %p274 = por %p272, %p273
    %p275 = scmp.ne.s32.totalorder %s267, %s269
    %p276 = scmp.eq.s32.totalorder %s28, 1
    %p277 = por %p275, %p276
    %p278 = scmp.ne.s32.totalorder %s269, %s270
    %p279 = scmp.eq.s32.totalorder %s28, 0
    %p280 = por %p278, %p279
    %p281 = scmp.ne.s32.totalorder %s269, %s270
    %p282 = scmp.eq.s32.totalorder %s29, 1
    %p283 = por %p281, %p282
    %p285 = scmp.ne.s32.totalorder %s270, %s284
    %p286 = scmp.eq.s32.totalorder %s29, 0
    %p287 = por %p285, %p286
    %s289 = sadd.s32 %s288, 1
    %p292 = scmp.eq.s32.totalorder %s23, 1
    %p293 = scmp.ne.s32.totalorder %s288, %s290
    %p294 = scmp.eq.s32.totalorder %s23, 0
    %p295 = por %p293, %p294
    %p296 = scmp.ne.s32.totalorder %s288, %s290
    %p297 = scmp.eq.s32.totalorder %s28, 1
    %p298 = por %p296, %p297
    %p299 = scmp.ne.s32.totalorder %s290, %s291
    %p300 = scmp.eq.s32.totalorder %s28, 0
    %p301 = por %p299, %p300
    %p302 = scmp.ne.s32.totalorder %s290, %s291
    %p303 = scmp.eq.s32.totalorder %s29, 1
    %p304 = por %p302, %p303
    %p306 = scmp.ne.s32.totalorder %s291, %s305
    %p307 = scmp.eq.s32.totalorder %s29, 0
    %p308 = por %p306, %p307
    %s310 = sadd.s32 %s309, 1
    %p313 = scmp.eq.s32.totalorder %s23, 1
    %p314 = scmp.ne.s32.totalorder %s309, %s311
    %p315 = scmp.eq.s32.totalorder %s23, 0
    %p316 = por %p314, %p315
    %p317 = scmp.ne.s32.totalorder %s309, %s311
    %p318 = scmp.eq.s32.totalorder %s28, 1
    %p319 = por %p317, %p318
    %p320 = scmp.ne.s32.totalorder %s311, %s312
    %p321 = scmp.eq.s32.totalorder %s28, 0
    %p322 = por %p320, %p321
    %p323 = scmp.ne.s32.totalorder %s311, %s312
    %p324 = scmp.eq.s32.totalorder %s29, 1
    %p325 = por %p323, %p324
    %p327 = scmp.ne.s32.totalorder %s312, %s326
    %p328 = scmp.eq.s32.totalorder %s29, 0
    %p329 = por %p327, %p328
    %s331 = sadd.s32 %s330, 1
    %p334 = scmp.eq.s32.totalorder %s23, 1
    %p335 = scmp.ne.s32.totalorder %s330, %s332
    %p336 = scmp.eq.s32.totalorder %s23, 0
    %p337 = por %p335, %p336
    %p338 = scmp.ne.s32.totalorder %s330, %s332
    %p339 = scmp.eq.s32.totalorder %s28, 1
    %p340 = por %p338, %p339
    %p341 = scmp.ne.s32.totalorder %s332, %s333
    %p342 = scmp.eq.s32.totalorder %s28, 0
    %p343 = por %p341, %p342
    %p344 = scmp.ne.s32.totalorder %s332, %s333
    %p345 = scmp.eq.s32.totalorder %s29, 1
    %p346 = por %p344, %p345
    %p348 = scmp.ne.s32.totalorder %s333, %s347
    %p349 = scmp.eq.s32.totalorder %s29, 0
    %p350 = por %p348, %p349
    %s352 = sadd.s32 %s351, 1
    %p355 = scmp.eq.s32.totalorder %s23, 1
    %p356 = scmp.ne.s32.totalorder %s351, %s353
    %p357 = scmp.eq.s32.totalorder %s23, 0
    %p358 = por %p356, %p357
    %p359 = scmp.ne.s32.totalorder %s351, %s353
    %p360 = scmp.eq.s32.totalorder %s28, 1
    %p361 = por %p359, %p360
    %p362 = scmp.ne.s32.totalorder %s353, %s354
    %p363 = scmp.eq.s32.totalorder %s28, 0
    %p364 = por %p362, %p363
    %p365 = scmp.ne.s32.totalorder %s353, %s354
    %p366 = scmp.eq.s32.totalorder %s29, 1
    %p367 = por %p365, %p366
    %p369 = scmp.ne.s32.totalorder %s354, %s368
    %p370 = scmp.eq.s32.totalorder %s29, 0
    %p371 = por %p369, %p370
    %s373 = sadd.s32 %s372, 1
    %p376 = scmp.eq.s32.totalorder %s23, 1
    %p377 = scmp.ne.s32.totalorder %s372, %s374
    %p378 = scmp.eq.s32.totalorder %s23, 0
    %p379 = por %p377, %p378
    %p380 = scmp.ne.s32.totalorder %s372, %s374
    %p381 = scmp.eq.s32.totalorder %s28, 1
    %p382 = por %p380, %p381
    %p383 = scmp.ne.s32.totalorder %s374, %s375
    %p384 = scmp.eq.s32.totalorder %s28, 0
    %p385 = por %p383, %p384
    %p386 = scmp.ne.s32.totalorder %s374, %s375
    %p387 = scmp.eq.s32.totalorder %s29, 1
    %p388 = por %p386, %p387
    %p390 = scmp.ne.s32.totalorder %s375, %s389
    %p391 = scmp.eq.s32.totalorder %s29, 0
    %p392 = por %p390, %p391
    %s393 = ssub.s32 %s23, %s30
    %p394 = scmp.eq.s32.totalorder %s393, 0
    %s396 = sadd.s32 %s395, 1
    %s397 = scalar_select %p394, %s395, %s396
    %p400 = pneg %p394
    %p401 = scmp.eq.s32.totalorder %s23, 1
    %p402 = por %p400, %p401
    %p403 = scmp.ne.s32.totalorder %s395, %s398
    %p404 = scmp.eq.s32.totalorder %s23, 0
    %p405 = por %p403, %p404
    %p406 = scmp.ne.s32.totalorder %s395, %s398
    %p407 = scmp.eq.s32.totalorder %s28, 1
    %p408 = por %p406, %p407
    %p409 = scmp.ne.s32.totalorder %s398, %s399
    %p410 = scmp.eq.s32.totalorder %s28, 0
    %p411 = por %p409, %p410
    %p412 = scmp.ne.s32.totalorder %s398, %s399
    %p413 = scmp.eq.s32.totalorder %s29, 1
    %p414 = por %p412, %p413
    %p416 = scmp.ne.s32.totalorder %s399, %s415
    %p417 = scmp.eq.s32.totalorder %s29, 0
    %p418 = por %p416, %p417
    %p419 = scmp.le.s32.totalorder 1, %s23
    %p420 = scmp.lt.s32.totalorder %s23, 3
    %p421 = pnand %p419, %p420
    %p422 = pneg %p421
    // Predicated region
    $region9: #{tpu_custom_call.1} parent=5 // pred_check
      _
    $region10: #{tpu_custom_call.1} parent=5 // pred_check_branch
      %424 = sbr.rel (%p421) target = $region12
    $region11: #{tpu_custom_call.1} parent=5 // pred_region
      %s425 = ssub.s32 %s23, 1
      // Predicated region
      $region13: #{tpu_custom_call.1} parent=11 // pred_check
        %p426 = pneg %p70
      $region14: #{tpu_custom_call.1} parent=11 // pred_check_branch
        %428 = sbr.rel (%p426) target = $region16
      $region15: #{tpu_custom_call.1} parent=11 // pred_region
        _
      $region16: #{tpu_custom_call.1} parent=11 // pred_fallthru
        _
      // Predicated region
      $region17: #{tpu_custom_call.1} parent=11 // pred_check
        %p429 = pneg %p91
      $region18: #{tpu_custom_call.1} parent=11 // pred_check_branch
        %431 = sbr.rel (%p429) target = $region20
      $region19: #{tpu_custom_call.1} parent=11 // pred_region
        _
      $region20: #{tpu_custom_call.1} parent=11 // pred_fallthru
        _
      // Predicated region
      $region21: #{tpu_custom_call.1} parent=11 // pred_check
        %p432 = pneg %p112
      $region22: #{tpu_custom_call.1} parent=11 // pred_check_branch
        %434 = sbr.rel (%p432) target = $region24
      $region23: #{tpu_custom_call.1} parent=11 // pred_region
        _
      $region24: #{tpu_custom_call.1} parent=11 // pred_fallthru
        _
      // Predicated region
      $region25: #{tpu_custom_call.1} parent=11 // pred_check
        %p435 = pneg %p133
      $region26: #{tpu_custom_call.1} parent=11 // pred_check_branch
        %437 = sbr.rel (%p435) target = $region28
      $region27: #{tpu_custom_call.1} parent=11 // pred_region
        _
      $region28: #{tpu_custom_call.1} parent=11 // pred_fallthru
        _
      // Predicated region
      $region29: #{tpu_custom_call.1} parent=11 // pred_check
        %p438 = pneg %p154
      $region30: #{tpu_custom_call.1} parent=11 // pred_check_branch
        %440 = sbr.rel (%p438) target = $region32
      $region31: #{tpu_custom_call.1} parent=11 // pred_region
        _
      $region32: #{tpu_custom_call.1} parent=11 // pred_fallthru
        _
      // Predicated region
      $region33: #{tpu_custom_call.1} parent=11 // pred_check
        %p441 = pneg %p175
      $region34: #{tpu_custom_call.1} parent=11 // pred_check_branch
        %443 = sbr.rel (%p441) target = $region36
      $region35: #{tpu_custom_call.1} parent=11 // pred_region
        _
      $region36: #{tpu_custom_call.1} parent=11 // pred_fallthru
        _
      // Predicated region
      $region37: #{tpu_custom_call.1} parent=11 // pred_check
        %p444 = pneg %p196
      $region38: #{tpu_custom_call.1} parent=11 // pred_check_branch
        %446 = sbr.rel (%p444) target = $region40
      $region39: #{tpu_custom_call.1} parent=11 // pred_region
        _
      $region40: #{tpu_custom_call.1} parent=11 // pred_fallthru
        _
      // Predicated region
      $region41: #{tpu_custom_call.1} parent=11 // pred_check
        %p447 = pneg %p217
      $region42: #{tpu_custom_call.1} parent=11 // pred_check_branch
        %449 = sbr.rel (%p447) target = $region44
      $region43: #{tpu_custom_call.1} parent=11 // pred_region
        _
      $region44: #{tpu_custom_call.1} parent=11 // pred_fallthru
        _
      // Predicated region
      $region45: #{tpu_custom_call.1} parent=11 // pred_check
        %p450 = pneg %p238
      $region46: #{tpu_custom_call.1} parent=11 // pred_check_branch
        %452 = sbr.rel (%p450) target = $region48
      $region47: #{tpu_custom_call.1} parent=11 // pred_region
        _
      $region48: #{tpu_custom_call.1} parent=11 // pred_fallthru
        _
      // Predicated region
      $region49: #{tpu_custom_call.1} parent=11 // pred_check
        %p453 = pneg %p259
      $region50: #{tpu_custom_call.1} parent=11 // pred_check_branch
        %455 = sbr.rel (%p453) target = $region52
      $region51: #{tpu_custom_call.1} parent=11 // pred_region
        _
      $region52: #{tpu_custom_call.1} parent=11 // pred_fallthru
        _
      // Predicated region
      $region53: #{tpu_custom_call.1} parent=11 // pred_check
        %p456 = pneg %p280
      $region54: #{tpu_custom_call.1} parent=11 // pred_check_branch
        %458 = sbr.rel (%p456) target = $region56
      $region55: #{tpu_custom_call.1} parent=11 // pred_region
        _
      $region56: #{tpu_custom_call.1} parent=11 // pred_fallthru
        _
      // Predicated region
      $region57: #{tpu_custom_call.1} parent=11 // pred_check
        %p459 = pneg %p301
      $region58: #{tpu_custom_call.1} parent=11 // pred_check_branch
        %461 = sbr.rel (%p459) target = $region60
      $region59: #{tpu_custom_call.1} parent=11 // pred_region
        _
      $region60: #{tpu_custom_call.1} parent=11 // pred_fallthru
        _
      // Predicated region
      $region61: #{tpu_custom_call.1} parent=11 // pred_check
        %p462 = pneg %p322
      $region62: #{tpu_custom_call.1} parent=11 // pred_check_branch
        %464 = sbr.rel (%p462) target = $region64
      $region63: #{tpu_custom_call.1} parent=11 // pred_region
        _
      $region64: #{tpu_custom_call.1} parent=11 // pred_fallthru
        _
      // Predicated region
      $region65: #{tpu_custom_call.1} parent=11 // pred_check
        %p465 = pneg %p343
      $region66: #{tpu_custom_call.1} parent=11 // pred_check_branch
        %467 = sbr.rel (%p465) target = $region68
      $region67: #{tpu_custom_call.1} parent=11 // pred_region
        _
      $region68: #{tpu_custom_call.1} parent=11 // pred_fallthru
        _
      // Predicated region
      $region69: #{tpu_custom_call.1} parent=11 // pred_check
        %p468 = pneg %p364
      $region70: #{tpu_custom_call.1} parent=11 // pred_check_branch
        %470 = sbr.rel (%p468) target = $region72
      $region71: #{tpu_custom_call.1} parent=11 // pred_region
        _
      $region72: #{tpu_custom_call.1} parent=11 // pred_fallthru
        _
      // Predicated region
      $region73: #{tpu_custom_call.1} parent=11 // pred_check
        %p471 = pneg %p385
      $region74: #{tpu_custom_call.1} parent=11 // pred_check_branch
        %473 = sbr.rel (%p471) target = $region76
      $region75: #{tpu_custom_call.1} parent=11 // pred_region
        _
      $region76: #{tpu_custom_call.1} parent=11 // pred_fallthru
        _
    $region12: #{tpu_custom_call.1} parent=5 // pred_fallthru
      _
    %p474 = scmp.lt.s32.totalorder %s23, 2
    // Predicated region
    $region77: #{tpu_custom_call.1} parent=5 // pred_check
      %p475 = pneg %p474
    $region78: #{tpu_custom_call.1} parent=5 // pred_check_branch
      %477 = sbr.rel (%p475) target = $region80
    $region79: #{tpu_custom_call.1} parent=5 // pred_region
      // Predicated region
      $region81: #{tpu_custom_call.1} parent=79 // pred_check
        %p478 = pneg %p43
      $region82: #{tpu_custom_call.1} parent=79 // pred_check_branch
        %480 = sbr.rel (%p478) target = $region84
      $region83: #{tpu_custom_call.1} parent=79 // pred_region
        %p481 = scmp.lt.s32.totalorder %s23, 1
        %s482 = scalar_select %p481, %s23, 1
        %s483 = smul.addr %s482, 8
        %s484 = smul.addr %s483, 8
        %s485 = scalar_lea.vmem %s0, %s484
      $region84: #{tpu_custom_call.1} parent=79 // pred_fallthru
        _
    $region80: #{tpu_custom_call.1} parent=5 // pred_fallthru
      _
    %p486 = scmp.le.s32.totalorder 1, %s23
    %p487 = scmp.lt.s32.totalorder %s23, 3
    %p488 = pnand %p486, %p487
    %p489 = pneg %p488
    // Predicated region
    $region85: #{tpu_custom_call.1} parent=5 // pred_check
      _
    $region86: #{tpu_custom_call.1} parent=5 // pred_check_branch
      %491 = sbr.rel (%p488) target = $region88
    $region87: #{tpu_custom_call.1} parent=5 // pred_region
      %s492 = ssub.s32 %s23, 1
      %p493 = scmp.lt.s32.totalorder %s28, 1
      %s494 = scalar_select %p493, %s28, 1
      %s495 = smul.addr %s494, 8
      %s496 = smul.addr %s495, 8
      %s497 = scalar_lea.vmem %s0, %s496
      %p498 = pneg %p49
      %p499 = pneg %p46
      %p500 = pneg %p70
      %p501 = pneg %p67
      %p502 = pneg %p91
      %p503 = pneg %p88
      %p504 = pneg %p112
      %p505 = pneg %p109
      %p506 = pneg %p133
      %p507 = pneg %p130
      %p508 = pneg %p154
      %p509 = pneg %p151
      %p510 = pneg %p175
      %p511 = pneg %p172
      %p512 = pneg %p196
      %p513 = pneg %p193
      %p514 = pneg %p217
      %p515 = pneg %p214
      %p516 = pneg %p238
      %p517 = pneg %p235
      %p518 = pneg %p259
      %p519 = pneg %p256
      %p520 = pneg %p280
      %p521 = pneg %p277
      %p522 = pneg %p301
      %p523 = pneg %p298
      %p524 = pneg %p322
      %p525 = pneg %p319
      %p526 = pneg %p343
      %p527 = pneg %p340
      %p528 = pneg %p364
      %p529 = pneg %p361
      %p530 = pneg %p385
      %p531 = pneg %p382
      %p532 = pneg %p411
      %p533 = pneg %p408
      %p534 = scmp.lt.s32.totalorder %s28, 1
      %s535 = scalar_select %p534, %s28, 1
      %s536 = smul.addr %s535, 8
      %s537 = smul.addr %s536, 8
      %s538 = scalar_lea.vmem %s17, %s537
      %p539 = scmp.lt.s32.totalorder %s28, 1
      %s540 = scalar_select %p539, %s28, 1
      %s541 = smul.addr %s540, 8
      %s542 = smul.addr %s541, 8
      %s543 = scalar_lea.vmem %s0, %s542
      %p544 = scmp.lt.s32.totalorder %s28, 1
      %s545 = scalar_select %p544, %s28, 1
      %s546 = smul.addr %s545, 8
      %s547 = smul.addr %s546, 8
      %s548 = scalar_lea.vmem %s17, %s547
      %v550 = vld [vmem:[%s543] sm:$0xff]
      %v551 = vld [vmem:[%s543 + $0x8] sm:$0xff]
      %v552 = vld [vmem:[%s543 + $0x10] sm:$0xff]
      %v553 = vld [vmem:[%s543 + $0x18] sm:$0xff]
      %v554 = vld [vmem:[%s543 + $0x20] sm:$0xff]
      %v555 = vld [vmem:[%s543 + $0x28] sm:$0xff]
      %v556 = vld [vmem:[%s543 + $0x30] sm:$0xff]
      %v557 = vld [vmem:[%s543 + $0x38] sm:$0xff]
      %v558 = vld [vmem:[%s1] sm:$0x1]
      %v559 = vld [vmem:[%s2] sm:$0x1]
      %vm560 = vcmask 261120
      %v561 = vsel %vm560, %v550, 0.0
      %562 = vadd.xlane.f32.xlu0 %v561
      %v563 = vpop.xlane.xlu0 %562
      %v564 = vsel %vm560, %v551, 0.0
      %565 = vadd.xlane.f32.xlu0 %v564
      %v566 = vpop.xlane.xlu0 %565
      %v567 = vsel %vm560, %v552, 0.0
      %568 = vadd.xlane.f32.xlu0 %v567
      %v569 = vpop.xlane.xlu0 %568
      %v570 = vsel %vm560, %v553, 0.0
      %571 = vadd.xlane.f32.xlu0 %v570
      %v572 = vpop.xlane.xlu0 %571
      %v573 = vsel %vm560, %v554, 0.0
      %574 = vadd.xlane.f32.xlu0 %v573
      %v575 = vpop.xlane.xlu0 %574
      %v576 = vsel %vm560, %v555, 0.0
      %577 = vadd.xlane.f32.xlu0 %v576
      %v578 = vpop.xlane.xlu0 %577
      %v579 = vsel %vm560, %v556, 0.0
      %580 = vadd.xlane.f32.xlu0 %v579
      %v581 = vpop.xlane.xlu0 %580
      %v582 = vsel %vm560, %v557, 0.0
      %583 = vadd.xlane.f32.xlu0 %v582
      %v584 = vpop.xlane.xlu0 %583
      %v585 = vrcp.pop 32.0
      %v586 = vmul.f32 %v563, %v585
      %v587 = vmul.f32 %v566, %v585
      %v588 = vmul.f32 %v569, %v585
      %v589 = vmul.f32 %v572, %v585
      %v590 = vmul.f32 %v575, %v585
      %v591 = vmul.f32 %v578, %v585
      %v592 = vmul.f32 %v581, %v585
      %v593 = vmul.f32 %v584, %v585
      %v594 = vsub.f32 %v550, %v586
      %v595 = vsub.f32 %v551, %v587
      %v596 = vsub.f32 %v552, %v588
      %v597 = vsub.f32 %v553, %v589
      %v598 = vsub.f32 %v554, %v590
      %v599 = vsub.f32 %v555, %v591
      %v600 = vsub.f32 %v556, %v592
      %v601 = vsub.f32 %v557, %v593
      %v602 = vmul.f32 %v594, %v594
      %v603 = vmul.f32 %v595, %v595
      %v604 = vmul.f32 %v596, %v596
      %v605 = vmul.f32 %v597, %v597
      %v606 = vmul.f32 %v598, %v598
      %v607 = vmul.f32 %v599, %v599
      %v608 = vmul.f32 %v600, %v600
      %v609 = vmul.f32 %v601, %v601
      %v610 = vsel %vm560, %v602, 0.0
      %611 = vadd.xlane.f32.xlu0 %v610
      %v612 = vpop.xlane.xlu0 %611
      %v613 = vsel %vm560, %v603, 0.0
      %614 = vadd.xlane.f32.xlu0 %v613
      %v615 = vpop.xlane.xlu0 %614
      %v616 = vsel %vm560, %v604, 0.0
      %617 = vadd.xlane.f32.xlu0 %v616
      %v618 = vpop.xlane.xlu0 %617
      %v619 = vsel %vm560, %v605, 0.0
      %620 = vadd.xlane.f32.xlu0 %v619
      %v621 = vpop.xlane.xlu0 %620
      %v622 = vsel %vm560, %v606, 0.0
      %623 = vadd.xlane.f32.xlu0 %v622
      %v624 = vpop.xlane.xlu0 %623
      %v625 = vsel %vm560, %v607, 0.0
      %626 = vadd.xlane.f32.xlu0 %v625
      %v627 = vpop.xlane.xlu0 %626
      %v628 = vsel %vm560, %v608, 0.0
      %629 = vadd.xlane.f32.xlu0 %v628
      %v630 = vpop.xlane.xlu0 %629
      %v631 = vsel %vm560, %v609, 0.0
      %632 = vadd.xlane.f32.xlu0 %v631
      %v633 = vpop.xlane.xlu0 %632
      %v634 = vmul.f32 %v612, %v585
      %v635 = vmul.f32 %v615, %v585
      %v636 = vmul.f32 %v618, %v585
      %v637 = vmul.f32 %v621, %v585
      %v638 = vmul.f32 %v624, %v585
      %v639 = vmul.f32 %v627, %v585
      %v640 = vmul.f32 %v630, %v585
      %v641 = vmul.f32 %v633, %v585
      %v642 = vadd.f32 %v634, 1e-05
      %v643 = vadd.f32 %v635, 1e-05
      %v644 = vadd.f32 %v636, 1e-05
      %v645 = vadd.f32 %v637, 1e-05
      %v646 = vadd.f32 %v638, 1e-05
      %v647 = vadd.f32 %v639, 1e-05
      %v648 = vadd.f32 %v640, 1e-05
      %v649 = vadd.f32 %v641, 1e-05
      %v650 = vrsqrt.pop %v642
      %v651 = vrsqrt.pop %v643
      %v652 = vrsqrt.pop %v644
      %v653 = vrsqrt.pop %v645
      %v654 = vrsqrt.pop %v646
      %v655 = vrsqrt.pop %v647
      %v656 = vrsqrt.pop %v648
      %v657 = vrsqrt.pop %v649
      %v658 = vmul.f32 %v594, %v650
      %v659 = vmul.f32 %v595, %v651
      %v660 = vmul.f32 %v596, %v652
      %v661 = vmul.f32 %v597, %v653
      %v662 = vmul.f32 %v598, %v654
      %v663 = vmul.f32 %v599, %v655
      %v664 = vmul.f32 %v600, %v656
      %v665 = vmul.f32 %v601, %v657
      %v667 = vlaneseq
      %v668 = vshrl.u32 %v667, 7
      %v669 = vsub.s32 0, %v668
      %v670 = vrot.slane %v558, %v669
      %v672 = vmul.f32 %v658, %v670
      %v673 = vmul.f32 %v659, %v670
      %v674 = vmul.f32 %v660, %v670
      %v675 = vmul.f32 %v661, %v670
      %v676 = vmul.f32 %v662, %v670
      %v677 = vmul.f32 %v663, %v670
      %v678 = vmul.f32 %v664, %v670
      %v679 = vmul.f32 %v665, %v670
      %v681 = vlaneseq
      %v682 = vshrl.u32 %v681, 7
      %v683 = vsub.s32 0, %v682
      %v684 = vrot.slane %v559, %v683
      %v686 = vadd.f32 %v672, %v684
      %v687 = vadd.f32 %v673, %v684
      %v688 = vadd.f32 %v674, %v684
      %v689 = vadd.f32 %v675, %v684
      %v690 = vadd.f32 %v676, %v684
      %v691 = vadd.f32 %v677, %v684
      %v692 = vadd.f32 %v678, %v684
      %v693 = vadd.f32 %v679, %v684
      %v694 = vpack.c.bf16 %v687, %v686
      %v695 = vpack.c.bf16 %v689, %v688
      %v696 = vpack.c.bf16 %v691, %v690
      %v697 = vpack.c.bf16 %v693, %v692
      %v698 = vld [vmem:[%s3] sm:$0xf]
      %v699 = vld [vmem:[%s3 + $0x4] sm:$0xf]
      %v700 = vld [vmem:[%s3 + $0x8] sm:$0xf]
      %v701 = vld [vmem:[%s3 + $0xc] sm:$0xf]
      %v706 = vunpack.c.l.b16 %v698
      %v707 = vunpack.c.l.b16 %v699
      %v708 = vunpack.c.l.b16 %v700
      %v709 = vunpack.c.l.b16 %v701
      %v710 = vpack.c.b16 %v707, %v706
      %v711 = vpack.c.b16 %v709, %v708
      %v715 = vsel %vm560, %v694, 0
      %v718 = vsel %vm560, %v695, 0
      %v721 = vsel %vm560, %v696, 0
      %v724 = vsel %vm560, %v697, 0
      %726 = vmatprep.subr.bf16.mxu0 0
      %727 = vmatpush1.bf16.msra.mxu0 0
      %728 = vmatprep.subr.bf16.mxu0 0
      %729 = vmatpush1.bf16.msra.mxu0 0
      %730 = vmatprep.subr.bf16.mxu0 0
      %731 = vmatpush1.bf16.msra.mxu0 0
      %732 = vmatprep.subr.bf16.mxu0 0
      %733 = vmatpush1.bf16.msra.mxu0 0
      %734 = vmatprep.subr.bf16.mxu0 0
      %735 = vmatpush1.bf16.msra.mxu0 0
      %736 = vmatprep.subr.bf16.mxu0 0
      %737 = vmatpush1.bf16.msra.mxu0 0
      %738 = vmatprep.subr.bf16.mxu0 0
      %739 = vmatpush1.bf16.msra.mxu0 %v711
      %740 = vmatprep.subr.bf16.mxu0 0
      %741 = vmatpush1.bf16.msra.mxu0 %v710
      %742 = vmatprep.subr.bf16.mxu0 0
      %743 = vmatpush2.bf16.msra.mxu0 0
      %744 = vmatprep.subr.bf16.mxu0 0
      %745 = vmatpush2.bf16.msra.mxu0 0
      %746 = vmatprep.subr.bf16.mxu0 0
      %747 = vmatpush2.bf16.msra.mxu0 0
      %748 = vmatprep.subr.bf16.mxu0 0
      %749 = vmatpush2.bf16.msra.mxu0 0
      %750 = vmatprep.subr.bf16.mxu0 0
      %751 = vmatpush2.bf16.msra.mxu0 0
      %752 = vmatprep.subr.bf16.mxu0 0
      %753 = vmatpush2.bf16.msra.mxu0 0
      %754 = vmatprep.subr.bf16.mxu0 0
      %755 = vmatpush2.bf16.msra.mxu0 0
      %756 = vmatprep.subr.bf16.mxu0 0
      %757 = vmatpush2.bf16.msra.mxu0 0
      %758 = vmatprep.mubr.bf16.mxu0 0
      %759 = vmatmul.mubr.bf16.gmra.mxu0 %v715
      %v760 = vpop.f32.mrf.mxu0
      %v761 = vadd.f32 0.0, %v760
      %v762 = vpop.f32.mrf.mxu0
      %v763 = vpop.f32.mrf.mxu0
      %v764 = vadd.f32 0.0, %v763
      %v765 = vpop.f32.mrf.mxu0
      %766 = vmatprep.mubr.bf16.mxu0 0
      %767 = vmatmul.mubr.bf16.gmra.mxu0 %v718
      %v768 = vpop.f32.mrf.mxu0
      %v769 = vadd.f32 0.0, %v768
      %v770 = vpop.f32.mrf.mxu0
      %v771 = vpop.f32.mrf.mxu0
      %v772 = vadd.f32 0.0, %v771
      %v773 = vpop.f32.mrf.mxu0
      %774 = vmatprep.mubr.bf16.mxu0 0
      %775 = vmatmul.mubr.bf16.gmra.mxu0 %v721
      %v776 = vpop.f32.mrf.mxu0
      %v777 = vadd.f32 0.0, %v776
      %v778 = vpop.f32.mrf.mxu0
      %v779 = vpop.f32.mrf.mxu0
      %v780 = vadd.f32 0.0, %v779
      %v781 = vpop.f32.mrf.mxu0
      %782 = vmatprep.mubr.bf16.mxu0 0
      %783 = vmatmul.mubr.bf16.gmra.mxu0 %v724
      %v784 = vpop.f32.mrf.mxu0
      %v785 = vadd.f32 0.0, %v784
      %v786 = vpop.f32.mrf.mxu0
      %v787 = vpop.f32.mrf.mxu0
      %v788 = vadd.f32 0.0, %v787
      %v789 = vpop.f32.mrf.mxu0
      %790 = vdwg.mxu0
      %v791 = vld [vmem:[%s4] sm:$0xf]
      %v792 = vld [vmem:[%s4 + $0x4] sm:$0xf]
      %v793 = vld [vmem:[%s4 + $0x8] sm:$0xf]
      %v794 = vld [vmem:[%s4 + $0xc] sm:$0xf]
      %v799 = vunpack.c.l.b16 %v791
      %v800 = vunpack.c.l.b16 %v792
      %v801 = vunpack.c.l.b16 %v793
      %v802 = vunpack.c.l.b16 %v794
      %v803 = vpack.c.b16 %v800, %v799
      %v804 = vpack.c.b16 %v802, %v801
      %807 = vmatprep.subr.bf16.mxu0 0
      %808 = vmatpush1.bf16.msra.mxu0 0
      %809 = vmatprep.subr.bf16.mxu0 0
      %810 = vmatpush1.bf16.msra.mxu0 0
      %811 = vmatprep.subr.bf16.mxu0 0
      %812 = vmatpush1.bf16.msra.mxu0 0
      %813 = vmatprep.subr.bf16.mxu0 0
      %814 = vmatpush1.bf16.msra.mxu0 0
      %815 = vmatprep.subr.bf16.mxu0 0
      %816 = vmatpush1.bf16.msra.mxu0 0
      %817 = vmatprep.subr.bf16.mxu0 0
      %818 = vmatpush1.bf16.msra.mxu0 0
      %819 = vmatprep.subr.bf16.mxu0 0
      %820 = vmatpush1.bf16.msra.mxu0 %v804
      %821 = vmatprep.subr.bf16.mxu0 0
      %822 = vmatpush1.bf16.msra.mxu0 %v803
      %823 = vmatprep.subr.bf16.mxu0 0
      %824 = vmatpush2.bf16.msra.mxu0 0
      %825 = vmatprep.subr.bf16.mxu0 0
      %826 = vmatpush2.bf16.msra.mxu0 0
      %827 = vmatprep.subr.bf16.mxu0 0
      %828 = vmatpush2.bf16.msra.mxu0 0
      %829 = vmatprep.subr.bf16.mxu0 0
      %830 = vmatpush2.bf16.msra.mxu0 0
      %831 = vmatprep.subr.bf16.mxu0 0
      %832 = vmatpush2.bf16.msra.mxu0 0
      %833 = vmatprep.subr.bf16.mxu0 0
      %834 = vmatpush2.bf16.msra.mxu0 0
      %835 = vmatprep.subr.bf16.mxu0 0
      %836 = vmatpush2.bf16.msra.mxu0 0
      %837 = vmatprep.subr.bf16.mxu0 0
      %838 = vmatpush2.bf16.msra.mxu0 0
      %839 = vmatprep.mubr.bf16.mxu0 0
      %840 = vmatmul.mubr.bf16.gmra.mxu0 %v715
      %v841 = vpop.f32.mrf.mxu0
      %v842 = vadd.f32 0.0, %v841
      %v843 = vpop.f32.mrf.mxu0
      %v844 = vpop.f32.mrf.mxu0
      %v845 = vadd.f32 0.0, %v844
      %v846 = vpop.f32.mrf.mxu0
      %847 = vmatprep.mubr.bf16.mxu0 0
      %848 = vmatmul.mubr.bf16.gmra.mxu0 %v718
      %v849 = vpop.f32.mrf.mxu0
      %v850 = vadd.f32 0.0, %v849
      %v851 = vpop.f32.mrf.mxu0
      %v852 = vpop.f32.mrf.mxu0
      %v853 = vadd.f32 0.0, %v852
      %v854 = vpop.f32.mrf.mxu0
      %855 = vmatprep.mubr.bf16.mxu0 0
      %856 = vmatmul.mubr.bf16.gmra.mxu0 %v721
      %v857 = vpop.f32.mrf.mxu0
      %v858 = vadd.f32 0.0, %v857
      %v859 = vpop.f32.mrf.mxu0
      %v860 = vpop.f32.mrf.mxu0
      %v861 = vadd.f32 0.0, %v860
      %v862 = vpop.f32.mrf.mxu0
      %863 = vmatprep.mubr.bf16.mxu0 0
      %864 = vmatmul.mubr.bf16.gmra.mxu0 %v724
      %v865 = vpop.f32.mrf.mxu0
      %v866 = vadd.f32 0.0, %v865
      %v867 = vpop.f32.mrf.mxu0
      %v868 = vpop.f32.mrf.mxu0
      %v869 = vadd.f32 0.0, %v868
      %v870 = vpop.f32.mrf.mxu0
      %871 = vdwg.mxu0
      %v872 = vld [vmem:[%s5] sm:$0xf]
      %v873 = vld [vmem:[%s5 + $0x4] sm:$0xf]
      %v874 = vld [vmem:[%s5 + $0x8] sm:$0xf]
      %v875 = vld [vmem:[%s5 + $0xc] sm:$0xf]
      %v880 = vunpack.c.l.b16 %v872
      %v881 = vunpack.c.l.b16 %v873
      %v882 = vunpack.c.l.b16 %v874
      %v883 = vunpack.c.l.b16 %v875
      %v884 = vpack.c.b16 %v881, %v880
      %v885 = vpack.c.b16 %v883, %v882
      %888 = vmatprep.subr.bf16.mxu0 0
      %889 = vmatpush1.bf16.msra.mxu0 0
      %890 = vmatprep.subr.bf16.mxu0 0
      %891 = vmatpush1.bf16.msra.mxu0 0
      %892 = vmatprep.subr.bf16.mxu0 0
      %893 = vmatpush1.bf16.msra.mxu0 0
      %894 = vmatprep.subr.bf16.mxu0 0
      %895 = vmatpush1.bf16.msra.mxu0 0
      %896 = vmatprep.subr.bf16.mxu0 0
      %897 = vmatpush1.bf16.msra.mxu0 0
      %898 = vmatprep.subr.bf16.mxu0 0
      %899 = vmatpush1.bf16.msra.mxu0 0
      %900 = vmatprep.subr.bf16.mxu0 0
      %901 = vmatpush1.bf16.msra.mxu0 %v885
      %902 = vmatprep.subr.bf16.mxu0 0
      %903 = vmatpush1.bf16.msra.mxu0 %v884
      %904 = vmatprep.subr.bf16.mxu0 0
      %905 = vmatpush2.bf16.msra.mxu0 0
      %906 = vmatprep.subr.bf16.mxu0 0
      %907 = vmatpush2.bf16.msra.mxu0 0
      %908 = vmatprep.subr.bf16.mxu0 0
      %909 = vmatpush2.bf16.msra.mxu0 0
      %910 = vmatprep.subr.bf16.mxu0 0
      %911 = vmatpush2.bf16.msra.mxu0 0
      %912 = vmatprep.subr.bf16.mxu0 0
      %913 = vmatpush2.bf16.msra.mxu0 0
      %914 = vmatprep.subr.bf16.mxu0 0
      %915 = vmatpush2.bf16.msra.mxu0 0
      %916 = vmatprep.subr.bf16.mxu0 0
      %917 = vmatpush2.bf16.msra.mxu0 0
      %918 = vmatprep.subr.bf16.mxu0 0
      %919 = vmatpush2.bf16.msra.mxu0 0
      %920 = vmatprep.mubr.bf16.mxu0 0
      %921 = vmatmul.mubr.bf16.gmra.mxu0 %v715
      %v922 = vpop.f32.mrf.mxu0
      %v923 = vadd.f32 0.0, %v922
      %v924 = vpop.f32.mrf.mxu0
      %v925 = vpop.f32.mrf.mxu0
      %v926 = vadd.f32 0.0, %v925
      %v927 = vpop.f32.mrf.mxu0
      %928 = vmatprep.mubr.bf16.mxu0 0
      %929 = vmatmul.mubr.bf16.gmra.mxu0 %v718
      %v930 = vpop.f32.mrf.mxu0
      %v931 = vadd.f32 0.0, %v930
      %v932 = vpop.f32.mrf.mxu0
      %v933 = vpop.f32.mrf.mxu0
      %v934 = vadd.f32 0.0, %v933
      %v935 = vpop.f32.mrf.mxu0
      %936 = vmatprep.mubr.bf16.mxu0 0
      %937 = vmatmul.mubr.bf16.gmra.mxu0 %v721
      %v938 = vpop.f32.mrf.mxu0
      %v939 = vadd.f32 0.0, %v938
      %v940 = vpop.f32.mrf.mxu0
      %v941 = vpop.f32.mrf.mxu0
      %v942 = vadd.f32 0.0, %v941
      %v943 = vpop.f32.mrf.mxu0
      %944 = vmatprep.mubr.bf16.mxu0 0
      %945 = vmatmul.mubr.bf16.gmra.mxu0 %v724
      %v946 = vpop.f32.mrf.mxu0
      %v947 = vadd.f32 0.0, %v946
      %v948 = vpop.f32.mrf.mxu0
      %v949 = vpop.f32.mrf.mxu0
      %v950 = vadd.f32 0.0, %v949
      %v951 = vpop.f32.mrf.mxu0
      %952 = vdwg.mxu0
      %v953 = vmul.f32 %v761, 0.35355338
      %v954 = vmul.f32 %v764, 0.35355338
      %v955 = vmul.f32 %v769, 0.35355338
      %v956 = vmul.f32 %v772, 0.35355338
      %v957 = vmul.f32 %v777, 0.35355338
      %v958 = vmul.f32 %v780, 0.35355338
      %v959 = vmul.f32 %v785, 0.35355338
      %v960 = vmul.f32 %v788, 0.35355338
      %v961 = vpack.c.bf16 %v954, %v953
      %v962 = vpack.c.bf16 %v956, %v955
      %v963 = vpack.c.bf16 %v958, %v957
      %v964 = vpack.c.bf16 %v960, %v959
      %v965 = vpack.c.bf16 %v845, %v842
      %v966 = vpack.c.bf16 %v853, %v850
      %v967 = vpack.c.bf16 %v861, %v858
      %v968 = vpack.c.bf16 %v869, %v866
      %vm969 = vcmask 64512
      %v971 = vsel %vm969, %v961, 0
      %v974 = vsel %vm969, %v962, 0
      %v977 = vsel %vm969, %v963, 0
      %v980 = vsel %vm969, %v964, 0
      %v983 = vsel %vm969, %v965, 0
      %v986 = vsel %vm969, %v966, 0
      %v989 = vsel %vm969, %v967, 0
      %v992 = vsel %vm969, %v968, 0
      %994 = vmatprep.subr.bf16.mxu0 0
      %995 = vmatpush1.bf16.xpose.msra.mxu0 0
      %996 = vmatprep.subr.bf16.mxu0 0
      %997 = vmatpush1.bf16.xpose.msra.mxu0 0
      %998 = vmatprep.subr.bf16.mxu0 0
      %999 = vmatpush1.bf16.xpose.msra.mxu0 0
      %1000 = vmatprep.subr.bf16.mxu0 0
      %1001 = vmatpush1.bf16.xpose.msra.mxu0 0
      %1002 = vmatprep.subr.bf16.mxu0 0
      %1003 = vmatpush1.bf16.xpose.msra.mxu0 %v992
      %1004 = vmatprep.subr.bf16.mxu0 0
      %1005 = vmatpush1.bf16.xpose.msra.mxu0 %v989
      %1006 = vmatprep.subr.bf16.mxu0 0
      %1007 = vmatpush1.bf16.xpose.msra.mxu0 %v986
      %1008 = vmatprep.subr.bf16.mxu0 0
      %1009 = vmatpush1.bf16.xpose.msra.mxu0 %v983
      %1010 = vmatprep.subr.bf16.mxu0 0
      %1011 = vmatpush2.bf16.xpose.msra.mxu0 0
      %1012 = vmatprep.subr.bf16.mxu0 0
      %1013 = vmatpush2.bf16.xpose.msra.mxu0 0
      %1014 = vmatprep.subr.bf16.mxu0 0
      %1015 = vmatpush2.bf16.xpose.msra.mxu0 0
      %1016 = vmatprep.subr.bf16.mxu0 0
      %1017 = vmatpush2.bf16.xpose.msra.mxu0 0
      %1018 = vmatprep.subr.bf16.mxu0 0
      %1019 = vmatpush2.bf16.xpose.msra.mxu0 0
      %1020 = vmatprep.subr.bf16.mxu0 0
      %1021 = vmatpush2.bf16.xpose.msra.mxu0 0
      %1022 = vmatprep.subr.bf16.mxu0 0
      %1023 = vmatpush2.bf16.xpose.msra.mxu0 0
      %1024 = vmatprep.subr.bf16.mxu0 0
      %1025 = vmatpush2.bf16.xpose.msra.mxu0 0
      %1026 = vmatprep.mubr.bf16.mxu0 0
      %1027 = vmatmul.mubr.bf16.gmra.mxu0 %v971
      %v1028 = vpop.f32.mrf.mxu0
      %v1029 = vadd.f32 0.0, %v1028
      %v1030 = vpop.f32.mrf.mxu0
      %v1031 = vpop.f32.mrf.mxu0
      %v1032 = vadd.f32 0.0, %v1031
      %v1033 = vpop.f32.mrf.mxu0
      %1034 = vmatprep.mubr.bf16.mxu0 0
      %1035 = vmatmul.mubr.bf16.gmra.mxu0 %v974
      %v1036 = vpop.f32.mrf.mxu0
      %v1037 = vadd.f32 0.0, %v1036
      %v1038 = vpop.f32.mrf.mxu0
      %v1039 = vpop.f32.mrf.mxu0
      %v1040 = vadd.f32 0.0, %v1039
      %v1041 = vpop.f32.mrf.mxu0
      %1042 = vmatprep.mubr.bf16.mxu0 0
      %1043 = vmatmul.mubr.bf16.gmra.mxu0 %v977
      %v1044 = vpop.f32.mrf.mxu0
      %v1045 = vadd.f32 0.0, %v1044
      %v1046 = vpop.f32.mrf.mxu0
      %v1047 = vpop.f32.mrf.mxu0
      %v1048 = vadd.f32 0.0, %v1047
      %v1049 = vpop.f32.mrf.mxu0
      %1050 = vmatprep.mubr.bf16.mxu0 0
      %1051 = vmatmul.mubr.bf16.gmra.mxu0 %v980
      %v1052 = vpop.f32.mrf.mxu0
      %v1053 = vadd.f32 0.0, %v1052
      %v1054 = vpop.f32.mrf.mxu0
      %v1055 = vpop.f32.mrf.mxu0
      %v1056 = vadd.f32 0.0, %v1055
      %v1057 = vpop.f32.mrf.mxu0
      %1058 = vdwg.mxu0
      %vm1059 = vcmask 523264
      %v1060 = vsel %vm1059, %v1029, -inf
      %1061 = vmax.xlane.f32.xlu0 %v1060
      %v1062 = vpop.xlane.xlu0 %1061
      %v1063 = vsel %vm1059, %v1032, -inf
      %1064 = vmax.xlane.f32.xlu0 %v1063
      %v1065 = vpop.xlane.xlu0 %1064
      %v1066 = vsel %vm1059, %v1037, -inf
      %1067 = vmax.xlane.f32.xlu0 %v1066
      %v1068 = vpop.xlane.xlu0 %1067
      %v1069 = vsel %vm1059, %v1040, -inf
      %1070 = vmax.xlane.f32.xlu0 %v1069
      %v1071 = vpop.xlane.xlu0 %1070
      %v1072 = vsel %vm1059, %v1045, -inf
      %1073 = vmax.xlane.f32.xlu0 %v1072
      %v1074 = vpop.xlane.xlu0 %1073
      %v1075 = vsel %vm1059, %v1048, -inf
      %1076 = vmax.xlane.f32.xlu0 %v1075
      %v1077 = vpop.xlane.xlu0 %1076
      %v1078 = vsel %vm1059, %v1053, -inf
      %1079 = vmax.xlane.f32.xlu0 %v1078
      %v1080 = vpop.xlane.xlu0 %1079
      %v1081 = vsel %vm1059, %v1056, -inf
      %1082 = vmax.xlane.f32.xlu0 %v1081
      %v1083 = vpop.xlane.xlu0 %1082
      %v1084 = vsub.f32 %v1029, %v1062
      %v1085 = vsub.f32 %v1032, %v1065
      %v1086 = vsub.f32 %v1037, %v1068
      %v1087 = vsub.f32 %v1040, %v1071
      %v1088 = vsub.f32 %v1045, %v1074
      %v1089 = vsub.f32 %v1048, %v1077
      %v1090 = vsub.f32 %v1053, %v1080
      %v1091 = vsub.f32 %v1056, %v1083
      %v1092 = vmul.f32 %v1084, 1.442695
      %v1093 = vpow.pop %v1092
      %v1094 = vmul.f32 %v1085, 1.442695
      %v1095 = vpow.pop %v1094
      %v1096 = vmul.f32 %v1086, 1.442695
      %v1097 = vpow.pop %v1096
      %v1098 = vmul.f32 %v1087, 1.442695
      %v1099 = vpow.pop %v1098
      %v1100 = vmul.f32 %v1088, 1.442695
      %v1101 = vpow.pop %v1100
      %v1102 = vmul.f32 %v1089, 1.442695
      %v1103 = vpow.pop %v1102
      %v1104 = vmul.f32 %v1090, 1.442695
      %v1105 = vpow.pop %v1104
      %v1106 = vmul.f32 %v1091, 1.442695
      %v1107 = vpow.pop %v1106
      %v1108 = vsel %vm1059, %v1093, 0.0
      %1109 = vadd.xlane.f32.xlu0 %v1108
      %v1110 = vpop.xlane.xlu0 %1109
      %v1111 = vsel %vm1059, %v1095, 0.0
      %1112 = vadd.xlane.f32.xlu0 %v1111
      %v1113 = vpop.xlane.xlu0 %1112
      %v1114 = vsel %vm1059, %v1097, 0.0
      %1115 = vadd.xlane.f32.xlu0 %v1114
      %v1116 = vpop.xlane.xlu0 %1115
      %v1117 = vsel %vm1059, %v1099, 0.0
      %1118 = vadd.xlane.f32.xlu0 %v1117
      %v1119 = vpop.xlane.xlu0 %1118
      %v1120 = vsel %vm1059, %v1101, 0.0
      %1121 = vadd.xlane.f32.xlu0 %v1120
      %v1122 = vpop.xlane.xlu0 %1121
      %v1123 = vsel %vm1059, %v1103, 0.0
      %1124 = vadd.xlane.f32.xlu0 %v1123
      %v1125 = vpop.xlane.xlu0 %1124
      %v1126 = vsel %vm1059, %v1105, 0.0
      %1127 = vadd.xlane.f32.xlu0 %v1126
      %v1128 = vpop.xlane.xlu0 %1127
      %v1129 = vsel %vm1059, %v1107, 0.0
      %1130 = vadd.xlane.f32.xlu0 %v1129
      %v1131 = vpop.xlane.xlu0 %1130
      %v1132 = vrcp.pop %v1110
      %v1133 = vrcp.pop %v1113
      %v1134 = vrcp.pop %v1116
      %v1135 = vrcp.pop %v1119
      %v1136 = vrcp.pop %v1122
      %v1137 = vrcp.pop %v1125
      %v1138 = vrcp.pop %v1128
      %v1139 = vrcp.pop %v1131
      %v1140 = vmul.f32 %v1093, %v1132
      %v1141 = vmul.f32 %v1095, %v1133
      %v1142 = vmul.f32 %v1097, %v1134
      %v1143 = vmul.f32 %v1099, %v1135
      %v1144 = vmul.f32 %v1101, %v1136
      %v1145 = vmul.f32 %v1103, %v1137
      %v1146 = vmul.f32 %v1105, %v1138
      %v1147 = vmul.f32 %v1107, %v1139
      %v1148 = vpack.c.bf16 %v1141, %v1140
      %v1149 = vpack.c.bf16 %v1143, %v1142
      %v1150 = vpack.c.bf16 %v1145, %v1144
      %v1151 = vpack.c.bf16 %v1147, %v1146
      %v1152 = vpack.c.bf16 %v926, %v923
      %v1153 = vpack.c.bf16 %v934, %v931
      %v1154 = vpack.c.bf16 %v942, %v939
      %v1155 = vpack.c.bf16 %v950, %v947
      %v1157 = vsel %vm1059, %v1148, 0
      %v1160 = vsel %vm1059, %v1149, 0
      %v1163 = vsel %vm1059, %v1150, 0
      %v1166 = vsel %vm1059, %v1151, 0
      %1168 = vmatprep.subr.bf16.mxu0 0
      %1169 = vmatpush1.bf16.msra.mxu0 0
      %1170 = vmatprep.subr.bf16.mxu0 0
      %1171 = vmatpush1.bf16.msra.mxu0 0
      %1172 = vmatprep.subr.bf16.mxu0 0
      %1173 = vmatpush1.bf16.msra.mxu0 0
      %1174 = vmatprep.subr.bf16.mxu0 0
      %1175 = vmatpush1.bf16.msra.mxu0 0
      %1176 = vmatprep.subr.bf16.mxu0 0
      %1177 = vmatpush1.bf16.msra.mxu0 %v1155
      %1178 = vmatprep.subr.bf16.mxu0 0
      %1179 = vmatpush1.bf16.msra.mxu0 %v1154
      %1180 = vmatprep.subr.bf16.mxu0 0
      %1181 = vmatpush1.bf16.msra.mxu0 %v1153
      %1182 = vmatprep.subr.bf16.mxu0 0
      %1183 = vmatpush1.bf16.msra.mxu0 %v1152
      %1184 = vmatprep.subr.bf16.mxu0 0
      %1185 = vmatpush2.bf16.msra.mxu0 0
      %1186 = vmatprep.subr.bf16.mxu0 0
      %1187 = vmatpush2.bf16.msra.mxu0 0
      %1188 = vmatprep.subr.bf16.mxu0 0
      %1189 = vmatpush2.bf16.msra.mxu0 0
      %1190 = vmatprep.subr.bf16.mxu0 0
      %1191 = vmatpush2.bf16.msra.mxu0 0
      %1192 = vmatprep.subr.bf16.mxu0 0
      %1193 = vmatpush2.bf16.msra.mxu0 0
      %1194 = vmatprep.subr.bf16.mxu0 0
      %1195 = vmatpush2.bf16.msra.mxu0 0
      %1196 = vmatprep.subr.bf16.mxu0 0
      %1197 = vmatpush2.bf16.msra.mxu0 0
      %1198 = vmatprep.subr.bf16.mxu0 0
      %1199 = vmatpush2.bf16.msra.mxu0 0
      %1200 = vmatprep.mubr.bf16.mxu0 0
      %1201 = vmatmul.mubr.bf16.gmra.mxu0 %v1157
      %v1202 = vpop.f32.mrf.mxu0
      %v1203 = vadd.f32 0.0, %v1202
      %v1204 = vpop.f32.mrf.mxu0
      %v1205 = vpop.f32.mrf.mxu0
      %v1206 = vadd.f32 0.0, %v1205
      %v1207 = vpop.f32.mrf.mxu0
      %1208 = vmatprep.mubr.bf16.mxu0 0
      %1209 = vmatmul.mubr.bf16.gmra.mxu0 %v1160
      %v1210 = vpop.f32.mrf.mxu0
      %v1211 = vadd.f32 0.0, %v1210
      %v1212 = vpop.f32.mrf.mxu0
      %v1213 = vpop.f32.mrf.mxu0
      %v1214 = vadd.f32 0.0, %v1213
      %v1215 = vpop.f32.mrf.mxu0
      %1216 = vmatprep.mubr.bf16.mxu0 0
      %1217 = vmatmul.mubr.bf16.gmra.mxu0 %v1163
      %v1218 = vpop.f32.mrf.mxu0
      %v1219 = vadd.f32 0.0, %v1218
      %v1220 = vpop.f32.mrf.mxu0
      %v1221 = vpop.f32.mrf.mxu0
      %v1222 = vadd.f32 0.0, %v1221
      %v1223 = vpop.f32.mrf.mxu0
      %1224 = vmatprep.mubr.bf16.mxu0 0
      %1225 = vmatmul.mubr.bf16.gmra.mxu0 %v1166
      %v1226 = vpop.f32.mrf.mxu0
      %v1227 = vadd.f32 0.0, %v1226
      %v1228 = vpop.f32.mrf.mxu0
      %v1229 = vpop.f32.mrf.mxu0
      %v1230 = vadd.f32 0.0, %v1229
      %v1231 = vpop.f32.mrf.mxu0
      %1232 = vdwg.mxu0
      %v1233 = vpack.c.bf16 %v1206, %v1203
      %v1234 = vpack.c.bf16 %v1214, %v1211
      %v1235 = vpack.c.bf16 %v1222, %v1219
      %v1236 = vpack.c.bf16 %v1230, %v1227
      %v1237 = vld [vmem:[%s6] sm:$0xf]
      %s1238 = scalar_lea.vmem %s3, 16
      %v1239 = vld [vmem:[%s1238] sm:$0xf]
      %v1240 = vld [vmem:[%s1238 + $0x4] sm:$0xf]
      %v1241 = vld [vmem:[%s1238 + $0x8] sm:$0xf]
      %v1242 = vld [vmem:[%s1238 + $0xc] sm:$0xf]
      %v1247 = vunpack.c.l.b16 %v1239
      %v1248 = vunpack.c.l.b16 %v1240
      %v1249 = vunpack.c.l.b16 %v1241
      %v1250 = vunpack.c.l.b16 %v1242
      %v1251 = vpack.c.b16 %v1248, %v1247
      %v1252 = vpack.c.b16 %v1250, %v1249
      %1255 = vmatprep.subr.bf16.mxu0 0
      %1256 = vmatpush1.bf16.msra.mxu0 0
      %1257 = vmatprep.subr.bf16.mxu0 0
      %1258 = vmatpush1.bf16.msra.mxu0 0
      %1259 = vmatprep.subr.bf16.mxu0 0
      %1260 = vmatpush1.bf16.msra.mxu0 0
      %1261 = vmatprep.subr.bf16.mxu0 0
      %1262 = vmatpush1.bf16.msra.mxu0 0
      %1263 = vmatprep.subr.bf16.mxu0 0
      %1264 = vmatpush1.bf16.msra.mxu0 0
      %1265 = vmatprep.subr.bf16.mxu0 0
      %1266 = vmatpush1.bf16.msra.mxu0 0
      %1267 = vmatprep.subr.bf16.mxu0 0
      %1268 = vmatpush1.bf16.msra.mxu0 %v1252
      %1269 = vmatprep.subr.bf16.mxu0 0
      %1270 = vmatpush1.bf16.msra.mxu0 %v1251
      %1271 = vmatprep.subr.bf16.mxu0 0
      %1272 = vmatpush2.bf16.msra.mxu0 0
      %1273 = vmatprep.subr.bf16.mxu0 0
      %1274 = vmatpush2.bf16.msra.mxu0 0
      %1275 = vmatprep.subr.bf16.mxu0 0
      %1276 = vmatpush2.bf16.msra.mxu0 0
      %1277 = vmatprep.subr.bf16.mxu0 0
      %1278 = vmatpush2.bf16.msra.mxu0 0
      %1279 = vmatprep.subr.bf16.mxu0 0
      %1280 = vmatpush2.bf16.msra.mxu0 0
      %1281 = vmatprep.subr.bf16.mxu0 0
      %1282 = vmatpush2.bf16.msra.mxu0 0
      %1283 = vmatprep.subr.bf16.mxu0 0
      %1284 = vmatpush2.bf16.msra.mxu0 0
      %1285 = vmatprep.subr.bf16.mxu0 0
      %1286 = vmatpush2.bf16.msra.mxu0 0
      %1287 = vmatprep.mubr.bf16.mxu0 0
      %1288 = vmatmul.mubr.bf16.gmra.mxu0 %v715
      %v1289 = vpop.f32.mrf.mxu0
      %v1290 = vadd.f32 0.0, %v1289
      %v1291 = vpop.f32.mrf.mxu0
      %v1292 = vpop.f32.mrf.mxu0
      %v1293 = vadd.f32 0.0, %v1292
      %v1294 = vpop.f32.mrf.mxu0
      %1295 = vmatprep.mubr.bf16.mxu0 0
      %1296 = vmatmul.mubr.bf16.gmra.mxu0 %v718
      %v1297 = vpop.f32.mrf.mxu0
      %v1298 = vadd.f32 0.0, %v1297
      %v1299 = vpop.f32.mrf.mxu0
      %v1300 = vpop.f32.mrf.mxu0
      %v1301 = vadd.f32 0.0, %v1300
      %v1302 = vpop.f32.mrf.mxu0
      %1303 = vmatprep.mubr.bf16.mxu0 0
      %1304 = vmatmul.mubr.bf16.gmra.mxu0 %v721
      %v1305 = vpop.f32.mrf.mxu0
      %v1306 = vadd.f32 0.0, %v1305
      %v1307 = vpop.f32.mrf.mxu0
      %v1308 = vpop.f32.mrf.mxu0
      %v1309 = vadd.f32 0.0, %v1308
      %v1310 = vpop.f32.mrf.mxu0
      %1311 = vmatprep.mubr.bf16.mxu0 0
      %1312 = vmatmul.mubr.bf16.gmra.mxu0 %v724
      %v1313 = vpop.f32.mrf.mxu0
      %v1314 = vadd.f32 0.0, %v1313
      %v1315 = vpop.f32.mrf.mxu0
      %v1316 = vpop.f32.mrf.mxu0
      %v1317 = vadd.f32 0.0, %v1316
      %v1318 = vpop.f32.mrf.mxu0
      %1319 = vdwg.mxu0
      %s1320 = scalar_lea.vmem %s4, 16
      %v1321 = vld [vmem:[%s1320] sm:$0xf]
      %v1322 = vld [vmem:[%s1320 + $0x4] sm:$0xf]
      %v1323 = vld [vmem:[%s1320 + $0x8] sm:$0xf]
      %v1324 = vld [vmem:[%s1320 + $0xc] sm:$0xf]
      %v1329 = vunpack.c.l.b16 %v1321
      %v1330 = vunpack.c.l.b16 %v1322
      %v1331 = vunpack.c.l.b16 %v1323
      %v1332 = vunpack.c.l.b16 %v1324
      %v1333 = vpack.c.b16 %v1330, %v1329
      %v1334 = vpack.c.b16 %v1332, %v1331
      %1337 = vmatprep.subr.bf16.mxu0 0
      %1338 = vmatpush1.bf16.msra.mxu0 0
      %1339 = vmatprep.subr.bf16.mxu0 0
      %1340 = vmatpush1.bf16.msra.mxu0 0
      %1341 = vmatprep.subr.bf16.mxu0 0
      %1342 = vmatpush1.bf16.msra.mxu0 0
      %1343 = vmatprep.subr.bf16.mxu0 0
      %1344 = vmatpush1.bf16.msra.mxu0 0
      %1345 = vmatprep.subr.bf16.mxu0 0
      %1346 = vmatpush1.bf16.msra.mxu0 0
      %1347 = vmatprep.subr.bf16.mxu0 0
      %1348 = vmatpush1.bf16.msra.mxu0 0
      %1349 = vmatprep.subr.bf16.mxu0 0
      %1350 = vmatpush1.bf16.msra.mxu0 %v1334
      %1351 = vmatprep.subr.bf16.mxu0 0
      %1352 = vmatpush1.bf16.msra.mxu0 %v1333
      %1353 = vmatprep.subr.bf16.mxu0 0
      %1354 = vmatpush2.bf16.msra.mxu0 0
      %1355 = vmatprep.subr.bf16.mxu0 0
      %1356 = vmatpush2.bf16.msra.mxu0 0
      %1357 = vmatprep.subr.bf16.mxu0 0
      %1358 = vmatpush2.bf16.msra.mxu0 0
      %1359 = vmatprep.subr.bf16.mxu0 0
      %1360 = vmatpush2.bf16.msra.mxu0 0
      %1361 = vmatprep.subr.bf16.mxu0 0
      %1362 = vmatpush2.bf16.msra.mxu0 0
      %1363 = vmatprep.subr.bf16.mxu0 0
      %1364 = vmatpush2.bf16.msra.mxu0 0
      %1365 = vmatprep.subr.bf16.mxu0 0
      %1366 = vmatpush2.bf16.msra.mxu0 0
      %1367 = vmatprep.subr.bf16.mxu0 0
      %1368 = vmatpush2.bf16.msra.mxu0 0
      %1369 = vmatprep.mubr.bf16.mxu0 0
      %1370 = vmatmul.mubr.bf16.gmra.mxu0 %v715
      %v1371 = vpop.f32.mrf.mxu0
      %v1372 = vadd.f32 0.0, %v1371
      %v1373 = vpop.f32.mrf.mxu0
      %v1374 = vpop.f32.mrf.mxu0
      %v1375 = vadd.f32 0.0, %v1374
      %v1376 = vpop.f32.mrf.mxu0
      %1377 = vmatprep.mubr.bf16.mxu0 0
      %1378 = vmatmul.mubr.bf16.gmra.mxu0 %v718
      %v1379 = vpop.f32.mrf.mxu0
      %v1380 = vadd.f32 0.0, %v1379
      %v1381 = vpop.f32.mrf.mxu0
      %v1382 = vpop.f32.mrf.mxu0
      %v1383 = vadd.f32 0.0, %v1382
      %v1384 = vpop.f32.mrf.mxu0
      %1385 = vmatprep.mubr.bf16.mxu0 0
      %1386 = vmatmul.mubr.bf16.gmra.mxu0 %v721
      %v1387 = vpop.f32.mrf.mxu0
      %v1388 = vadd.f32 0.0, %v1387
      %v1389 = vpop.f32.mrf.mxu0
      %v1390 = vpop.f32.mrf.mxu0
      %v1391 = vadd.f32 0.0, %v1390
      %v1392 = vpop.f32.mrf.mxu0
      %1393 = vmatprep.mubr.bf16.mxu0 0
      %1394 = vmatmul.mubr.bf16.gmra.mxu0 %v724
      %v1395 = vpop.f32.mrf.mxu0
      %v1396 = vadd.f32 0.0, %v1395
      %v1397 = vpop.f32.mrf.mxu0
      %v1398 = vpop.f32.mrf.mxu0
      %v1399 = vadd.f32 0.0, %v1398
      %v1400 = vpop.f32.mrf.mxu0
      %1401 = vdwg.mxu0
      %s1402 = scalar_lea.vmem %s5, 16
      %v1403 = vld [vmem:[%s1402] sm:$0xf]
      %v1404 = vld [vmem:[%s1402 + $0x4] sm:$0xf]
      %v1405 = vld [vmem:[%s1402 + $0x8] sm:$0xf]
      %v1406 = vld [vmem:[%s1402 + $0xc] sm:$0xf]
      %v1411 = vunpack.c.l.b16 %v1403
      %v1412 = vunpack.c.l.b16 %v1404
      %v1413 = vunpack.c.l.b16 %v1405
      %v1414 = vunpack.c.l.b16 %v1406
      %v1415 = vpack.c.b16 %v1412, %v1411
      %v1416 = vpack.c.b16 %v1414, %v1413
      %1419 = vmatprep.subr.bf16.mxu0 0
      %1420 = vmatpush1.bf16.msra.mxu0 0
      %1421 = vmatprep.subr.bf16.mxu0 0
      %1422 = vmatpush1.bf16.msra.mxu0 0
      %1423 = vmatprep.subr.bf16.mxu0 0
      %1424 = vmatpush1.bf16.msra.mxu0 0
      %1425 = vmatprep.subr.bf16.mxu0 0
      %1426 = vmatpush1.bf16.msra.mxu0 0
      %1427 = vmatprep.subr.bf16.mxu0 0
      %1428 = vmatpush1.bf16.msra.mxu0 0
      %1429 = vmatprep.subr.bf16.mxu0 0
      %1430 = vmatpush1.bf16.msra.mxu0 0
      %1431 = vmatprep.subr.bf16.mxu0 0
      %1432 = vmatpush1.bf16.msra.mxu0 %v1416
      %1433 = vmatprep.subr.bf16.mxu0 0
      %1434 = vmatpush1.bf16.msra.mxu0 %v1415
      %1435 = vmatprep.subr.bf16.mxu0 0
      %1436 = vmatpush2.bf16.msra.mxu0 0
      %1437 = vmatprep.subr.bf16.mxu0 0
      %1438 = vmatpush2.bf16.msra.mxu0 0
      %1439 = vmatprep.subr.bf16.mxu0 0
      %1440 = vmatpush2.bf16.msra.mxu0 0
      %1441 = vmatprep.subr.bf16.mxu0 0
      %1442 = vmatpush2.bf16.msra.mxu0 0
      %1443 = vmatprep.subr.bf16.mxu0 0
      %1444 = vmatpush2.bf16.msra.mxu0 0
      %1445 = vmatprep.subr.bf16.mxu0 0
      %1446 = vmatpush2.bf16.msra.mxu0 0
      %1447 = vmatprep.subr.bf16.mxu0 0
      %1448 = vmatpush2.bf16.msra.mxu0 0
      %1449 = vmatprep.subr.bf16.mxu0 0
      %1450 = vmatpush2.bf16.msra.mxu0 0
      %1451 = vmatprep.mubr.bf16.mxu0 0
      %1452 = vmatmul.mubr.bf16.gmra.mxu0 %v715
      %v1453 = vpop.f32.mrf.mxu0
      %v1454 = vadd.f32 0.0, %v1453
      %v1455 = vpop.f32.mrf.mxu0
      %v1456 = vpop.f32.mrf.mxu0
      %v1457 = vadd.f32 0.0, %v1456
      %v1458 = vpop.f32.mrf.mxu0
      %1459 = vmatprep.mubr.bf16.mxu0 0
      %1460 = vmatmul.mubr.bf16.gmra.mxu0 %v718
      %v1461 = vpop.f32.mrf.mxu0
      %v1462 = vadd.f32 0.0, %v1461
      %v1463 = vpop.f32.mrf.mxu0
      %v1464 = vpop.f32.mrf.mxu0
      %v1465 = vadd.f32 0.0, %v1464
      %v1466 = vpop.f32.mrf.mxu0
      %1467 = vmatprep.mubr.bf16.mxu0 0
      %1468 = vmatmul.mubr.bf16.gmra.mxu0 %v721
      %v1469 = vpop.f32.mrf.mxu0
      %v1470 = vadd.f32 0.0, %v1469
      %v1471 = vpop.f32.mrf.mxu0
      %v1472 = vpop.f32.mrf.mxu0
      %v1473 = vadd.f32 0.0, %v1472
      %v1474 = vpop.f32.mrf.mxu0
      %1475 = vmatprep.mubr.bf16.mxu0 0
      %1476 = vmatmul.mubr.bf16.gmra.mxu0 %v724
      %v1477 = vpop.f32.mrf.mxu0
      %v1478 = vadd.f32 0.0, %v1477
      %v1479 = vpop.f32.mrf.mxu0
      %v1480 = vpop.f32.mrf.mxu0
      %v1481 = vadd.f32 0.0, %v1480
      %v1482 = vpop.f32.mrf.mxu0
      %1483 = vdwg.mxu0
      %v1484 = vmul.f32 %v1290, 0.35355338
      %v1485 = vmul.f32 %v1293, 0.35355338
      %v1486 = vmul.f32 %v1298, 0.35355338
      %v1487 = vmul.f32 %v1301, 0.35355338
      %v1488 = vmul.f32 %v1306, 0.35355338
      %v1489 = vmul.f32 %v1309, 0.35355338
      %v1490 = vmul.f32 %v1314, 0.35355338
      %v1491 = vmul.f32 %v1317, 0.35355338
      %v1492 = vpack.c.bf16 %v1485, %v1484
      %v1493 = vpack.c.bf16 %v1487, %v1486
      %v1494 = vpack.c.bf16 %v1489, %v1488
      %v1495 = vpack.c.bf16 %v1491, %v1490
      %v1496 = vpack.c.bf16 %v1375, %v1372
      %v1497 = vpack.c.bf16 %v1383, %v1380
      %v1498 = vpack.c.bf16 %v1391, %v1388
      %v1499 = vpack.c.bf16 %v1399, %v1396
      %v1501 = vsel %vm969, %v1492, 0
      %v1504 = vsel %vm969, %v1493, 0
      %v1507 = vsel %vm969, %v1494, 0
      %v1510 = vsel %vm969, %v1495, 0
      %v1513 = vsel %vm969, %v1496, 0
      %v1516 = vsel %vm969, %v1497, 0
      %v1519 = vsel %vm969, %v1498, 0
      %v1522 = vsel %vm969, %v1499, 0
      %1524 = vmatprep.subr.bf16.mxu0 0
      %1525 = vmatpush1.bf16.xpose.msra.mxu0 0
      %1526 = vmatprep.subr.bf16.mxu0 0
      %1527 = vmatpush1.bf16.xpose.msra.mxu0 0
      %1528 = vmatprep.subr.bf16.mxu0 0
      %1529 = vmatpush1.bf16.xpose.msra.mxu0 0
      %1530 = vmatprep.subr.bf16.mxu0 0
      %1531 = vmatpush1.bf16.xpose.msra.mxu0 0
      %1532 = vmatprep.subr.bf16.mxu0 0
      %1533 = vmatpush1.bf16.xpose.msra.mxu0 %v1522
      %1534 = vmatprep.subr.bf16.mxu0 0
      %1535 = vmatpush1.bf16.xpose.msra.mxu0 %v1519
      %1536 = vmatprep.subr.bf16.mxu0 0
      %1537 = vmatpush1.bf16.xpose.msra.mxu0 %v1516
      %1538 = vmatprep.subr.bf16.mxu0 0
      %1539 = vmatpush1.bf16.xpose.msra.mxu0 %v1513
      %1540 = vmatprep.subr.bf16.mxu0 0
      %1541 = vmatpush2.bf16.xpose.msra.mxu0 0
      %1542 = vmatprep.subr.bf16.mxu0 0
      %1543 = vmatpush2.bf16.xpose.msra.mxu0 0
      %1544 = vmatprep.subr.bf16.mxu0 0
      %1545 = vmatpush2.bf16.xpose.msra.mxu0 0
      %1546 = vmatprep.subr.bf16.mxu0 0
      %1547 = vmatpush2.bf16.xpose.msra.mxu0 0
      %1548 = vmatprep.subr.bf16.mxu0 0
      %1549 = vmatpush2.bf16.xpose.msra.mxu0 0
      %1550 = vmatprep.subr.bf16.mxu0 0
      %1551 = vmatpush2.bf16.xpose.msra.mxu0 0
      %1552 = vmatprep.subr.bf16.mxu0 0
      %1553 = vmatpush2.bf16.xpose.msra.mxu0 0
      %1554 = vmatprep.subr.bf16.mxu0 0
      %1555 = vmatpush2.bf16.xpose.msra.mxu0 0
      %1556 = vmatprep.mubr.bf16.mxu0 0
      %1557 = vmatmul.mubr.bf16.gmra.mxu0 %v1501
      %v1558 = vpop.f32.mrf.mxu0
      %v1559 = vadd.f32 0.0, %v1558
      %v1560 = vpop.f32.mrf.mxu0
      %v1561 = vpop.f32.mrf.mxu0
      %v1562 = vadd.f32 0.0, %v1561
      %v1563 = vpop.f32.mrf.mxu0
      %1564 = vmatprep.mubr.bf16.mxu0 0
      %1565 = vmatmul.mubr.bf16.gmra.mxu0 %v1504
      %v1566 = vpop.f32.mrf.mxu0
      %v1567 = vadd.f32 0.0, %v1566
      %v1568 = vpop.f32.mrf.mxu0
      %v1569 = vpop.f32.mrf.mxu0
      %v1570 = vadd.f32 0.0, %v1569
      %v1571 = vpop.f32.mrf.mxu0
      %1572 = vmatprep.mubr.bf16.mxu0 0
      %1573 = vmatmul.mubr.bf16.gmra.mxu0 %v1507
      %v1574 = vpop.f32.mrf.mxu0
      %v1575 = vadd.f32 0.0, %v1574
      %v1576 = vpop.f32.mrf.mxu0
      %v1577 = vpop.f32.mrf.mxu0
      %v1578 = vadd.f32 0.0, %v1577
      %v1579 = vpop.f32.mrf.mxu0
      %1580 = vmatprep.mubr.bf16.mxu0 0
      %1581 = vmatmul.mubr.bf16.gmra.mxu0 %v1510
      %v1582 = vpop.f32.mrf.mxu0
      %v1583 = vadd.f32 0.0, %v1582
      %v1584 = vpop.f32.mrf.mxu0
      %v1585 = vpop.f32.mrf.mxu0
      %v1586 = vadd.f32 0.0, %v1585
      %v1587 = vpop.f32.mrf.mxu0
      %1588 = vdwg.mxu0
      %v1589 = vsel %vm1059, %v1559, -inf
      %1590 = vmax.xlane.f32.xlu0 %v1589
      %v1591 = vpop.xlane.xlu0 %1590
      %v1592 = vsel %vm1059, %v1562, -inf
      %1593 = vmax.xlane.f32.xlu0 %v1592
      %v1594 = vpop.xlane.xlu0 %1593
      %v1595 = vsel %vm1059, %v1567, -inf
      %1596 = vmax.xlane.f32.xlu0 %v1595
      %v1597 = vpop.xlane.xlu0 %1596
      %v1598 = vsel %vm1059, %v1570, -inf
      %1599 = vmax.xlane.f32.xlu0 %v1598
      %v1600 = vpop.xlane.xlu0 %1599
      %v1601 = vsel %vm1059, %v1575, -inf
      %1602 = vmax.xlane.f32.xlu0 %v1601
      %v1603 = vpop.xlane.xlu0 %1602
      %v1604 = vsel %vm1059, %v1578, -inf
      %1605 = vmax.xlane.f32.xlu0 %v1604
      %v1606 = vpop.xlane.xlu0 %1605
      %v1607 = vsel %vm1059, %v1583, -inf
      %1608 = vmax.xlane.f32.xlu0 %v1607
      %v1609 = vpop.xlane.xlu0 %1608
      %v1610 = vsel %vm1059, %v1586, -inf
      %1611 = vmax.xlane.f32.xlu0 %v1610
      %v1612 = vpop.xlane.xlu0 %1611
      %v1613 = vsub.f32 %v1559, %v1591
      %v1614 = vsub.f32 %v1562, %v1594
      %v1615 = vsub.f32 %v1567, %v1597
      %v1616 = vsub.f32 %v1570, %v1600
      %v1617 = vsub.f32 %v1575, %v1603
      %v1618 = vsub.f32 %v1578, %v1606
      %v1619 = vsub.f32 %v1583, %v1609
      %v1620 = vsub.f32 %v1586, %v1612
      %v1621 = vmul.f32 %v1613, 1.442695
      %v1622 = vpow.pop %v1621
      %v1623 = vmul.f32 %v1614, 1.442695
      %v1624 = vpow.pop %v1623
      %v1625 = vmul.f32 %v1615, 1.442695
      %v1626 = vpow.pop %v1625
      %v1627 = vmul.f32 %v1616, 1.442695
      %v1628 = vpow.pop %v1627
      %v1629 = vmul.f32 %v1617, 1.442695
      %v1630 = vpow.pop %v1629
      %v1631 = vmul.f32 %v1618, 1.442695
      %v1632 = vpow.pop %v1631
      %v1633 = vmul.f32 %v1619, 1.442695
      %v1634 = vpow.pop %v1633
      %v1635 = vmul.f32 %v1620, 1.442695
      %v1636 = vpow.pop %v1635
      %v1637 = vsel %vm1059, %v1622, 0.0
      %1638 = vadd.xlane.f32.xlu0 %v1637
      %v1639 = vpop.xlane.xlu0 %1638
      %v1640 = vsel %vm1059, %v1624, 0.0
      %1641 = vadd.xlane.f32.xlu0 %v1640
      %v1642 = vpop.xlane.xlu0 %1641
      %v1643 = vsel %vm1059, %v1626, 0.0
      %1644 = vadd.xlane.f32.xlu0 %v1643
      %v1645 = vpop.xlane.xlu0 %1644
      %v1646 = vsel %vm1059, %v1628, 0.0
      %1647 = vadd.xlane.f32.xlu0 %v1646
      %v1648 = vpop.xlane.xlu0 %1647
      %v1649 = vsel %vm1059, %v1630, 0.0
      %1650 = vadd.xlane.f32.xlu0 %v1649
      %v1651 = vpop.xlane.xlu0 %1650
      %v1652 = vsel %vm1059, %v1632, 0.0
      %1653 = vadd.xlane.f32.xlu0 %v1652
      %v1654 = vpop.xlane.xlu0 %1653
      %v1655 = vsel %vm1059, %v1634, 0.0
      %1656 = vadd.xlane.f32.xlu0 %v1655
      %v1657 = vpop.xlane.xlu0 %1656
      %v1658 = vsel %vm1059, %v1636, 0.0
      %1659 = vadd.xlane.f32.xlu0 %v1658
      %v1660 = vpop.xlane.xlu0 %1659
      %v1661 = vrcp.pop %v1639
      %v1662 = vrcp.pop %v1642
      %v1663 = vrcp.pop %v1645
      %v1664 = vrcp.pop %v1648
      %v1665 = vrcp.pop %v1651
      %v1666 = vrcp.pop %v1654
      %v1667 = vrcp.pop %v1657
      %v1668 = vrcp.pop %v1660
      %v1669 = vmul.f32 %v1622, %v1661
      %v1670 = vmul.f32 %v1624, %v1662
      %v1671 = vmul.f32 %v1626, %v1663
      %v1672 = vmul.f32 %v1628, %v1664
      %v1673 = vmul.f32 %v1630, %v1665
      %v1674 = vmul.f32 %v1632, %v1666
      %v1675 = vmul.f32 %v1634, %v1667
      %v1676 = vmul.f32 %v1636, %v1668
      %v1677 = vpack.c.bf16 %v1670, %v1669
      %v1678 = vpack.c.bf16 %v1672, %v1671
      %v1679 = vpack.c.bf16 %v1674, %v1673
      %v1680 = vpack.c.bf16 %v1676, %v1675
      %v1681 = vpack.c.bf16 %v1457, %v1454
      %v1682 = vpack.c.bf16 %v1465, %v1462
      %v1683 = vpack.c.bf16 %v1473, %v1470
      %v1684 = vpack.c.bf16 %v1481, %v1478
      %v1686 = vsel %vm1059, %v1677, 0
      %v1689 = vsel %vm1059, %v1678, 0
      %v1692 = vsel %vm1059, %v1679, 0
      %v1695 = vsel %vm1059, %v1680, 0
      %1697 = vmatprep.subr.bf16.mxu0 0
      %1698 = vmatpush1.bf16.msra.mxu0 0
      %1699 = vmatprep.subr.bf16.mxu0 0
      %1700 = vmatpush1.bf16.msra.mxu0 0
      %1701 = vmatprep.subr.bf16.mxu0 0
      %1702 = vmatpush1.bf16.msra.mxu0 0
      %1703 = vmatprep.subr.bf16.mxu0 0
      %1704 = vmatpush1.bf16.msra.mxu0 0
      %1705 = vmatprep.subr.bf16.mxu0 0
      %1706 = vmatpush1.bf16.msra.mxu0 %v1684
      %1707 = vmatprep.subr.bf16.mxu0 0
      %1708 = vmatpush1.bf16.msra.mxu0 %v1683
      %1709 = vmatprep.subr.bf16.mxu0 0
      %1710 = vmatpush1.bf16.msra.mxu0 %v1682
      %1711 = vmatprep.subr.bf16.mxu0 0
      %1712 = vmatpush1.bf16.msra.mxu0 %v1681
      %1713 = vmatprep.subr.bf16.mxu0 0
      %1714 = vmatpush2.bf16.msra.mxu0 0
      %1715 = vmatprep.subr.bf16.mxu0 0
      %1716 = vmatpush2.bf16.msra.mxu0 0
      %1717 = vmatprep.subr.bf16.mxu0 0
      %1718 = vmatpush2.bf16.msra.mxu0 0
      %1719 = vmatprep.subr.bf16.mxu0 0
      %1720 = vmatpush2.bf16.msra.mxu0 0
      %1721 = vmatprep.subr.bf16.mxu0 0
      %1722 = vmatpush2.bf16.msra.mxu0 0
      %1723 = vmatprep.subr.bf16.mxu0 0
      %1724 = vmatpush2.bf16.msra.mxu0 0
      %1725 = vmatprep.subr.bf16.mxu0 0
      %1726 = vmatpush2.bf16.msra.mxu0 0
      %1727 = vmatprep.subr.bf16.mxu0 0
      %1728 = vmatpush2.bf16.msra.mxu0 0
      %1729 = vmatprep.mubr.bf16.mxu0 0
      %1730 = vmatmul.mubr.bf16.gmra.mxu0 %v1686
      %v1731 = vpop.f32.mrf.mxu0
      %v1732 = vadd.f32 0.0, %v1731
      %v1733 = vpop.f32.mrf.mxu0
      %v1734 = vpop.f32.mrf.mxu0
      %v1735 = vadd.f32 0.0, %v1734
      %v1736 = vpop.f32.mrf.mxu0
      %1737 = vmatprep.mubr.bf16.mxu0 0
      %1738 = vmatmul.mubr.bf16.gmra.mxu0 %v1689
      %v1739 = vpop.f32.mrf.mxu0
      %v1740 = vadd.f32 0.0, %v1739
      %v1741 = vpop.f32.mrf.mxu0
      %v1742 = vpop.f32.mrf.mxu0
      %v1743 = vadd.f32 0.0, %v1742
      %v1744 = vpop.f32.mrf.mxu0
      %1745 = vmatprep.mubr.bf16.mxu0 0
      %1746 = vmatmul.mubr.bf16.gmra.mxu0 %v1692
      %v1747 = vpop.f32.mrf.mxu0
      %v1748 = vadd.f32 0.0, %v1747
      %v1749 = vpop.f32.mrf.mxu0
      %v1750 = vpop.f32.mrf.mxu0
      %v1751 = vadd.f32 0.0, %v1750
      %v1752 = vpop.f32.mrf.mxu0
      %1753 = vmatprep.mubr.bf16.mxu0 0
      %1754 = vmatmul.mubr.bf16.gmra.mxu0 %v1695
      %v1755 = vpop.f32.mrf.mxu0
      %v1756 = vadd.f32 0.0, %v1755
      %v1757 = vpop.f32.mrf.mxu0
      %v1758 = vpop.f32.mrf.mxu0
      %v1759 = vadd.f32 0.0, %v1758
      %v1760 = vpop.f32.mrf.mxu0
      %1761 = vdwg.mxu0
      %v1762 = vpack.c.bf16 %v1735, %v1732
      %v1763 = vpack.c.bf16 %v1743, %v1740
      %v1764 = vpack.c.bf16 %v1751, %v1748
      %v1765 = vpack.c.bf16 %v1759, %v1756
      %s1766 = scalar_lea.vmem %s6, 4
      %v1767 = vld [vmem:[%s1766] sm:$0xf]
      %v1769 = vsel %vm969, %v1762, 0
      %v1772 = vsel %vm969, %v1763, 0
      %v1775 = vsel %vm969, %v1764, 0
      %v1778 = vsel %vm969, %v1765, 0
      %vm1780 = vcmask 1043456
      %v1782 = vsel %vm1780, %v1767, 0
      %1784 = vmatprep.subr.bf16.mxu0 0
      %1785 = vmatpush1.bf16.msra.mxu0 0
      %1786 = vmatprep.subr.bf16.mxu0 0
      %1787 = vmatpush1.bf16.msra.mxu0 0
      %1788 = vmatprep.subr.bf16.mxu0 0
      %1789 = vmatpush1.bf16.msra.mxu0 0
      %1790 = vmatprep.subr.bf16.mxu0 0
      %1791 = vmatpush1.bf16.msra.mxu0 0
      %1792 = vmatprep.subr.bf16.mxu0 0
      %1793 = vmatpush1.bf16.msra.mxu0 0
      %1794 = vmatprep.subr.bf16.mxu0 0
      %1795 = vmatpush1.bf16.msra.mxu0 0
      %1796 = vmatprep.subr.bf16.mxu0 0
      %1797 = vmatpush1.bf16.msra.mxu0 0
      %1798 = vmatprep.subr.bf16.mxu0 0
      %1799 = vmatpush1.bf16.msra.mxu0 %v1782
      %1800 = vmatprep.subr.bf16.mxu0 0
      %1801 = vmatpush2.bf16.msra.mxu0 0
      %1802 = vmatprep.subr.bf16.mxu0 0
      %1803 = vmatpush2.bf16.msra.mxu0 0
      %1804 = vmatprep.subr.bf16.mxu0 0
      %1805 = vmatpush2.bf16.msra.mxu0 0
      %1806 = vmatprep.subr.bf16.mxu0 0
      %1807 = vmatpush2.bf16.msra.mxu0 0
      %1808 = vmatprep.subr.bf16.mxu0 0
      %1809 = vmatpush2.bf16.msra.mxu0 0
      %1810 = vmatprep.subr.bf16.mxu0 0
      %1811 = vmatpush2.bf16.msra.mxu0 0
      %1812 = vmatprep.subr.bf16.mxu0 0
      %1813 = vmatpush2.bf16.msra.mxu0 0
      %1814 = vmatprep.subr.bf16.mxu0 0
      %1815 = vmatpush2.bf16.msra.mxu0 0
      %1816 = vmatprep.mubr.bf16.mxu0 0
      %1817 = vmatmul.mubr.bf16.gmra.mxu0 %v1769
      %v1818 = vpop.f32.mrf.mxu0
      %v1819 = vadd.f32 0.0, %v1818
      %v1820 = vpop.f32.mrf.mxu0
      %v1821 = vpop.f32.mrf.mxu0
      %v1822 = vadd.f32 0.0, %v1821
      %v1823 = vpop.f32.mrf.mxu0
      %1824 = vmatprep.mubr.bf16.mxu0 0
      %1825 = vmatmul.mubr.bf16.gmra.mxu0 %v1772
      %v1826 = vpop.f32.mrf.mxu0
      %v1827 = vadd.f32 0.0, %v1826
      %v1828 = vpop.f32.mrf.mxu0
      %v1829 = vpop.f32.mrf.mxu0
      %v1830 = vadd.f32 0.0, %v1829
      %v1831 = vpop.f32.mrf.mxu0
      %1832 = vmatprep.mubr.bf16.mxu0 0
      %1833 = vmatmul.mubr.bf16.gmra.mxu0 %v1775
      %v1834 = vpop.f32.mrf.mxu0
      %v1835 = vadd.f32 0.0, %v1834
      %v1836 = vpop.f32.mrf.mxu0
      %v1837 = vpop.f32.mrf.mxu0
      %v1838 = vadd.f32 0.0, %v1837
      %v1839 = vpop.f32.mrf.mxu0
      %1840 = vmatprep.mubr.bf16.mxu0 0
      %1841 = vmatmul.mubr.bf16.gmra.mxu0 %v1778
      %v1842 = vpop.f32.mrf.mxu0
      %v1843 = vadd.f32 0.0, %v1842
      %v1844 = vpop.f32.mrf.mxu0
      %v1845 = vpop.f32.mrf.mxu0
      %v1846 = vadd.f32 0.0, %v1845
      %v1847 = vpop.f32.mrf.mxu0
      %1848 = vdwg.mxu0
      %v1850 = vsel %vm969, %v1233, 0
      %v1853 = vsel %vm969, %v1234, 0
      %v1856 = vsel %vm969, %v1235, 0
      %v1859 = vsel %vm969, %v1236, 0
      %v1862 = vsel %vm1780, %v1237, 0
      %1864 = vmatprep.subr.bf16.mxu0 0
      %1865 = vmatpush1.bf16.msra.mxu0 0
      %1866 = vmatprep.subr.bf16.mxu0 0
      %1867 = vmatpush1.bf16.msra.mxu0 0
      %1868 = vmatprep.subr.bf16.mxu0 0
      %1869 = vmatpush1.bf16.msra.mxu0 0
      %1870 = vmatprep.subr.bf16.mxu0 0
      %1871 = vmatpush1.bf16.msra.mxu0 0
      %1872 = vmatprep.subr.bf16.mxu0 0
      %1873 = vmatpush1.bf16.msra.mxu0 0
      %1874 = vmatprep.subr.bf16.mxu0 0
      %1875 = vmatpush1.bf16.msra.mxu0 0
      %1876 = vmatprep.subr.bf16.mxu0 0
      %1877 = vmatpush1.bf16.msra.mxu0 0
      %1878 = vmatprep.subr.bf16.mxu0 0
      %1879 = vmatpush1.bf16.msra.mxu0 %v1862
      %1880 = vmatprep.subr.bf16.mxu0 0
      %1881 = vmatpush2.bf16.msra.mxu0 0
      %1882 = vmatprep.subr.bf16.mxu0 0
      %1883 = vmatpush2.bf16.msra.mxu0 0
      %1884 = vmatprep.subr.bf16.mxu0 0
      %1885 = vmatpush2.bf16.msra.mxu0 0
      %1886 = vmatprep.subr.bf16.mxu0 0
      %1887 = vmatpush2.bf16.msra.mxu0 0
      %1888 = vmatprep.subr.bf16.mxu0 0
      %1889 = vmatpush2.bf16.msra.mxu0 0
      %1890 = vmatprep.subr.bf16.mxu0 0
      %1891 = vmatpush2.bf16.msra.mxu0 0
      %1892 = vmatprep.subr.bf16.mxu0 0
      %1893 = vmatpush2.bf16.msra.mxu0 0
      %1894 = vmatprep.subr.bf16.mxu0 0
      %1895 = vmatpush2.bf16.msra.mxu0 0
      %1896 = vmatprep.mubr.bf16.mxu0 0
      %1897 = vmatmul.mubr.bf16.gmra.mxu0 %v1850
      %v1898 = vpop.f32.mrf.mxu0
      %v1899 = vadd.f32 %v1819, %v1898
      %v1900 = vpop.f32.mrf.mxu0
      %v1901 = vpop.f32.mrf.mxu0
      %v1902 = vadd.f32 %v1822, %v1901
      %v1903 = vpop.f32.mrf.mxu0
      %1904 = vmatprep.mubr.bf16.mxu0 0
      %1905 = vmatmul.mubr.bf16.gmra.mxu0 %v1853
      %v1906 = vpop.f32.mrf.mxu0
      %v1907 = vadd.f32 %v1827, %v1906
      %v1908 = vpop.f32.mrf.mxu0
      %v1909 = vpop.f32.mrf.mxu0
      %v1910 = vadd.f32 %v1830, %v1909
      %v1911 = vpop.f32.mrf.mxu0
      %1912 = vmatprep.mubr.bf16.mxu0 0
      %1913 = vmatmul.mubr.bf16.gmra.mxu0 %v1856
      %v1914 = vpop.f32.mrf.mxu0
      %v1915 = vadd.f32 %v1835, %v1914
      %v1916 = vpop.f32.mrf.mxu0
      %v1917 = vpop.f32.mrf.mxu0
      %v1918 = vadd.f32 %v1838, %v1917
      %v1919 = vpop.f32.mrf.mxu0
      %1920 = vmatprep.mubr.bf16.mxu0 0
      %1921 = vmatmul.mubr.bf16.gmra.mxu0 %v1859
      %v1922 = vpop.f32.mrf.mxu0
      %v1923 = vadd.f32 %v1843, %v1922
      %v1924 = vpop.f32.mrf.mxu0
      %v1925 = vpop.f32.mrf.mxu0
      %v1926 = vadd.f32 %v1846, %v1925
      %v1927 = vpop.f32.mrf.mxu0
      %1928 = vdwg.mxu0
      %s1929 = scalar_lea.vmem %s3, 32
      %v1930 = vld [vmem:[%s1929] sm:$0xf]
      %v1931 = vld [vmem:[%s1929 + $0x4] sm:$0xf]
      %v1932 = vld [vmem:[%s1929 + $0x8] sm:$0xf]
      %v1933 = vld [vmem:[%s1929 + $0xc] sm:$0xf]
      %v1938 = vunpack.c.l.b16 %v1930
      %v1939 = vunpack.c.l.b16 %v1931
      %v1940 = vunpack.c.l.b16 %v1932
      %v1941 = vunpack.c.l.b16 %v1933
      %v1942 = vpack.c.b16 %v1939, %v1938
      %v1943 = vpack.c.b16 %v1941, %v1940
      %1946 = vmatprep.subr.bf16.mxu0 0
      %1947 = vmatpush1.bf16.msra.mxu0 0
      %1948 = vmatprep.subr.bf16.mxu0 0
      %1949 = vmatpush1.bf16.msra.mxu0 0
      %1950 = vmatprep.subr.bf16.mxu0 0
      %1951 = vmatpush1.bf16.msra.mxu0 0
      %1952 = vmatprep.subr.bf16.mxu0 0
      %1953 = vmatpush1.bf16.msra.mxu0 0
      %1954 = vmatprep.subr.bf16.mxu0 0
      %1955 = vmatpush1.bf16.msra.mxu0 0
      %1956 = vmatprep.subr.bf16.mxu0 0
      %1957 = vmatpush1.bf16.msra.mxu0 0
      %1958 = vmatprep.subr.bf16.mxu0 0
      %1959 = vmatpush1.bf16.msra.mxu0 %v1943
      %1960 = vmatprep.subr.bf16.mxu0 0
      %1961 = vmatpush1.bf16.msra.mxu0 %v1942
      %1962 = vmatprep.subr.bf16.mxu0 0
      %1963 = vmatpush2.bf16.msra.mxu0 0
      %1964 = vmatprep.subr.bf16.mxu0 0
      %1965 = vmatpush2.bf16.msra.mxu0 0
      %1966 = vmatprep.subr.bf16.mxu0 0
      %1967 = vmatpush2.bf16.msra.mxu0 0
      %1968 = vmatprep.subr.bf16.mxu0 0
      %1969 = vmatpush2.bf16.msra.mxu0 0
      %1970 = vmatprep.subr.bf16.mxu0 0
      %1971 = vmatpush2.bf16.msra.mxu0 0
      %1972 = vmatprep.subr.bf16.mxu0 0
      %1973 = vmatpush2.bf16.msra.mxu0 0
      %1974 = vmatprep.subr.bf16.mxu0 0
      %1975 = vmatpush2.bf16.msra.mxu0 0
      %1976 = vmatprep.subr.bf16.mxu0 0
      %1977 = vmatpush2.bf16.msra.mxu0 0
      %1978 = vmatprep.mubr.bf16.mxu0 0
      %1979 = vmatmul.mubr.bf16.gmra.mxu0 %v715
      %v1980 = vpop.f32.mrf.mxu0
      %v1981 = vadd.f32 0.0, %v1980
      %v1982 = vpop.f32.mrf.mxu0
      %v1983 = vpop.f32.mrf.mxu0
      %v1984 = vadd.f32 0.0, %v1983
      %v1985 = vpop.f32.mrf.mxu0
      %1986 = vmatprep.mubr.bf16.mxu0 0
      %1987 = vmatmul.mubr.bf16.gmra.mxu0 %v718
      %v1988 = vpop.f32.mrf.mxu0
      %v1989 = vadd.f32 0.0, %v1988
      %v1990 = vpop.f32.mrf.mxu0
      %v1991 = vpop.f32.mrf.mxu0
      %v1992 = vadd.f32 0.0, %v1991
      %v1993 = vpop.f32.mrf.mxu0
      %1994 = vmatprep.mubr.bf16.mxu0 0
      %1995 = vmatmul.mubr.bf16.gmra.mxu0 %v721
      %v1996 = vpop.f32.mrf.mxu0
      %v1997 = vadd.f32 0.0, %v1996
      %v1998 = vpop.f32.mrf.mxu0
      %v1999 = vpop.f32.mrf.mxu0
      %v2000 = vadd.f32 0.0, %v1999
      %v2001 = vpop.f32.mrf.mxu0
      %2002 = vmatprep.mubr.bf16.mxu0 0
      %2003 = vmatmul.mubr.bf16.gmra.mxu0 %v724
      %v2004 = vpop.f32.mrf.mxu0
      %v2005 = vadd.f32 0.0, %v2004
      %v2006 = vpop.f32.mrf.mxu0
      %v2007 = vpop.f32.mrf.mxu0
      %v2008 = vadd.f32 0.0, %v2007
      %v2009 = vpop.f32.mrf.mxu0
      %2010 = vdwg.mxu0
      %s2011 = scalar_lea.vmem %s4, 32
      %v2012 = vld [vmem:[%s2011] sm:$0xf]
      %v2013 = vld [vmem:[%s2011 + $0x4] sm:$0xf]
      %v2014 = vld [vmem:[%s2011 + $0x8] sm:$0xf]
      %v2015 = vld [vmem:[%s2011 + $0xc] sm:$0xf]
      %v2020 = vunpack.c.l.b16 %v2012
      %v2021 = vunpack.c.l.b16 %v2013
      %v2022 = vunpack.c.l.b16 %v2014
      %v2023 = vunpack.c.l.b16 %v2015
      %v2024 = vpack.c.b16 %v2021, %v2020
      %v2025 = vpack.c.b16 %v2023, %v2022
      %2028 = vmatprep.subr.bf16.mxu0 0
      %2029 = vmatpush1.bf16.msra.mxu0 0
      %2030 = vmatprep.subr.bf16.mxu0 0
      %2031 = vmatpush1.bf16.msra.mxu0 0
      %2032 = vmatprep.subr.bf16.mxu0 0
      %2033 = vmatpush1.bf16.msra.mxu0 0
      %2034 = vmatprep.subr.bf16.mxu0 0
      %2035 = vmatpush1.bf16.msra.mxu0 0
      %2036 = vmatprep.subr.bf16.mxu0 0
      %2037 = vmatpush1.bf16.msra.mxu0 0
      %2038 = vmatprep.subr.bf16.mxu0 0
      %2039 = vmatpush1.bf16.msra.mxu0 0
      %2040 = vmatprep.subr.bf16.mxu0 0
      %2041 = vmatpush1.bf16.msra.mxu0 %v2025
      %2042 = vmatprep.subr.bf16.mxu0 0
      %2043 = vmatpush1.bf16.msra.mxu0 %v2024
      %2044 = vmatprep.subr.bf16.mxu0 0
      %2045 = vmatpush2.bf16.msra.mxu0 0
      %2046 = vmatprep.subr.bf16.mxu0 0
      %2047 = vmatpush2.bf16.msra.mxu0 0
      %2048 = vmatprep.subr.bf16.mxu0 0
      %2049 = vmatpush2.bf16.msra.mxu0 0
      %2050 = vmatprep.subr.bf16.mxu0 0
      %2051 = vmatpush2.bf16.msra.mxu0 0
      %2052 = vmatprep.subr.bf16.mxu0 0
      %2053 = vmatpush2.bf16.msra.mxu0 0
      %2054 = vmatprep.subr.bf16.mxu0 0
      %2055 = vmatpush2.bf16.msra.mxu0 0
      %2056 = vmatprep.subr.bf16.mxu0 0
      %2057 = vmatpush2.bf16.msra.mxu0 0
      %2058 = vmatprep.subr.bf16.mxu0 0
      %2059 = vmatpush2.bf16.msra.mxu0 0
      %2060 = vmatprep.mubr.bf16.mxu0 0
      %2061 = vmatmul.mubr.bf16.gmra.mxu0 %v715
      %v2062 = vpop.f32.mrf.mxu0
      %v2063 = vadd.f32 0.0, %v2062
      %v2064 = vpop.f32.mrf.mxu0
      %v2065 = vpop.f32.mrf.mxu0
      %v2066 = vadd.f32 0.0, %v2065
      %v2067 = vpop.f32.mrf.mxu0
      %2068 = vmatprep.mubr.bf16.mxu0 0
      %2069 = vmatmul.mubr.bf16.gmra.mxu0 %v718
      %v2070 = vpop.f32.mrf.mxu0
      %v2071 = vadd.f32 0.0, %v2070
      %v2072 = vpop.f32.mrf.mxu0
      %v2073 = vpop.f32.mrf.mxu0
      %v2074 = vadd.f32 0.0, %v2073
      %v2075 = vpop.f32.mrf.mxu0
      %2076 = vmatprep.mubr.bf16.mxu0 0
      %2077 = vmatmul.mubr.bf16.gmra.mxu0 %v721
      %v2078 = vpop.f32.mrf.mxu0
      %v2079 = vadd.f32 0.0, %v2078
      %v2080 = vpop.f32.mrf.mxu0
      %v2081 = vpop.f32.mrf.mxu0
      %v2082 = vadd.f32 0.0, %v2081
      %v2083 = vpop.f32.mrf.mxu0
      %2084 = vmatprep.mubr.bf16.mxu0 0
      %2085 = vmatmul.mubr.bf16.gmra.mxu0 %v724
      %v2086 = vpop.f32.mrf.mxu0
      %v2087 = vadd.f32 0.0, %v2086
      %v2088 = vpop.f32.mrf.mxu0
      %v2089 = vpop.f32.mrf.mxu0
      %v2090 = vadd.f32 0.0, %v2089
      %v2091 = vpop.f32.mrf.mxu0
      %2092 = vdwg.mxu0
      %s2093 = scalar_lea.vmem %s5, 32
      %v2094 = vld [vmem:[%s2093] sm:$0xf]
      %v2095 = vld [vmem:[%s2093 + $0x4] sm:$0xf]
      %v2096 = vld [vmem:[%s2093 + $0x8] sm:$0xf]
      %v2097 = vld [vmem:[%s2093 + $0xc] sm:$0xf]
      %v2102 = vunpack.c.l.b16 %v2094
      %v2103 = vunpack.c.l.b16 %v2095
      %v2104 = vunpack.c.l.b16 %v2096
      %v2105 = vunpack.c.l.b16 %v2097
      %v2106 = vpack.c.b16 %v2103, %v2102
      %v2107 = vpack.c.b16 %v2105, %v2104
      %2110 = vmatprep.subr.bf16.mxu0 0
      %2111 = vmatpush1.bf16.msra.mxu0 0
      %2112 = vmatprep.subr.bf16.mxu0 0
      %2113 = vmatpush1.bf16.msra.mxu0 0
      %2114 = vmatprep.subr.bf16.mxu0 0
      %2115 = vmatpush1.bf16.msra.mxu0 0
      %2116 = vmatprep.subr.bf16.mxu0 0
      %2117 = vmatpush1.bf16.msra.mxu0 0
      %2118 = vmatprep.subr.bf16.mxu0 0
      %2119 = vmatpush1.bf16.msra.mxu0 0
      %2120 = vmatprep.subr.bf16.mxu0 0
      %2121 = vmatpush1.bf16.msra.mxu0 0
      %2122 = vmatprep.subr.bf16.mxu0 0
      %2123 = vmatpush1.bf16.msra.mxu0 %v2107
      %2124 = vmatprep.subr.bf16.mxu0 0
      %2125 = vmatpush1.bf16.msra.mxu0 %v2106
      %2126 = vmatprep.subr.bf16.mxu0 0
      %2127 = vmatpush2.bf16.msra.mxu0 0
      %2128 = vmatprep.subr.bf16.mxu0 0
      %2129 = vmatpush2.bf16.msra.mxu0 0
      %2130 = vmatprep.subr.bf16.mxu0 0
      %2131 = vmatpush2.bf16.msra.mxu0 0
      %2132 = vmatprep.subr.bf16.mxu0 0
      %2133 = vmatpush2.bf16.msra.mxu0 0
      %2134 = vmatprep.subr.bf16.mxu0 0
      %2135 = vmatpush2.bf16.msra.mxu0 0
      %2136 = vmatprep.subr.bf16.mxu0 0
      %2137 = vmatpush2.bf16.msra.mxu0 0
      %2138 = vmatprep.subr.bf16.mxu0 0
      %2139 = vmatpush2.bf16.msra.mxu0 0
      %2140 = vmatprep.subr.bf16.mxu0 0
      %2141 = vmatpush2.bf16.msra.mxu0 0
      %2142 = vmatprep.mubr.bf16.mxu0 0
      %2143 = vmatmul.mubr.bf16.gmra.mxu0 %v715
      %v2144 = vpop.f32.mrf.mxu0
      %v2145 = vadd.f32 0.0, %v2144
      %v2146 = vpop.f32.mrf.mxu0
      %v2147 = vpop.f32.mrf.mxu0
      %v2148 = vadd.f32 0.0, %v2147
      %v2149 = vpop.f32.mrf.mxu0
      %2150 = vmatprep.mubr.bf16.mxu0 0
      %2151 = vmatmul.mubr.bf16.gmra.mxu0 %v718
      %v2152 = vpop.f32.mrf.mxu0
      %v2153 = vadd.f32 0.0, %v2152
      %v2154 = vpop.f32.mrf.mxu0
      %v2155 = vpop.f32.mrf.mxu0
      %v2156 = vadd.f32 0.0, %v2155
      %v2157 = vpop.f32.mrf.mxu0
      %2158 = vmatprep.mubr.bf16.mxu0 0
      %2159 = vmatmul.mubr.bf16.gmra.mxu0 %v721
      %v2160 = vpop.f32.mrf.mxu0
      %v2161 = vadd.f32 0.0, %v2160
      %v2162 = vpop.f32.mrf.mxu0
      %v2163 = vpop.f32.mrf.mxu0
      %v2164 = vadd.f32 0.0, %v2163
      %v2165 = vpop.f32.mrf.mxu0
      %2166 = vmatprep.mubr.bf16.mxu0 0
      %2167 = vmatmul.mubr.bf16.gmra.mxu0 %v724
      %v2168 = vpop.f32.mrf.mxu0
      %v2169 = vadd.f32 0.0, %v2168
      %v2170 = vpop.f32.mrf.mxu0
      %v2171 = vpop.f32.mrf.mxu0
      %v2172 = vadd.f32 0.0, %v2171
      %v2173 = vpop.f32.mrf.mxu0
      %2174 = vdwg.mxu0
      %v2175 = vmul.f32 %v1981, 0.35355338
      %v2176 = vmul.f32 %v1984, 0.35355338
      %v2177 = vmul.f32 %v1989, 0.35355338
      %v2178 = vmul.f32 %v1992, 0.35355338
      %v2179 = vmul.f32 %v1997, 0.35355338
      %v2180 = vmul.f32 %v2000, 0.35355338
      %v2181 = vmul.f32 %v2005, 0.35355338
      %v2182 = vmul.f32 %v2008, 0.35355338
      %v2183 = vpack.c.bf16 %v2176, %v2175
      %v2184 = vpack.c.bf16 %v2178, %v2177
      %v2185 = vpack.c.bf16 %v2180, %v2179
      %v2186 = vpack.c.bf16 %v2182, %v2181
      %v2187 = vpack.c.bf16 %v2066, %v2063
      %v2188 = vpack.c.bf16 %v2074, %v2071
      %v2189 = vpack.c.bf16 %v2082, %v2079
      %v2190 = vpack.c.bf16 %v2090, %v2087
      %v2192 = vsel %vm969, %v2183, 0
      %v2195 = vsel %vm969, %v2184, 0
      %v2198 = vsel %vm969, %v2185, 0
      %v2201 = vsel %vm969, %v2186, 0
      %v2204 = vsel %vm969, %v2187, 0
      %v2207 = vsel %vm969, %v2188, 0
      %v2210 = vsel %vm969, %v2189, 0
      %v2213 = vsel %vm969, %v2190, 0
      %2215 = vmatprep.subr.bf16.mxu0 0
      %2216 = vmatpush1.bf16.xpose.msra.mxu0 0
      %2217 = vmatprep.subr.bf16.mxu0 0
      %2218 = vmatpush1.bf16.xpose.msra.mxu0 0
      %2219 = vmatprep.subr.bf16.mxu0 0
      %2220 = vmatpush1.bf16.xpose.msra.mxu0 0
      %2221 = vmatprep.subr.bf16.mxu0 0
      %2222 = vmatpush1.bf16.xpose.msra.mxu0 0
      %2223 = vmatprep.subr.bf16.mxu0 0
      %2224 = vmatpush1.bf16.xpose.msra.mxu0 %v2213
      %2225 = vmatprep.subr.bf16.mxu0 0
      %2226 = vmatpush1.bf16.xpose.msra.mxu0 %v2210
      %2227 = vmatprep.subr.bf16.mxu0 0
      %2228 = vmatpush1.bf16.xpose.msra.mxu0 %v2207
      %2229 = vmatprep.subr.bf16.mxu0 0
      %2230 = vmatpush1.bf16.xpose.msra.mxu0 %v2204
      %2231 = vmatprep.subr.bf16.mxu0 0
      %2232 = vmatpush2.bf16.xpose.msra.mxu0 0
      %2233 = vmatprep.subr.bf16.mxu0 0
      %2234 = vmatpush2.bf16.xpose.msra.mxu0 0
      %2235 = vmatprep.subr.bf16.mxu0 0
      %2236 = vmatpush2.bf16.xpose.msra.mxu0 0
      %2237 = vmatprep.subr.bf16.mxu0 0
      %2238 = vmatpush2.bf16.xpose.msra.mxu0 0
      %2239 = vmatprep.subr.bf16.mxu0 0
      %2240 = vmatpush2.bf16.xpose.msra.mxu0 0
      %2241 = vmatprep.subr.bf16.mxu0 0
      %2242 = vmatpush2.bf16.xpose.msra.mxu0 0
      %2243 = vmatprep.subr.bf16.mxu0 0
      %2244 = vmatpush2.bf16.xpose.msra.mxu0 0
      %2245 = vmatprep.subr.bf16.mxu0 0
      %2246 = vmatpush2.bf16.xpose.msra.mxu0 0
      %2247 = vmatprep.mubr.bf16.mxu0 0
      %2248 = vmatmul.mubr.bf16.gmra.mxu0 %v2192
      %v2249 = vpop.f32.mrf.mxu0
      %v2250 = vadd.f32 0.0, %v2249
      %v2251 = vpop.f32.mrf.mxu0
      %v2252 = vpop.f32.mrf.mxu0
      %v2253 = vadd.f32 0.0, %v2252
      %v2254 = vpop.f32.mrf.mxu0
      %2255 = vmatprep.mubr.bf16.mxu0 0
      %2256 = vmatmul.mubr.bf16.gmra.mxu0 %v2195
      %v2257 = vpop.f32.mrf.mxu0
      %v2258 = vadd.f32 0.0, %v2257
      %v2259 = vpop.f32.mrf.mxu0
      %v2260 = vpop.f32.mrf.mxu0
      %v2261 = vadd.f32 0.0, %v2260
      %v2262 = vpop.f32.mrf.mxu0
      %2263 = vmatprep.mubr.bf16.mxu0 0
      %2264 = vmatmul.mubr.bf16.gmra.mxu0 %v2198
      %v2265 = vpop.f32.mrf.mxu0
      %v2266 = vadd.f32 0.0, %v2265
      %v2267 = vpop.f32.mrf.mxu0
      %v2268 = vpop.f32.mrf.mxu0
      %v2269 = vadd.f32 0.0, %v2268
      %v2270 = vpop.f32.mrf.mxu0
      %2271 = vmatprep.mubr.bf16.mxu0 0
      %2272 = vmatmul.mubr.bf16.gmra.mxu0 %v2201
      %v2273 = vpop.f32.mrf.mxu0
      %v2274 = vadd.f32 0.0, %v2273
      %v2275 = vpop.f32.mrf.mxu0
      %v2276 = vpop.f32.mrf.mxu0
      %v2277 = vadd.f32 0.0, %v2276
      %v2278 = vpop.f32.mrf.mxu0
      %2279 = vdwg.mxu0
      %v2280 = vsel %vm1059, %v2250, -inf
      %2281 = vmax.xlane.f32.xlu0 %v2280
      %v2282 = vpop.xlane.xlu0 %2281
      %v2283 = vsel %vm1059, %v2253, -inf
      %2284 = vmax.xlane.f32.xlu0 %v2283
      %v2285 = vpop.xlane.xlu0 %2284
      %v2286 = vsel %vm1059, %v2258, -inf
      %2287 = vmax.xlane.f32.xlu0 %v2286
      %v2288 = vpop.xlane.xlu0 %2287
      %v2289 = vsel %vm1059, %v2261, -inf
      %2290 = vmax.xlane.f32.xlu0 %v2289
      %v2291 = vpop.xlane.xlu0 %2290
      %v2292 = vsel %vm1059, %v2266, -inf
      %2293 = vmax.xlane.f32.xlu0 %v2292
      %v2294 = vpop.xlane.xlu0 %2293
      %v2295 = vsel %vm1059, %v2269, -inf
      %2296 = vmax.xlane.f32.xlu0 %v2295
      %v2297 = vpop.xlane.xlu0 %2296
      %v2298 = vsel %vm1059, %v2274, -inf
      %2299 = vmax.xlane.f32.xlu0 %v2298
      %v2300 = vpop.xlane.xlu0 %2299
      %v2301 = vsel %vm1059, %v2277, -inf
      %2302 = vmax.xlane.f32.xlu0 %v2301
      %v2303 = vpop.xlane.xlu0 %2302
      %v2304 = vsub.f32 %v2250, %v2282
      %v2305 = vsub.f32 %v2253, %v2285
      %v2306 = vsub.f32 %v2258, %v2288
      %v2307 = vsub.f32 %v2261, %v2291
      %v2308 = vsub.f32 %v2266, %v2294
      %v2309 = vsub.f32 %v2269, %v2297
      %v2310 = vsub.f32 %v2274, %v2300
      %v2311 = vsub.f32 %v2277, %v2303
      %v2312 = vmul.f32 %v2304, 1.442695
      %v2313 = vpow.pop %v2312
      %v2314 = vmul.f32 %v2305, 1.442695
      %v2315 = vpow.pop %v2314
      %v2316 = vmul.f32 %v2306, 1.442695
      %v2317 = vpow.pop %v2316
      %v2318 = vmul.f32 %v2307, 1.442695
      %v2319 = vpow.pop %v2318
      %v2320 = vmul.f32 %v2308, 1.442695
      %v2321 = vpow.pop %v2320
      %v2322 = vmul.f32 %v2309, 1.442695
      %v2323 = vpow.pop %v2322
      %v2324 = vmul.f32 %v2310, 1.442695
      %v2325 = vpow.pop %v2324
      %v2326 = vmul.f32 %v2311, 1.442695
      %v2327 = vpow.pop %v2326
      %v2328 = vsel %vm1059, %v2313, 0.0
      %2329 = vadd.xlane.f32.xlu0 %v2328
      %v2330 = vpop.xlane.xlu0 %2329
      %v2331 = vsel %vm1059, %v2315, 0.0
      %2332 = vadd.xlane.f32.xlu0 %v2331
      %v2333 = vpop.xlane.xlu0 %2332
      %v2334 = vsel %vm1059, %v2317, 0.0
      %2335 = vadd.xlane.f32.xlu0 %v2334
      %v2336 = vpop.xlane.xlu0 %2335
      %v2337 = vsel %vm1059, %v2319, 0.0
      %2338 = vadd.xlane.f32.xlu0 %v2337
      %v2339 = vpop.xlane.xlu0 %2338
      %v2340 = vsel %vm1059, %v2321, 0.0
      %2341 = vadd.xlane.f32.xlu0 %v2340
      %v2342 = vpop.xlane.xlu0 %2341
      %v2343 = vsel %vm1059, %v2323, 0.0
      %2344 = vadd.xlane.f32.xlu0 %v2343
      %v2345 = vpop.xlane.xlu0 %2344
      %v2346 = vsel %vm1059, %v2325, 0.0
      %2347 = vadd.xlane.f32.xlu0 %v2346
      %v2348 = vpop.xlane.xlu0 %2347
      %v2349 = vsel %vm1059, %v2327, 0.0
      %2350 = vadd.xlane.f32.xlu0 %v2349
      %v2351 = vpop.xlane.xlu0 %2350
      %v2352 = vrcp.pop %v2330
      %v2353 = vrcp.pop %v2333
      %v2354 = vrcp.pop %v2336
      %v2355 = vrcp.pop %v2339
      %v2356 = vrcp.pop %v2342
      %v2357 = vrcp.pop %v2345
      %v2358 = vrcp.pop %v2348
      %v2359 = vrcp.pop %v2351
      %v2360 = vmul.f32 %v2313, %v2352
      %v2361 = vmul.f32 %v2315, %v2353
      %v2362 = vmul.f32 %v2317, %v2354
      %v2363 = vmul.f32 %v2319, %v2355
      %v2364 = vmul.f32 %v2321, %v2356
      %v2365 = vmul.f32 %v2323, %v2357
      %v2366 = vmul.f32 %v2325, %v2358
      %v2367 = vmul.f32 %v2327, %v2359
      %v2368 = vpack.c.bf16 %v2361, %v2360
      %v2369 = vpack.c.bf16 %v2363, %v2362
      %v2370 = vpack.c.bf16 %v2365, %v2364
      %v2371 = vpack.c.bf16 %v2367, %v2366
      %v2372 = vpack.c.bf16 %v2148, %v2145
      %v2373 = vpack.c.bf16 %v2156, %v2153
      %v2374 = vpack.c.bf16 %v2164, %v2161
      %v2375 = vpack.c.bf16 %v2172, %v2169
      %v2377 = vsel %vm1059, %v2368, 0
      %v2380 = vsel %vm1059, %v2369, 0
      %v2383 = vsel %vm1059, %v2370, 0
      %v2386 = vsel %vm1059, %v2371, 0
      %2388 = vmatprep.subr.bf16.mxu0 0
      %2389 = vmatpush1.bf16.msra.mxu0 0
      %2390 = vmatprep.subr.bf16.mxu0 0
      %2391 = vmatpush1.bf16.msra.mxu0 0
      %2392 = vmatprep.subr.bf16.mxu0 0
      %2393 = vmatpush1.bf16.msra.mxu0 0
      %2394 = vmatprep.subr.bf16.mxu0 0
      %2395 = vmatpush1.bf16.msra.mxu0 0
      %2396 = vmatprep.subr.bf16.mxu0 0
      %2397 = vmatpush1.bf16.msra.mxu0 %v2375
      %2398 = vmatprep.subr.bf16.mxu0 0
      %2399 = vmatpush1.bf16.msra.mxu0 %v2374
      %2400 = vmatprep.subr.bf16.mxu0 0
      %2401 = vmatpush1.bf16.msra.mxu0 %v2373
      %2402 = vmatprep.subr.bf16.mxu0 0
      %2403 = vmatpush1.bf16.msra.mxu0 %v2372
      %2404 = vmatprep.subr.bf16.mxu0 0
      %2405 = vmatpush2.bf16.msra.mxu0 0
      %2406 = vmatprep.subr.bf16.mxu0 0
      %2407 = vmatpush2.bf16.msra.mxu0 0
      %2408 = vmatprep.subr.bf16.mxu0 0
      %2409 = vmatpush2.bf16.msra.mxu0 0
      %2410 = vmatprep.subr.bf16.mxu0 0
      %2411 = vmatpush2.bf16.msra.mxu0 0
      %2412 = vmatprep.subr.bf16.mxu0 0
      %2413 = vmatpush2.bf16.msra.mxu0 0
      %2414 = vmatprep.subr.bf16.mxu0 0
      %2415 = vmatpush2.bf16.msra.mxu0 0
      %2416 = vmatprep.subr.bf16.mxu0 0
      %2417 = vmatpush2.bf16.msra.mxu0 0
      %2418 = vmatprep.subr.bf16.mxu0 0
      %2419 = vmatpush2.bf16.msra.mxu0 0
      %2420 = vmatprep.mubr.bf16.mxu0 0
      %2421 = vmatmul.mubr.bf16.gmra.mxu0 %v2377
      %v2422 = vpop.f32.mrf.mxu0
      %v2423 = vadd.f32 0.0, %v2422
      %v2424 = vpop.f32.mrf.mxu0
      %v2425 = vpop.f32.mrf.mxu0
      %v2426 = vadd.f32 0.0, %v2425
      %v2427 = vpop.f32.mrf.mxu0
      %2428 = vmatprep.mubr.bf16.mxu0 0
      %2429 = vmatmul.mubr.bf16.gmra.mxu0 %v2380
      %v2430 = vpop.f32.mrf.mxu0
      %v2431 = vadd.f32 0.0, %v2430
      %v2432 = vpop.f32.mrf.mxu0
      %v2433 = vpop.f32.mrf.mxu0
      %v2434 = vadd.f32 0.0, %v2433
      %v2435 = vpop.f32.mrf.mxu0
      %2436 = vmatprep.mubr.bf16.mxu0 0
      %2437 = vmatmul.mubr.bf16.gmra.mxu0 %v2383
      %v2438 = vpop.f32.mrf.mxu0
      %v2439 = vadd.f32 0.0, %v2438
      %v2440 = vpop.f32.mrf.mxu0
      %v2441 = vpop.f32.mrf.mxu0
      %v2442 = vadd.f32 0.0, %v2441
      %v2443 = vpop.f32.mrf.mxu0
      %2444 = vmatprep.mubr.bf16.mxu0 0
      %2445 = vmatmul.mubr.bf16.gmra.mxu0 %v2386
      %v2446 = vpop.f32.mrf.mxu0
      %v2447 = vadd.f32 0.0, %v2446
      %v2448 = vpop.f32.mrf.mxu0
      %v2449 = vpop.f32.mrf.mxu0
      %v2450 = vadd.f32 0.0, %v2449
      %v2451 = vpop.f32.mrf.mxu0
      %2452 = vdwg.mxu0
      %v2453 = vpack.c.bf16 %v2426, %v2423
      %v2454 = vpack.c.bf16 %v2434, %v2431
      %v2455 = vpack.c.bf16 %v2442, %v2439
      %v2456 = vpack.c.bf16 %v2450, %v2447
      %s2457 = scalar_lea.vmem %s6, 8
      %v2458 = vld [vmem:[%s2457] sm:$0xf]
      %v2460 = vsel %vm969, %v2453, 0
      %v2463 = vsel %vm969, %v2454, 0
      %v2466 = vsel %vm969, %v2455, 0
      %v2469 = vsel %vm969, %v2456, 0
      %v2472 = vsel %vm1780, %v2458, 0
      %2474 = vmatprep.subr.bf16.mxu0 0
      %2475 = vmatpush1.bf16.msra.mxu0 0
      %2476 = vmatprep.subr.bf16.mxu0 0
      %2477 = vmatpush1.bf16.msra.mxu0 0
      %2478 = vmatprep.subr.bf16.mxu0 0
      %2479 = vmatpush1.bf16.msra.mxu0 0
      %2480 = vmatprep.subr.bf16.mxu0 0
      %2481 = vmatpush1.bf16.msra.mxu0 0
      %2482 = vmatprep.subr.bf16.mxu0 0
      %2483 = vmatpush1.bf16.msra.mxu0 0
      %2484 = vmatprep.subr.bf16.mxu0 0
      %2485 = vmatpush1.bf16.msra.mxu0 0
      %2486 = vmatprep.subr.bf16.mxu0 0
      %2487 = vmatpush1.bf16.msra.mxu0 0
      %2488 = vmatprep.subr.bf16.mxu0 0
      %2489 = vmatpush1.bf16.msra.mxu0 %v2472
      %2490 = vmatprep.subr.bf16.mxu0 0
      %2491 = vmatpush2.bf16.msra.mxu0 0
      %2492 = vmatprep.subr.bf16.mxu0 0
      %2493 = vmatpush2.bf16.msra.mxu0 0
      %2494 = vmatprep.subr.bf16.mxu0 0
      %2495 = vmatpush2.bf16.msra.mxu0 0
      %2496 = vmatprep.subr.bf16.mxu0 0
      %2497 = vmatpush2.bf16.msra.mxu0 0
      %2498 = vmatprep.subr.bf16.mxu0 0
      %2499 = vmatpush2.bf16.msra.mxu0 0
      %2500 = vmatprep.subr.bf16.mxu0 0
      %2501 = vmatpush2.bf16.msra.mxu0 0
      %2502 = vmatprep.subr.bf16.mxu0 0
      %2503 = vmatpush2.bf16.msra.mxu0 0
      %2504 = vmatprep.subr.bf16.mxu0 0
      %2505 = vmatpush2.bf16.msra.mxu0 0
      %2506 = vmatprep.mubr.bf16.mxu0 0
      %2507 = vmatmul.mubr.bf16.gmra.mxu0 %v2460
      %v2508 = vpop.f32.mrf.mxu0
      %v2509 = vadd.f32 0.0, %v2508
      %v2510 = vpop.f32.mrf.mxu0
      %v2511 = vpop.f32.mrf.mxu0
      %v2512 = vadd.f32 0.0, %v2511
      %v2513 = vpop.f32.mrf.mxu0
      %2514 = vmatprep.mubr.bf16.mxu0 0
      %2515 = vmatmul.mubr.bf16.gmra.mxu0 %v2463
      %v2516 = vpop.f32.mrf.mxu0
      %v2517 = vadd.f32 0.0, %v2516
      %v2518 = vpop.f32.mrf.mxu0
      %v2519 = vpop.f32.mrf.mxu0
      %v2520 = vadd.f32 0.0, %v2519
      %v2521 = vpop.f32.mrf.mxu0
      %2522 = vmatprep.mubr.bf16.mxu0 0
      %2523 = vmatmul.mubr.bf16.gmra.mxu0 %v2466
      %v2524 = vpop.f32.mrf.mxu0
      %v2525 = vadd.f32 0.0, %v2524
      %v2526 = vpop.f32.mrf.mxu0
      %v2527 = vpop.f32.mrf.mxu0
      %v2528 = vadd.f32 0.0, %v2527
      %v2529 = vpop.f32.mrf.mxu0
      %2530 = vmatprep.mubr.bf16.mxu0 0
      %2531 = vmatmul.mubr.bf16.gmra.mxu0 %v2469
      %v2532 = vpop.f32.mrf.mxu0
      %v2533 = vadd.f32 0.0, %v2532
      %v2534 = vpop.f32.mrf.mxu0
      %v2535 = vpop.f32.mrf.mxu0
      %v2536 = vadd.f32 0.0, %v2535
      %v2537 = vpop.f32.mrf.mxu0
      %2538 = vdwg.mxu0
      %v2539 = vadd.f32 %v1899, %v2509
      %v2540 = vadd.f32 %v1902, %v2512
      %v2541 = vadd.f32 %v1907, %v2517
      %v2542 = vadd.f32 %v1910, %v2520
      %v2543 = vadd.f32 %v1915, %v2525
      %v2544 = vadd.f32 %v1918, %v2528
      %v2545 = vadd.f32 %v1923, %v2533
      %v2546 = vadd.f32 %v1926, %v2536
      %s2547 = scalar_lea.vmem %s3, 48
      %v2548 = vld [vmem:[%s2547] sm:$0xf]
      %v2549 = vld [vmem:[%s2547 + $0x4] sm:$0xf]
      %v2550 = vld [vmem:[%s2547 + $0x8] sm:$0xf]
      %v2551 = vld [vmem:[%s2547 + $0xc] sm:$0xf]
      %v2556 = vunpack.c.l.b16 %v2548
      %v2557 = vunpack.c.l.b16 %v2549
      %v2558 = vunpack.c.l.b16 %v2550
      %v2559 = vunpack.c.l.b16 %v2551
      %v2560 = vpack.c.b16 %v2557, %v2556
      %v2561 = vpack.c.b16 %v2559, %v2558
      %2564 = vmatprep.subr.bf16.mxu0 0
      %2565 = vmatpush1.bf16.msra.mxu0 0
      %2566 = vmatprep.subr.bf16.mxu0 0
      %2567 = vmatpush1.bf16.msra.mxu0 0
      %2568 = vmatprep.subr.bf16.mxu0 0
      %2569 = vmatpush1.bf16.msra.mxu0 0
      %2570 = vmatprep.subr.bf16.mxu0 0
      %2571 = vmatpush1.bf16.msra.mxu0 0
      %2572 = vmatprep.subr.bf16.mxu0 0
      %2573 = vmatpush1.bf16.msra.mxu0 0
      %2574 = vmatprep.subr.bf16.mxu0 0
      %2575 = vmatpush1.bf16.msra.mxu0 0
      %2576 = vmatprep.subr.bf16.mxu0 0
      %2577 = vmatpush1.bf16.msra.mxu0 %v2561
      %2578 = vmatprep.subr.bf16.mxu0 0
      %2579 = vmatpush1.bf16.msra.mxu0 %v2560
      %2580 = vmatprep.subr.bf16.mxu0 0
      %2581 = vmatpush2.bf16.msra.mxu0 0
      %2582 = vmatprep.subr.bf16.mxu0 0
      %2583 = vmatpush2.bf16.msra.mxu0 0
      %2584 = vmatprep.subr.bf16.mxu0 0
      %2585 = vmatpush2.bf16.msra.mxu0 0
      %2586 = vmatprep.subr.bf16.mxu0 0
      %2587 = vmatpush2.bf16.msra.mxu0 0
      %2588 = vmatprep.subr.bf16.mxu0 0
      %2589 = vmatpush2.bf16.msra.mxu0 0
      %2590 = vmatprep.subr.bf16.mxu0 0
      %2591 = vmatpush2.bf16.msra.mxu0 0
      %2592 = vmatprep.subr.bf16.mxu0 0
      %2593 = vmatpush2.bf16.msra.mxu0 0
      %2594 = vmatprep.subr.bf16.mxu0 0
      %2595 = vmatpush2.bf16.msra.mxu0 0
      %2596 = vmatprep.mubr.bf16.mxu0 0
      %2597 = vmatmul.mubr.bf16.gmra.mxu0 %v715
      %v2598 = vpop.f32.mrf.mxu0
      %v2599 = vadd.f32 0.0, %v2598
      %v2600 = vpop.f32.mrf.mxu0
      %v2601 = vpop.f32.mrf.mxu0
      %v2602 = vadd.f32 0.0, %v2601
      %v2603 = vpop.f32.mrf.mxu0
      %2604 = vmatprep.mubr.bf16.mxu0 0
      %2605 = vmatmul.mubr.bf16.gmra.mxu0 %v718
      %v2606 = vpop.f32.mrf.mxu0
      %v2607 = vadd.f32 0.0, %v2606
      %v2608 = vpop.f32.mrf.mxu0
      %v2609 = vpop.f32.mrf.mxu0
      %v2610 = vadd.f32 0.0, %v2609
      %v2611 = vpop.f32.mrf.mxu0
      %2612 = vmatprep.mubr.bf16.mxu0 0
      %2613 = vmatmul.mubr.bf16.gmra.mxu0 %v721
      %v2614 = vpop.f32.mrf.mxu0
      %v2615 = vadd.f32 0.0, %v2614
      %v2616 = vpop.f32.mrf.mxu0
      %v2617 = vpop.f32.mrf.mxu0
      %v2618 = vadd.f32 0.0, %v2617
      %v2619 = vpop.f32.mrf.mxu0
      %2620 = vmatprep.mubr.bf16.mxu0 0
      %2621 = vmatmul.mubr.bf16.gmra.mxu0 %v724
      %v2622 = vpop.f32.mrf.mxu0
      %v2623 = vadd.f32 0.0, %v2622
      %v2624 = vpop.f32.mrf.mxu0
      %v2625 = vpop.f32.mrf.mxu0
      %v2626 = vadd.f32 0.0, %v2625
      %v2627 = vpop.f32.mrf.mxu0
      %2628 = vdwg.mxu0
      %s2629 = scalar_lea.vmem %s4, 48
      %v2630 = vld [vmem:[%s2629] sm:$0xf]
      %v2631 = vld [vmem:[%s2629 + $0x4] sm:$0xf]
      %v2632 = vld [vmem:[%s2629 + $0x8] sm:$0xf]
      %v2633 = vld [vmem:[%s2629 + $0xc] sm:$0xf]
      %v2638 = vunpack.c.l.b16 %v2630
      %v2639 = vunpack.c.l.b16 %v2631
      %v2640 = vunpack.c.l.b16 %v2632
      %v2641 = vunpack.c.l.b16 %v2633
      %v2642 = vpack.c.b16 %v2639, %v2638
      %v2643 = vpack.c.b16 %v2641, %v2640
      %2646 = vmatprep.subr.bf16.mxu0 0
      %2647 = vmatpush1.bf16.msra.mxu0 0
      %2648 = vmatprep.subr.bf16.mxu0 0
      %2649 = vmatpush1.bf16.msra.mxu0 0
      %2650 = vmatprep.subr.bf16.mxu0 0
      %2651 = vmatpush1.bf16.msra.mxu0 0
      %2652 = vmatprep.subr.bf16.mxu0 0
      %2653 = vmatpush1.bf16.msra.mxu0 0
      %2654 = vmatprep.subr.bf16.mxu0 0
      %2655 = vmatpush1.bf16.msra.mxu0 0
      %2656 = vmatprep.subr.bf16.mxu0 0
      %2657 = vmatpush1.bf16.msra.mxu0 0
      %2658 = vmatprep.subr.bf16.mxu0 0
      %2659 = vmatpush1.bf16.msra.mxu0 %v2643
      %2660 = vmatprep.subr.bf16.mxu0 0
      %2661 = vmatpush1.bf16.msra.mxu0 %v2642
      %2662 = vmatprep.subr.bf16.mxu0 0
      %2663 = vmatpush2.bf16.msra.mxu0 0
      %2664 = vmatprep.subr.bf16.mxu0 0
      %2665 = vmatpush2.bf16.msra.mxu0 0
      %2666 = vmatprep.subr.bf16.mxu0 0
      %2667 = vmatpush2.bf16.msra.mxu0 0
      %2668 = vmatprep.subr.bf16.mxu0 0
      %2669 = vmatpush2.bf16.msra.mxu0 0
      %2670 = vmatprep.subr.bf16.mxu0 0
      %2671 = vmatpush2.bf16.msra.mxu0 0
      %2672 = vmatprep.subr.bf16.mxu0 0
      %2673 = vmatpush2.bf16.msra.mxu0 0
      %2674 = vmatprep.subr.bf16.mxu0 0
      %2675 = vmatpush2.bf16.msra.mxu0 0
      %2676 = vmatprep.subr.bf16.mxu0 0
      %2677 = vmatpush2.bf16.msra.mxu0 0
      %2678 = vmatprep.mubr.bf16.mxu0 0
      %2679 = vmatmul.mubr.bf16.gmra.mxu0 %v715
      %v2680 = vpop.f32.mrf.mxu0
      %v2681 = vadd.f32 0.0, %v2680
      %v2682 = vpop.f32.mrf.mxu0
      %v2683 = vpop.f32.mrf.mxu0
      %v2684 = vadd.f32 0.0, %v2683
      %v2685 = vpop.f32.mrf.mxu0
      %2686 = vmatprep.mubr.bf16.mxu0 0
      %2687 = vmatmul.mubr.bf16.gmra.mxu0 %v718
      %v2688 = vpop.f32.mrf.mxu0
      %v2689 = vadd.f32 0.0, %v2688
      %v2690 = vpop.f32.mrf.mxu0
      %v2691 = vpop.f32.mrf.mxu0
      %v2692 = vadd.f32 0.0, %v2691
      %v2693 = vpop.f32.mrf.mxu0
      %2694 = vmatprep.mubr.bf16.mxu0 0
      %2695 = vmatmul.mubr.bf16.gmra.mxu0 %v721
      %v2696 = vpop.f32.mrf.mxu0
      %v2697 = vadd.f32 0.0, %v2696
      %v2698 = vpop.f32.mrf.mxu0
      %v2699 = vpop.f32.mrf.mxu0
      %v2700 = vadd.f32 0.0, %v2699
      %v2701 = vpop.f32.mrf.mxu0
      %2702 = vmatprep.mubr.bf16.mxu0 0
      %2703 = vmatmul.mubr.bf16.gmra.mxu0 %v724
      %v2704 = vpop.f32.mrf.mxu0
      %v2705 = vadd.f32 0.0, %v2704
      %v2706 = vpop.f32.mrf.mxu0
      %v2707 = vpop.f32.mrf.mxu0
      %v2708 = vadd.f32 0.0, %v2707
      %v2709 = vpop.f32.mrf.mxu0
      %2710 = vdwg.mxu0
      %s2711 = scalar_lea.vmem %s5, 48
      %v2712 = vld [vmem:[%s2711] sm:$0xf]
      %v2713 = vld [vmem:[%s2711 + $0x4] sm:$0xf]
      %v2714 = vld [vmem:[%s2711 + $0x8] sm:$0xf]
      %v2715 = vld [vmem:[%s2711 + $0xc] sm:$0xf]
      %v2720 = vunpack.c.l.b16 %v2712
      %v2721 = vunpack.c.l.b16 %v2713
      %v2722 = vunpack.c.l.b16 %v2714
      %v2723 = vunpack.c.l.b16 %v2715
      %v2724 = vpack.c.b16 %v2721, %v2720
      %v2725 = vpack.c.b16 %v2723, %v2722
      %2728 = vmatprep.subr.bf16.mxu0 0
      %2729 = vmatpush1.bf16.msra.mxu0 0
      %2730 = vmatprep.subr.bf16.mxu0 0
      %2731 = vmatpush1.bf16.msra.mxu0 0
      %2732 = vmatprep.subr.bf16.mxu0 0
      %2733 = vmatpush1.bf16.msra.mxu0 0
      %2734 = vmatprep.subr.bf16.mxu0 0
      %2735 = vmatpush1.bf16.msra.mxu0 0
      %2736 = vmatprep.subr.bf16.mxu0 0
      %2737 = vmatpush1.bf16.msra.mxu0 0
      %2738 = vmatprep.subr.bf16.mxu0 0
      %2739 = vmatpush1.bf16.msra.mxu0 0
      %2740 = vmatprep.subr.bf16.mxu0 0
      %2741 = vmatpush1.bf16.msra.mxu0 %v2725
      %2742 = vmatprep.subr.bf16.mxu0 0
      %2743 = vmatpush1.bf16.msra.mxu0 %v2724
      %2744 = vmatprep.subr.bf16.mxu0 0
      %2745 = vmatpush2.bf16.msra.mxu0 0
      %2746 = vmatprep.subr.bf16.mxu0 0
      %2747 = vmatpush2.bf16.msra.mxu0 0
      %2748 = vmatprep.subr.bf16.mxu0 0
      %2749 = vmatpush2.bf16.msra.mxu0 0
      %2750 = vmatprep.subr.bf16.mxu0 0
      %2751 = vmatpush2.bf16.msra.mxu0 0
      %2752 = vmatprep.subr.bf16.mxu0 0
      %2753 = vmatpush2.bf16.msra.mxu0 0
      %2754 = vmatprep.subr.bf16.mxu0 0
      %2755 = vmatpush2.bf16.msra.mxu0 0
      %2756 = vmatprep.subr.bf16.mxu0 0
      %2757 = vmatpush2.bf16.msra.mxu0 0
      %2758 = vmatprep.subr.bf16.mxu0 0
      %2759 = vmatpush2.bf16.msra.mxu0 0
      %2760 = vmatprep.mubr.bf16.mxu0 0
      %2761 = vmatmul.mubr.bf16.gmra.mxu0 %v715
      %v2762 = vpop.f32.mrf.mxu0
      %v2763 = vadd.f32 0.0, %v2762
      %v2764 = vpop.f32.mrf.mxu0
      %v2765 = vpop.f32.mrf.mxu0
      %v2766 = vadd.f32 0.0, %v2765
      %v2767 = vpop.f32.mrf.mxu0
      %2768 = vmatprep.mubr.bf16.mxu0 0
      %2769 = vmatmul.mubr.bf16.gmra.mxu0 %v718
      %v2770 = vpop.f32.mrf.mxu0
      %v2771 = vadd.f32 0.0, %v2770
      %v2772 = vpop.f32.mrf.mxu0
      %v2773 = vpop.f32.mrf.mxu0
      %v2774 = vadd.f32 0.0, %v2773
      %v2775 = vpop.f32.mrf.mxu0
      %2776 = vmatprep.mubr.bf16.mxu0 0
      %2777 = vmatmul.mubr.bf16.gmra.mxu0 %v721
      %v2778 = vpop.f32.mrf.mxu0
      %v2779 = vadd.f32 0.0, %v2778
      %v2780 = vpop.f32.mrf.mxu0
      %v2781 = vpop.f32.mrf.mxu0
      %v2782 = vadd.f32 0.0, %v2781
      %v2783 = vpop.f32.mrf.mxu0
      %2784 = vmatprep.mubr.bf16.mxu0 0
      %2785 = vmatmul.mubr.bf16.gmra.mxu0 %v724
      %v2786 = vpop.f32.mrf.mxu0
      %v2787 = vadd.f32 0.0, %v2786
      %v2788 = vpop.f32.mrf.mxu0
      %v2789 = vpop.f32.mrf.mxu0
      %v2790 = vadd.f32 0.0, %v2789
      %v2791 = vpop.f32.mrf.mxu0
      %2792 = vdwg.mxu0
      %v2793 = vmul.f32 %v2599, 0.35355338
      %v2794 = vmul.f32 %v2602, 0.35355338
      %v2795 = vmul.f32 %v2607, 0.35355338
      %v2796 = vmul.f32 %v2610, 0.35355338
      %v2797 = vmul.f32 %v2615, 0.35355338
      %v2798 = vmul.f32 %v2618, 0.35355338
      %v2799 = vmul.f32 %v2623, 0.35355338
      %v2800 = vmul.f32 %v2626, 0.35355338
      %v2801 = vpack.c.bf16 %v2794, %v2793
      %v2802 = vpack.c.bf16 %v2796, %v2795
      %v2803 = vpack.c.bf16 %v2798, %v2797
      %v2804 = vpack.c.bf16 %v2800, %v2799
      %v2805 = vpack.c.bf16 %v2684, %v2681
      %v2806 = vpack.c.bf16 %v2692, %v2689
      %v2807 = vpack.c.bf16 %v2700, %v2697
      %v2808 = vpack.c.bf16 %v2708, %v2705
      %v2810 = vsel %vm969, %v2801, 0
      %v2813 = vsel %vm969, %v2802, 0
      %v2816 = vsel %vm969, %v2803, 0
      %v2819 = vsel %vm969, %v2804, 0
      %v2822 = vsel %vm969, %v2805, 0
      %v2825 = vsel %vm969, %v2806, 0
      %v2828 = vsel %vm969, %v2807, 0
      %v2831 = vsel %vm969, %v2808, 0
      %2833 = vmatprep.subr.bf16.mxu0 0
      %2834 = vmatpush1.bf16.xpose.msra.mxu0 0
      %2835 = vmatprep.subr.bf16.mxu0 0
      %2836 = vmatpush1.bf16.xpose.msra.mxu0 0
      %2837 = vmatprep.subr.bf16.mxu0 0
      %2838 = vmatpush1.bf16.xpose.msra.mxu0 0
      %2839 = vmatprep.subr.bf16.mxu0 0
      %2840 = vmatpush1.bf16.xpose.msra.mxu0 0
      %2841 = vmatprep.subr.bf16.mxu0 0
      %2842 = vmatpush1.bf16.xpose.msra.mxu0 %v2831
      %2843 = vmatprep.subr.bf16.mxu0 0
      %2844 = vmatpush1.bf16.xpose.msra.mxu0 %v2828
      %2845 = vmatprep.subr.bf16.mxu0 0
      %2846 = vmatpush1.bf16.xpose.msra.mxu0 %v2825
      %2847 = vmatprep.subr.bf16.mxu0 0
      %2848 = vmatpush1.bf16.xpose.msra.mxu0 %v2822
      %2849 = vmatprep.subr.bf16.mxu0 0
      %2850 = vmatpush2.bf16.xpose.msra.mxu0 0
      %2851 = vmatprep.subr.bf16.mxu0 0
      %2852 = vmatpush2.bf16.xpose.msra.mxu0 0
      %2853 = vmatprep.subr.bf16.mxu0 0
      %2854 = vmatpush2.bf16.xpose.msra.mxu0 0
      %2855 = vmatprep.subr.bf16.mxu0 0
      %2856 = vmatpush2.bf16.xpose.msra.mxu0 0
      %2857 = vmatprep.subr.bf16.mxu0 0
      %2858 = vmatpush2.bf16.xpose.msra.mxu0 0
      %2859 = vmatprep.subr.bf16.mxu0 0
      %2860 = vmatpush2.bf16.xpose.msra.mxu0 0
      %2861 = vmatprep.subr.bf16.mxu0 0
      %2862 = vmatpush2.bf16.xpose.msra.mxu0 0
      %2863 = vmatprep.subr.bf16.mxu0 0
      %2864 = vmatpush2.bf16.xpose.msra.mxu0 0
      %2865 = vmatprep.mubr.bf16.mxu0 0
      %2866 = vmatmul.mubr.bf16.gmra.mxu0 %v2810
      %v2867 = vpop.f32.mrf.mxu0
      %v2868 = vadd.f32 0.0, %v2867
      %v2869 = vpop.f32.mrf.mxu0
      %v2870 = vpop.f32.mrf.mxu0
      %v2871 = vadd.f32 0.0, %v2870
      %v2872 = vpop.f32.mrf.mxu0
      %2873 = vmatprep.mubr.bf16.mxu0 0
      %2874 = vmatmul.mubr.bf16.gmra.mxu0 %v2813
      %v2875 = vpop.f32.mrf.mxu0
      %v2876 = vadd.f32 0.0, %v2875
      %v2877 = vpop.f32.mrf.mxu0
      %v2878 = vpop.f32.mrf.mxu0
      %v2879 = vadd.f32 0.0, %v2878
      %v2880 = vpop.f32.mrf.mxu0
      %2881 = vmatprep.mubr.bf16.mxu0 0
      %2882 = vmatmul.mubr.bf16.gmra.mxu0 %v2816
      %v2883 = vpop.f32.mrf.mxu0
      %v2884 = vadd.f32 0.0, %v2883
      %v2885 = vpop.f32.mrf.mxu0
      %v2886 = vpop.f32.mrf.mxu0
      %v2887 = vadd.f32 0.0, %v2886
      %v2888 = vpop.f32.mrf.mxu0
      %2889 = vmatprep.mubr.bf16.mxu0 0
      %2890 = vmatmul.mubr.bf16.gmra.mxu0 %v2819
      %v2891 = vpop.f32.mrf.mxu0
      %v2892 = vadd.f32 0.0, %v2891
      %v2893 = vpop.f32.mrf.mxu0
      %v2894 = vpop.f32.mrf.mxu0
      %v2895 = vadd.f32 0.0, %v2894
      %v2896 = vpop.f32.mrf.mxu0
      %2897 = vdwg.mxu0
      %v2898 = vsel %vm1059, %v2868, -inf
      %2899 = vmax.xlane.f32.xlu0 %v2898
      %v2900 = vpop.xlane.xlu0 %2899
      %v2901 = vsel %vm1059, %v2871, -inf
      %2902 = vmax.xlane.f32.xlu0 %v2901
      %v2903 = vpop.xlane.xlu0 %2902
      %v2904 = vsel %vm1059, %v2876, -inf
      %2905 = vmax.xlane.f32.xlu0 %v2904
      %v2906 = vpop.xlane.xlu0 %2905
      %v2907 = vsel %vm1059, %v2879, -inf
      %2908 = vmax.xlane.f32.xlu0 %v2907
      %v2909 = vpop.xlane.xlu0 %2908
      %v2910 = vsel %vm1059, %v2884, -inf
      %2911 = vmax.xlane.f32.xlu0 %v2910
      %v2912 = vpop.xlane.xlu0 %2911
      %v2913 = vsel %vm1059, %v2887, -inf
      %2914 = vmax.xlane.f32.xlu0 %v2913
      %v2915 = vpop.xlane.xlu0 %2914
      %v2916 = vsel %vm1059, %v2892, -inf
      %2917 = vmax.xlane.f32.xlu0 %v2916
      %v2918 = vpop.xlane.xlu0 %2917
      %v2919 = vsel %vm1059, %v2895, -inf
      %2920 = vmax.xlane.f32.xlu0 %v2919
      %v2921 = vpop.xlane.xlu0 %2920
      %v2922 = vsub.f32 %v2868, %v2900
      %v2923 = vsub.f32 %v2871, %v2903
      %v2924 = vsub.f32 %v2876, %v2906
      %v2925 = vsub.f32 %v2879, %v2909
      %v2926 = vsub.f32 %v2884, %v2912
      %v2927 = vsub.f32 %v2887, %v2915
      %v2928 = vsub.f32 %v2892, %v2918
      %v2929 = vsub.f32 %v2895, %v2921
      %v2930 = vmul.f32 %v2922, 1.442695
      %v2931 = vpow.pop %v2930
      %v2932 = vmul.f32 %v2923, 1.442695
      %v2933 = vpow.pop %v2932
      %v2934 = vmul.f32 %v2924, 1.442695
      %v2935 = vpow.pop %v2934
      %v2936 = vmul.f32 %v2925, 1.442695
      %v2937 = vpow.pop %v2936
      %v2938 = vmul.f32 %v2926, 1.442695
      %v2939 = vpow.pop %v2938
      %v2940 = vmul.f32 %v2927, 1.442695
      %v2941 = vpow.pop %v2940
      %v2942 = vmul.f32 %v2928, 1.442695
      %v2943 = vpow.pop %v2942
      %v2944 = vmul.f32 %v2929, 1.442695
      %v2945 = vpow.pop %v2944
      %v2946 = vsel %vm1059, %v2931, 0.0
      %2947 = vadd.xlane.f32.xlu0 %v2946
      %v2948 = vpop.xlane.xlu0 %2947
      %v2949 = vsel %vm1059, %v2933, 0.0
      %2950 = vadd.xlane.f32.xlu0 %v2949
      %v2951 = vpop.xlane.xlu0 %2950
      %v2952 = vsel %vm1059, %v2935, 0.0
      %2953 = vadd.xlane.f32.xlu0 %v2952
      %v2954 = vpop.xlane.xlu0 %2953
      %v2955 = vsel %vm1059, %v2937, 0.0
      %2956 = vadd.xlane.f32.xlu0 %v2955
      %v2957 = vpop.xlane.xlu0 %2956
      %v2958 = vsel %vm1059, %v2939, 0.0
      %2959 = vadd.xlane.f32.xlu0 %v2958
      %v2960 = vpop.xlane.xlu0 %2959
      %v2961 = vsel %vm1059, %v2941, 0.0
      %2962 = vadd.xlane.f32.xlu0 %v2961
      %v2963 = vpop.xlane.xlu0 %2962
      %v2964 = vsel %vm1059, %v2943, 0.0
      %2965 = vadd.xlane.f32.xlu0 %v2964
      %v2966 = vpop.xlane.xlu0 %2965
      %v2967 = vsel %vm1059, %v2945, 0.0
      %2968 = vadd.xlane.f32.xlu0 %v2967
      %v2969 = vpop.xlane.xlu0 %2968
      %v2970 = vrcp.pop %v2948
      %v2971 = vrcp.pop %v2951
      %v2972 = vrcp.pop %v2954
      %v2973 = vrcp.pop %v2957
      %v2974 = vrcp.pop %v2960
      %v2975 = vrcp.pop %v2963
      %v2976 = vrcp.pop %v2966
      %v2977 = vrcp.pop %v2969
      %v2978 = vmul.f32 %v2931, %v2970
      %v2979 = vmul.f32 %v2933, %v2971
      %v2980 = vmul.f32 %v2935, %v2972
      %v2981 = vmul.f32 %v2937, %v2973
      %v2982 = vmul.f32 %v2939, %v2974
      %v2983 = vmul.f32 %v2941, %v2975
      %v2984 = vmul.f32 %v2943, %v2976
      %v2985 = vmul.f32 %v2945, %v2977
      %v2986 = vpack.c.bf16 %v2979, %v2978
      %v2987 = vpack.c.bf16 %v2981, %v2980
      %v2988 = vpack.c.bf16 %v2983, %v2982
      %v2989 = vpack.c.bf16 %v2985, %v2984
      %v2990 = vpack.c.bf16 %v2766, %v2763
      %v2991 = vpack.c.bf16 %v2774, %v2771
      %v2992 = vpack.c.bf16 %v2782, %v2779
      %v2993 = vpack.c.bf16 %v2790, %v2787
      %v2995 = vsel %vm1059, %v2986, 0
      %v2998 = vsel %vm1059, %v2987, 0
      %v3001 = vsel %vm1059, %v2988, 0
      %v3004 = vsel %vm1059, %v2989, 0
      %3006 = vmatprep.subr.bf16.mxu0 0
      %3007 = vmatpush1.bf16.msra.mxu0 0
      %3008 = vmatprep.subr.bf16.mxu0 0
      %3009 = vmatpush1.bf16.msra.mxu0 0
      %3010 = vmatprep.subr.bf16.mxu0 0
      %3011 = vmatpush1.bf16.msra.mxu0 0
      %3012 = vmatprep.subr.bf16.mxu0 0
      %3013 = vmatpush1.bf16.msra.mxu0 0
      %3014 = vmatprep.subr.bf16.mxu0 0
      %3015 = vmatpush1.bf16.msra.mxu0 %v2993
      %3016 = vmatprep.subr.bf16.mxu0 0
      %3017 = vmatpush1.bf16.msra.mxu0 %v2992
      %3018 = vmatprep.subr.bf16.mxu0 0
      %3019 = vmatpush1.bf16.msra.mxu0 %v2991
      %3020 = vmatprep.subr.bf16.mxu0 0
      %3021 = vmatpush1.bf16.msra.mxu0 %v2990
      %3022 = vmatprep.subr.bf16.mxu0 0
      %3023 = vmatpush2.bf16.msra.mxu0 0
      %3024 = vmatprep.subr.bf16.mxu0 0
      %3025 = vmatpush2.bf16.msra.mxu0 0
      %3026 = vmatprep.subr.bf16.mxu0 0
      %3027 = vmatpush2.bf16.msra.mxu0 0
      %3028 = vmatprep.subr.bf16.mxu0 0
      %3029 = vmatpush2.bf16.msra.mxu0 0
      %3030 = vmatprep.subr.bf16.mxu0 0
      %3031 = vmatpush2.bf16.msra.mxu0 0
      %3032 = vmatprep.subr.bf16.mxu0 0
      %3033 = vmatpush2.bf16.msra.mxu0 0
      %3034 = vmatprep.subr.bf16.mxu0 0
      %3035 = vmatpush2.bf16.msra.mxu0 0
      %3036 = vmatprep.subr.bf16.mxu0 0
      %3037 = vmatpush2.bf16.msra.mxu0 0
      %3038 = vmatprep.mubr.bf16.mxu0 0
      %3039 = vmatmul.mubr.bf16.gmra.mxu0 %v2995
      %v3040 = vpop.f32.mrf.mxu0
      %v3041 = vadd.f32 0.0, %v3040
      %v3042 = vpop.f32.mrf.mxu0
      %v3043 = vpop.f32.mrf.mxu0
      %v3044 = vadd.f32 0.0, %v3043
      %v3045 = vpop.f32.mrf.mxu0
      %3046 = vmatprep.mubr.bf16.mxu0 0
      %3047 = vmatmul.mubr.bf16.gmra.mxu0 %v2998
      %v3048 = vpop.f32.mrf.mxu0
      %v3049 = vadd.f32 0.0, %v3048
      %v3050 = vpop.f32.mrf.mxu0
      %v3051 = vpop.f32.mrf.mxu0
      %v3052 = vadd.f32 0.0, %v3051
      %v3053 = vpop.f32.mrf.mxu0
      %3054 = vmatprep.mubr.bf16.mxu0 0
      %3055 = vmatmul.mubr.bf16.gmra.mxu0 %v3001
      %v3056 = vpop.f32.mrf.mxu0
      %v3057 = vadd.f32 0.0, %v3056
      %v3058 = vpop.f32.mrf.mxu0
      %v3059 = vpop.f32.mrf.mxu0
      %v3060 = vadd.f32 0.0, %v3059
      %v3061 = vpop.f32.mrf.mxu0
      %3062 = vmatprep.mubr.bf16.mxu0 0
      %3063 = vmatmul.mubr.bf16.gmra.mxu0 %v3004
      %v3064 = vpop.f32.mrf.mxu0
      %v3065 = vadd.f32 0.0, %v3064
      %v3066 = vpop.f32.mrf.mxu0
      %v3067 = vpop.f32.mrf.mxu0
      %v3068 = vadd.f32 0.0, %v3067
      %v3069 = vpop.f32.mrf.mxu0
      %3070 = vdwg.mxu0
      %v3071 = vpack.c.bf16 %v3044, %v3041
      %v3072 = vpack.c.bf16 %v3052, %v3049
      %v3073 = vpack.c.bf16 %v3060, %v3057
      %v3074 = vpack.c.bf16 %v3068, %v3065
      %s3075 = scalar_lea.vmem %s6, 12
      %v3076 = vld [vmem:[%s3075] sm:$0xf]
      %v3078 = vsel %vm969, %v3071, 0
      %v3081 = vsel %vm969, %v3072, 0
      %v3084 = vsel %vm969, %v3073, 0
      %v3087 = vsel %vm969, %v3074, 0
      %v3090 = vsel %vm1780, %v3076, 0
      %3092 = vmatprep.subr.bf16.mxu0 0
      %3093 = vmatpush1.bf16.msra.mxu0 0
      %3094 = vmatprep.subr.bf16.mxu0 0
      %3095 = vmatpush1.bf16.msra.mxu0 0
      %3096 = vmatprep.subr.bf16.mxu0 0
      %3097 = vmatpush1.bf16.msra.mxu0 0
      %3098 = vmatprep.subr.bf16.mxu0 0
      %3099 = vmatpush1.bf16.msra.mxu0 0
      %3100 = vmatprep.subr.bf16.mxu0 0
      %3101 = vmatpush1.bf16.msra.mxu0 0
      %3102 = vmatprep.subr.bf16.mxu0 0
      %3103 = vmatpush1.bf16.msra.mxu0 0
      %3104 = vmatprep.subr.bf16.mxu0 0
      %3105 = vmatpush1.bf16.msra.mxu0 0
      %3106 = vmatprep.subr.bf16.mxu0 0
      %3107 = vmatpush1.bf16.msra.mxu0 %v3090
      %3108 = vmatprep.subr.bf16.mxu0 0
      %3109 = vmatpush2.bf16.msra.mxu0 0
      %3110 = vmatprep.subr.bf16.mxu0 0
      %3111 = vmatpush2.bf16.msra.mxu0 0
      %3112 = vmatprep.subr.bf16.mxu0 0
      %3113 = vmatpush2.bf16.msra.mxu0 0
      %3114 = vmatprep.subr.bf16.mxu0 0
      %3115 = vmatpush2.bf16.msra.mxu0 0
      %3116 = vmatprep.subr.bf16.mxu0 0
      %3117 = vmatpush2.bf16.msra.mxu0 0
      %3118 = vmatprep.subr.bf16.mxu0 0
      %3119 = vmatpush2.bf16.msra.mxu0 0
      %3120 = vmatprep.subr.bf16.mxu0 0
      %3121 = vmatpush2.bf16.msra.mxu0 0
      %3122 = vmatprep.subr.bf16.mxu0 0
      %3123 = vmatpush2.bf16.msra.mxu0 0
      %3124 = vmatprep.mubr.bf16.mxu0 0
      %3125 = vmatmul.mubr.bf16.gmra.mxu0 %v3078
      %v3126 = vpop.f32.mrf.mxu0
      %v3127 = vadd.f32 0.0, %v3126
      %v3128 = vpop.f32.mrf.mxu0
      %v3129 = vpop.f32.mrf.mxu0
      %v3130 = vadd.f32 0.0, %v3129
      %v3131 = vpop.f32.mrf.mxu0
      %3132 = vmatprep.mubr.bf16.mxu0 0
      %3133 = vmatmul.mubr.bf16.gmra.mxu0 %v3081
      %v3134 = vpop.f32.mrf.mxu0
      %v3135 = vadd.f32 0.0, %v3134
      %v3136 = vpop.f32.mrf.mxu0
      %v3137 = vpop.f32.mrf.mxu0
      %v3138 = vadd.f32 0.0, %v3137
      %v3139 = vpop.f32.mrf.mxu0
      %3140 = vmatprep.mubr.bf16.mxu0 0
      %3141 = vmatmul.mubr.bf16.gmra.mxu0 %v3084
      %v3142 = vpop.f32.mrf.mxu0
      %v3143 = vadd.f32 0.0, %v3142
      %v3144 = vpop.f32.mrf.mxu0
      %v3145 = vpop.f32.mrf.mxu0
      %v3146 = vadd.f32 0.0, %v3145
      %v3147 = vpop.f32.mrf.mxu0
      %3148 = vmatprep.mubr.bf16.mxu0 0
      %3149 = vmatmul.mubr.bf16.gmra.mxu0 %v3087
      %v3150 = vpop.f32.mrf.mxu0
      %v3151 = vadd.f32 0.0, %v3150
      %v3152 = vpop.f32.mrf.mxu0
      %v3153 = vpop.f32.mrf.mxu0
      %v3154 = vadd.f32 0.0, %v3153
      %v3155 = vpop.f32.mrf.mxu0
      %3156 = vdwg.mxu0
      %v3157 = vadd.f32 %v2539, %v3127
      %v3158 = vadd.f32 %v2540, %v3130
      %v3159 = vadd.f32 %v2541, %v3135
      %v3160 = vadd.f32 %v2542, %v3138
      %v3161 = vadd.f32 %v2543, %v3143
      %v3162 = vadd.f32 %v2544, %v3146
      %v3163 = vadd.f32 %v2545, %v3151
      %v3164 = vadd.f32 %v2546, %v3154
      %v3165 = vadd.f32 %v550, %v3157
      %v3166 = vadd.f32 %v551, %v3158
      %v3167 = vadd.f32 %v552, %v3159
      %v3168 = vadd.f32 %v553, %v3160
      %v3169 = vadd.f32 %v554, %v3161
      %v3170 = vadd.f32 %v555, %v3162
      %v3171 = vadd.f32 %v556, %v3163
      %v3172 = vadd.f32 %v557, %v3164
      %v3173 = vld [vmem:[%s7] sm:$0x1]
      %v3175 = vlaneseq
      %v3176 = vshrl.u32 %v3175, 7
      %v3177 = vsub.s32 0, %v3176
      %v3178 = vrot.slane %v3173, %v3177
      %v3180 = vadd.f32 %v3165, %v3178
      %v3181 = vadd.f32 %v3166, %v3178
      %v3182 = vadd.f32 %v3167, %v3178
      %v3183 = vadd.f32 %v3168, %v3178
      %v3184 = vadd.f32 %v3169, %v3178
      %v3185 = vadd.f32 %v3170, %v3178
      %v3186 = vadd.f32 %v3171, %v3178
      %v3187 = vadd.f32 %v3172, %v3178
      %v3188 = vld [vmem:[%s8] sm:$0x1]
      %v3189 = vld [vmem:[%s9] sm:$0x1]
      %v3190 = vsel %vm560, %v3180, 0.0
      %3191 = vadd.xlane.f32.xlu0 %v3190
      %v3192 = vpop.xlane.xlu0 %3191
      %v3193 = vsel %vm560, %v3181, 0.0
      %3194 = vadd.xlane.f32.xlu0 %v3193
      %v3195 = vpop.xlane.xlu0 %3194
      %v3196 = vsel %vm560, %v3182, 0.0
      %3197 = vadd.xlane.f32.xlu0 %v3196
      %v3198 = vpop.xlane.xlu0 %3197
      %v3199 = vsel %vm560, %v3183, 0.0
      %3200 = vadd.xlane.f32.xlu0 %v3199
      %v3201 = vpop.xlane.xlu0 %3200
      %v3202 = vsel %vm560, %v3184, 0.0
      %3203 = vadd.xlane.f32.xlu0 %v3202
      %v3204 = vpop.xlane.xlu0 %3203
      %v3205 = vsel %vm560, %v3185, 0.0
      %3206 = vadd.xlane.f32.xlu0 %v3205
      %v3207 = vpop.xlane.xlu0 %3206
      %v3208 = vsel %vm560, %v3186, 0.0
      %3209 = vadd.xlane.f32.xlu0 %v3208
      %v3210 = vpop.xlane.xlu0 %3209
      %v3211 = vsel %vm560, %v3187, 0.0
      %3212 = vadd.xlane.f32.xlu0 %v3211
      %v3213 = vpop.xlane.xlu0 %3212
      %v3214 = vmul.f32 %v3192, %v585
      %v3215 = vmul.f32 %v3195, %v585
      %v3216 = vmul.f32 %v3198, %v585
      %v3217 = vmul.f32 %v3201, %v585
      %v3218 = vmul.f32 %v3204, %v585
      %v3219 = vmul.f32 %v3207, %v585
      %v3220 = vmul.f32 %v3210, %v585
      %v3221 = vmul.f32 %v3213, %v585
      %v3222 = vsub.f32 %v3180, %v3214
      %v3223 = vsub.f32 %v3181, %v3215
      %v3224 = vsub.f32 %v3182, %v3216
      %v3225 = vsub.f32 %v3183, %v3217
      %v3226 = vsub.f32 %v3184, %v3218
      %v3227 = vsub.f32 %v3185, %v3219
      %v3228 = vsub.f32 %v3186, %v3220
      %v3229 = vsub.f32 %v3187, %v3221
      %v3230 = vmul.f32 %v3222, %v3222
      %v3231 = vmul.f32 %v3223, %v3223
      %v3232 = vmul.f32 %v3224, %v3224
      %v3233 = vmul.f32 %v3225, %v3225
      %v3234 = vmul.f32 %v3226, %v3226
      %v3235 = vmul.f32 %v3227, %v3227
      %v3236 = vmul.f32 %v3228, %v3228
      %v3237 = vmul.f32 %v3229, %v3229
      %v3238 = vsel %vm560, %v3230, 0.0
      %3239 = vadd.xlane.f32.xlu0 %v3238
      %v3240 = vpop.xlane.xlu0 %3239
      %v3241 = vsel %vm560, %v3231, 0.0
      %3242 = vadd.xlane.f32.xlu0 %v3241
      %v3243 = vpop.xlane.xlu0 %3242
      %v3244 = vsel %vm560, %v3232, 0.0
      %3245 = vadd.xlane.f32.xlu0 %v3244
      %v3246 = vpop.xlane.xlu0 %3245
      %v3247 = vsel %vm560, %v3233, 0.0
      %3248 = vadd.xlane.f32.xlu0 %v3247
      %v3249 = vpop.xlane.xlu0 %3248
      %v3250 = vsel %vm560, %v3234, 0.0
      %3251 = vadd.xlane.f32.xlu0 %v3250
      %v3252 = vpop.xlane.xlu0 %3251
      %v3253 = vsel %vm560, %v3235, 0.0
      %3254 = vadd.xlane.f32.xlu0 %v3253
      %v3255 = vpop.xlane.xlu0 %3254
      %v3256 = vsel %vm560, %v3236, 0.0
      %3257 = vadd.xlane.f32.xlu0 %v3256
      %v3258 = vpop.xlane.xlu0 %3257
      %v3259 = vsel %vm560, %v3237, 0.0
      %3260 = vadd.xlane.f32.xlu0 %v3259
      %v3261 = vpop.xlane.xlu0 %3260
      %v3262 = vmul.f32 %v3240, %v585
      %v3263 = vmul.f32 %v3243, %v585
      %v3264 = vmul.f32 %v3246, %v585
      %v3265 = vmul.f32 %v3249, %v585
      %v3266 = vmul.f32 %v3252, %v585
      %v3267 = vmul.f32 %v3255, %v585
      %v3268 = vmul.f32 %v3258, %v585
      %v3269 = vmul.f32 %v3261, %v585
      %v3270 = vadd.f32 %v3262, 1e-05
      %v3271 = vadd.f32 %v3263, 1e-05
      %v3272 = vadd.f32 %v3264, 1e-05
      %v3273 = vadd.f32 %v3265, 1e-05
      %v3274 = vadd.f32 %v3266, 1e-05
      %v3275 = vadd.f32 %v3267, 1e-05
      %v3276 = vadd.f32 %v3268, 1e-05
      %v3277 = vadd.f32 %v3269, 1e-05
      %v3278 = vrsqrt.pop %v3270
      %v3279 = vrsqrt.pop %v3271
      %v3280 = vrsqrt.pop %v3272
      %v3281 = vrsqrt.pop %v3273
      %v3282 = vrsqrt.pop %v3274
      %v3283 = vrsqrt.pop %v3275
      %v3284 = vrsqrt.pop %v3276
      %v3285 = vrsqrt.pop %v3277
      %v3286 = vmul.f32 %v3222, %v3278
      %v3287 = vmul.f32 %v3223, %v3279
      %v3288 = vmul.f32 %v3224, %v3280
      %v3289 = vmul.f32 %v3225, %v3281
      %v3290 = vmul.f32 %v3226, %v3282
      %v3291 = vmul.f32 %v3227, %v3283
      %v3292 = vmul.f32 %v3228, %v3284
      %v3293 = vmul.f32 %v3229, %v3285
      %v3295 = vlaneseq
      %v3296 = vshrl.u32 %v3295, 7
      %v3297 = vsub.s32 0, %v3296
      %v3298 = vrot.slane %v3188, %v3297
      %v3300 = vmul.f32 %v3286, %v3298
      %v3301 = vmul.f32 %v3287, %v3298
      %v3302 = vmul.f32 %v3288, %v3298
      %v3303 = vmul.f32 %v3289, %v3298
      %v3304 = vmul.f32 %v3290, %v3298
      %v3305 = vmul.f32 %v3291, %v3298
      %v3306 = vmul.f32 %v3292, %v3298
      %v3307 = vmul.f32 %v3293, %v3298
      %v3309 = vlaneseq
      %v3310 = vshrl.u32 %v3309, 7
      %v3311 = vsub.s32 0, %v3310
      %v3312 = vrot.slane %v3189, %v3311
      %v3314 = vadd.f32 %v3300, %v3312
      %v3315 = vadd.f32 %v3301, %v3312
      %v3316 = vadd.f32 %v3302, %v3312
      %v3317 = vadd.f32 %v3303, %v3312
      %v3318 = vadd.f32 %v3304, %v3312
      %v3319 = vadd.f32 %v3305, %v3312
      %v3320 = vadd.f32 %v3306, %v3312
      %v3321 = vadd.f32 %v3307, %v3312
      %v3322 = vpack.c.bf16 %v3315, %v3314
      %v3323 = vpack.c.bf16 %v3317, %v3316
      %v3324 = vpack.c.bf16 %v3319, %v3318
      %v3325 = vpack.c.bf16 %v3321, %v3320
      %v3326 = vld [vmem:[%s10] sm:$0xf]
      %v3327 = vld [vmem:[%s10 + $0x4] sm:$0xf]
      %v3328 = vld [vmem:[%s10 + $0x8] sm:$0xf]
      %v3329 = vld [vmem:[%s10 + $0xc] sm:$0xf]
      %v3330 = vld [vmem:[%s11] sm:$0x1]
      %v3332 = vlaneseq
      %v3333 = vshrl.u32 %v3332, 7
      %v3334 = vsub.s32 0, %v3333
      %v3335 = vrot.slane %v3330, %v3334
      %v3341 = vunpack.c.l.b16 %v3326
      %v3342 = vunpack.c.l.b16 %v3327
      %v3343 = vunpack.c.l.b16 %v3328
      %v3344 = vunpack.c.l.b16 %v3329
      %v3345 = vpack.c.b16 %v3342, %v3341
      %v3346 = vpack.c.b16 %v3344, %v3343
      %v3350 = vsel %vm560, %v3322, 0
      %v3353 = vsel %vm560, %v3323, 0
      %v3356 = vsel %vm560, %v3324, 0
      %v3359 = vsel %vm560, %v3325, 0
      %3361 = vmatprep.subr.bf16.mxu0 0
      %3362 = vmatpush1.bf16.msra.mxu0 0
      %3363 = vmatprep.subr.bf16.mxu0 0
      %3364 = vmatpush1.bf16.msra.mxu0 0
      %3365 = vmatprep.subr.bf16.mxu0 0
      %3366 = vmatpush1.bf16.msra.mxu0 0
      %3367 = vmatprep.subr.bf16.mxu0 0
      %3368 = vmatpush1.bf16.msra.mxu0 0
      %3369 = vmatprep.subr.bf16.mxu0 0
      %3370 = vmatpush1.bf16.msra.mxu0 0
      %3371 = vmatprep.subr.bf16.mxu0 0
      %3372 = vmatpush1.bf16.msra.mxu0 0
      %3373 = vmatprep.subr.bf16.mxu0 0
      %3374 = vmatpush1.bf16.msra.mxu0 %v3346
      %3375 = vmatprep.subr.bf16.mxu0 0
      %3376 = vmatpush1.bf16.msra.mxu0 %v3345
      %3377 = vmatprep.subr.bf16.mxu0 0
      %3378 = vmatpush2.bf16.msra.mxu0 0
      %3379 = vmatprep.subr.bf16.mxu0 0
      %3380 = vmatpush2.bf16.msra.mxu0 0
      %3381 = vmatprep.subr.bf16.mxu0 0
      %3382 = vmatpush2.bf16.msra.mxu0 0
      %3383 = vmatprep.subr.bf16.mxu0 0
      %3384 = vmatpush2.bf16.msra.mxu0 0
      %3385 = vmatprep.subr.bf16.mxu0 0
      %3386 = vmatpush2.bf16.msra.mxu0 0
      %3387 = vmatprep.subr.bf16.mxu0 0
      %3388 = vmatpush2.bf16.msra.mxu0 0
      %3389 = vmatprep.subr.bf16.mxu0 0
      %3390 = vmatpush2.bf16.msra.mxu0 0
      %3391 = vmatprep.subr.bf16.mxu0 0
      %3392 = vmatpush2.bf16.msra.mxu0 0
      %3393 = vmatprep.mubr.bf16.mxu0 0
      %3394 = vmatmul.mubr.bf16.gmra.mxu0 %v3350
      %v3395 = vpop.f32.mrf.mxu0
      %v3396 = vadd.f32 %v3335, %v3395
      %v3397 = vpop.f32.mrf.mxu0
      %v3398 = vpop.f32.mrf.mxu0
      %v3399 = vadd.f32 %v3335, %v3398
      %v3400 = vpop.f32.mrf.mxu0
      %3401 = vmatprep.mubr.bf16.mxu0 0
      %3402 = vmatmul.mubr.bf16.gmra.mxu0 %v3353
      %v3403 = vpop.f32.mrf.mxu0
      %v3404 = vadd.f32 %v3335, %v3403
      %v3405 = vpop.f32.mrf.mxu0
      %v3406 = vpop.f32.mrf.mxu0
      %v3407 = vadd.f32 %v3335, %v3406
      %v3408 = vpop.f32.mrf.mxu0
      %3409 = vmatprep.mubr.bf16.mxu0 0
      %3410 = vmatmul.mubr.bf16.gmra.mxu0 %v3356
      %v3411 = vpop.f32.mrf.mxu0
      %v3412 = vadd.f32 %v3335, %v3411
      %v3413 = vpop.f32.mrf.mxu0
      %v3414 = vpop.f32.mrf.mxu0
      %v3415 = vadd.f32 %v3335, %v3414
      %v3416 = vpop.f32.mrf.mxu0
      %3417 = vmatprep.mubr.bf16.mxu0 0
      %3418 = vmatmul.mubr.bf16.gmra.mxu0 %v3359
      %v3419 = vpop.f32.mrf.mxu0
      %v3420 = vadd.f32 %v3335, %v3419
      %v3421 = vpop.f32.mrf.mxu0
      %v3422 = vpop.f32.mrf.mxu0
      %v3423 = vadd.f32 %v3335, %v3422
      %v3424 = vpop.f32.mrf.mxu0
      %3425 = vdwg.mxu0
      %s3426 = scalar_lea.vmem %s12, 4
      %v3427 = vld [vmem:[%s3426] sm:$0x1]
      %v3429 = vlaneseq
      %v3430 = vshrl.u32 %v3429, 7
      %v3431 = vsub.s32 0, %v3430
      %v3432 = vrot.slane %v3427, %v3431
      %v3434 = vmul.f32 %v3396, %v3432
      %v3435 = vmul.f32 %v3399, %v3432
      %v3436 = vmul.f32 %v3404, %v3432
      %v3437 = vmul.f32 %v3407, %v3432
      %v3438 = vmul.f32 %v3412, %v3432
      %v3439 = vmul.f32 %v3415, %v3432
      %v3440 = vmul.f32 %v3420, %v3432
      %v3441 = vmul.f32 %v3423, %v3432
      %v3442 = vld [vmem:[%s13] sm:$0x1]
      %v3444 = vlaneseq
      %v3445 = vshrl.u32 %v3444, 7
      %v3446 = vsub.s32 0, %v3445
      %v3447 = vrot.slane %v3442, %v3446
      %v3449 = vadd.f32 %v3434, %v3447
      %v3450 = vadd.f32 %v3435, %v3447
      %v3451 = vadd.f32 %v3436, %v3447
      %v3452 = vadd.f32 %v3437, %v3447
      %v3453 = vadd.f32 %v3438, %v3447
      %v3454 = vadd.f32 %v3439, %v3447
      %v3455 = vadd.f32 %v3440, %v3447
      %v3456 = vadd.f32 %v3441, %v3447
      %v3457 = vrot.slane %v3396, 7
      %v3458 = vrot.slane %v3399, 7
      %v3459 = vrot.slane %v3404, 7
      %v3460 = vrot.slane %v3407, 7
      %v3461 = vrot.slane %v3412, 7
      %v3462 = vrot.slane %v3415, 7
      %v3463 = vrot.slane %v3420, 7
      %v3464 = vrot.slane %v3423, 7
      %v3465 = vlaneseq
      %v3466 = vshrl.u32 %v3465, 7
      %vm3467 = vcmp.lt.s32.totalorder %v3466, 1
      %v3468 = vsel %vm3467, %v3463, %v3464
      %v3469 = vsel %vm3467, %v3462, %v3463
      %v3470 = vsel %vm3467, %v3461, %v3462
      %v3471 = vsel %vm3467, %v3460, %v3461
      %v3472 = vsel %vm3467, %v3459, %v3460
      %v3473 = vsel %vm3467, %v3458, %v3459
      %v3474 = vsel %vm3467, %v3457, %v3458
      %v3475 = vsel %vm3467, %v3464, %v3457
      %v3476 = vld [vmem:[%s16] sm:$0xff]
      %v3477 = vld [vmem:[%s16 + $0x8] sm:$0xff]
      %v3478 = vld [vmem:[%s16 + $0x10] sm:$0xff]
      %v3479 = vld [vmem:[%s16 + $0x18] sm:$0xff]
      %v3480 = vld [vmem:[%s16 + $0x20] sm:$0xff]
      %v3481 = vld [vmem:[%s16 + $0x28] sm:$0xff]
      %v3482 = vld [vmem:[%s16 + $0x30] sm:$0xff]
      %v3483 = vld [vmem:[%s16 + $0x38] sm:$0xff]
      %3485 = vset.pattern.permute.xlu0 0
      %3486 = vperm.xlu0 %3485, %v3476
      %v3487 = vpop.permute.xlu0 %3486
      %3490 = vset.pattern.permute.xlu0 0
      %3491 = vperm.xlu0 %3490, %v3477
      %v3492 = vpop.permute.xlu0 %3491
      %3495 = vset.pattern.permute.xlu0 0
      %3496 = vperm.xlu0 %3495, %v3478
      %v3497 = vpop.permute.xlu0 %3496
      %3500 = vset.pattern.permute.xlu0 0
      %3501 = vperm.xlu0 %3500, %v3479
      %v3502 = vpop.permute.xlu0 %3501
      %3505 = vset.pattern.permute.xlu0 0
      %3506 = vperm.xlu0 %3505, %v3480
      %v3507 = vpop.permute.xlu0 %3506
      %3510 = vset.pattern.permute.xlu0 0
      %3511 = vperm.xlu0 %3510, %v3481
      %v3512 = vpop.permute.xlu0 %3511
      %3515 = vset.pattern.permute.xlu0 0
      %3516 = vperm.xlu0 %3515, %v3482
      %v3517 = vpop.permute.xlu0 %3516
      %3520 = vset.pattern.permute.xlu0 0
      %3521 = vperm.xlu0 %3520, %v3483
      %v3522 = vpop.permute.xlu0 %3521
      %v3524 = vmul.f32 %v3468, %v3487
      %v3525 = vmul.f32 %v3475, %v3492
      %v3526 = vmul.f32 %v3474, %v3497
      %v3527 = vmul.f32 %v3473, %v3502
      %v3528 = vmul.f32 %v3472, %v3507
      %v3529 = vmul.f32 %v3471, %v3512
      %v3530 = vmul.f32 %v3470, %v3517
      %v3531 = vmul.f32 %v3469, %v3522
      %v3532 = vld [vmem:[%s12] sm:$0x1]
      %v3534 = vlaneseq
      %v3535 = vshrl.u32 %v3534, 7
      %v3536 = vsub.s32 0, %v3535
      %v3537 = vrot.slane %v3532, %v3536
      %v3539 = vmul.f32 %v3524, %v3537
      %v3540 = vmul.f32 %v3525, %v3537
      %v3541 = vmul.f32 %v3526, %v3537
      %v3542 = vmul.f32 %v3527, %v3537
      %v3543 = vmul.f32 %v3528, %v3537
      %v3544 = vmul.f32 %v3529, %v3537
      %v3545 = vmul.f32 %v3530, %v3537
      %v3546 = vmul.f32 %v3531, %v3537
      %v3547 = vadd.f32 %v3449, %v3539
      %v3548 = vadd.f32 %v3450, %v3540
      %v3549 = vadd.f32 %v3451, %v3541
      %v3550 = vadd.f32 %v3452, %v3542
      %v3551 = vadd.f32 %v3453, %v3543
      %v3552 = vadd.f32 %v3454, %v3544
      %v3553 = vadd.f32 %v3455, %v3545
      %v3554 = vadd.f32 %v3456, %v3546
      %s3555 = scalar_lea.vmem %s16, 64
      %v3556 = vld [vmem:[%s3555] sm:$0xff]
      %v3557 = vld [vmem:[%s3555 + $0x8] sm:$0xff]
      %v3558 = vld [vmem:[%s3555 + $0x10] sm:$0xff]
      %v3559 = vld [vmem:[%s3555 + $0x18] sm:$0xff]
      %v3560 = vld [vmem:[%s3555 + $0x20] sm:$0xff]
      %v3561 = vld [vmem:[%s3555 + $0x28] sm:$0xff]
      %v3562 = vld [vmem:[%s3555 + $0x30] sm:$0xff]
      %v3563 = vld [vmem:[%s3555 + $0x38] sm:$0xff]
      %3565 = vset.pattern.permute.xlu0 0
      %3566 = vperm.xlu0 %3565, %v3556
      %v3567 = vpop.permute.xlu0 %3566
      %3570 = vset.pattern.permute.xlu0 0
      %3571 = vperm.xlu0 %3570, %v3557
      %v3572 = vpop.permute.xlu0 %3571
      %3575 = vset.pattern.permute.xlu0 0
      %3576 = vperm.xlu0 %3575, %v3558
      %v3577 = vpop.permute.xlu0 %3576
      %3580 = vset.pattern.permute.xlu0 0
      %3581 = vperm.xlu0 %3580, %v3559
      %v3582 = vpop.permute.xlu0 %3581
      %3585 = vset.pattern.permute.xlu0 0
      %3586 = vperm.xlu0 %3585, %v3560
      %v3587 = vpop.permute.xlu0 %3586
      %3590 = vset.pattern.permute.xlu0 0
      %3591 = vperm.xlu0 %3590, %v3561
      %v3592 = vpop.permute.xlu0 %3591
      %3595 = vset.pattern.permute.xlu0 0
      %3596 = vperm.xlu0 %3595, %v3562
      %v3597 = vpop.permute.xlu0 %3596
      %3600 = vset.pattern.permute.xlu0 0
      %3601 = vperm.xlu0 %3600, %v3563
      %v3602 = vpop.permute.xlu0 %3601
      %v3604 = vmul.f32 %v3423, %v3567
      %v3605 = vmul.f32 %v3396, %v3572
      %v3606 = vmul.f32 %v3399, %v3577
      %v3607 = vmul.f32 %v3404, %v3582
      %v3608 = vmul.f32 %v3407, %v3587
      %v3609 = vmul.f32 %v3412, %v3592
      %v3610 = vmul.f32 %v3415, %v3597
      %v3611 = vmul.f32 %v3420, %v3602
      %s3612 = scalar_lea.vmem %s12, 1
      %v3613 = vld [vmem:[%s3612] sm:$0x1]
      %v3615 = vlaneseq
      %v3616 = vshrl.u32 %v3615, 7
      %v3617 = vsub.s32 0, %v3616
      %v3618 = vrot.slane %v3613, %v3617
      %v3620 = vmul.f32 %v3604, %v3618
      %v3621 = vmul.f32 %v3605, %v3618
      %v3622 = vmul.f32 %v3606, %v3618
      %v3623 = vmul.f32 %v3607, %v3618
      %v3624 = vmul.f32 %v3608, %v3618
      %v3625 = vmul.f32 %v3609, %v3618
      %v3626 = vmul.f32 %v3610, %v3618
      %v3627 = vmul.f32 %v3611, %v3618
      %v3628 = vadd.f32 %v3547, %v3620
      %v3629 = vadd.f32 %v3548, %v3621
      %v3630 = vadd.f32 %v3549, %v3622
      %v3631 = vadd.f32 %v3550, %v3623
      %v3632 = vadd.f32 %v3551, %v3624
      %v3633 = vadd.f32 %v3552, %v3625
      %v3634 = vadd.f32 %v3553, %v3626
      %v3635 = vadd.f32 %v3554, %v3627
      %v3636 = vrot.slane %v3396, 1
      %v3637 = vrot.slane %v3399, 1
      %v3638 = vrot.slane %v3404, 1
      %v3639 = vrot.slane %v3407, 1
      %v3640 = vrot.slane %v3412, 1
      %v3641 = vrot.slane %v3415, 1
      %v3642 = vrot.slane %v3420, 1
      %v3643 = vrot.slane %v3423, 1
      %vm3644 = vcmp.lt.s32.totalorder %v3466, 7
      %v3645 = vsel %vm3644, %v3642, %v3643
      %v3646 = vsel %vm3644, %v3641, %v3642
      %v3647 = vsel %vm3644, %v3640, %v3641
      %v3648 = vsel %vm3644, %v3639, %v3640
      %v3649 = vsel %vm3644, %v3638, %v3639
      %v3650 = vsel %vm3644, %v3637, %v3638
      %v3651 = vsel %vm3644, %v3636, %v3637
      %v3652 = vsel %vm3644, %v3643, %v3636
      %s3653 = scalar_lea.vmem %s16, 128
      %v3654 = vld [vmem:[%s3653] sm:$0xff]
      %v3655 = vld [vmem:[%s3653 + $0x8] sm:$0xff]
      %v3656 = vld [vmem:[%s3653 + $0x10] sm:$0xff]
      %v3657 = vld [vmem:[%s3653 + $0x18] sm:$0xff]
      %v3658 = vld [vmem:[%s3653 + $0x20] sm:$0xff]
      %v3659 = vld [vmem:[%s3653 + $0x28] sm:$0xff]
      %v3660 = vld [vmem:[%s3653 + $0x30] sm:$0xff]
      %v3661 = vld [vmem:[%s3653 + $0x38] sm:$0xff]
      %3663 = vset.pattern.permute.xlu0 0
      %3664 = vperm.xlu0 %3663, %v3654
      %v3665 = vpop.permute.xlu0 %3664
      %3668 = vset.pattern.permute.xlu0 0
      %3669 = vperm.xlu0 %3668, %v3655
      %v3670 = vpop.permute.xlu0 %3669
      %3673 = vset.pattern.permute.xlu0 0
      %3674 = vperm.xlu0 %3673, %v3656
      %v3675 = vpop.permute.xlu0 %3674
      %3678 = vset.pattern.permute.xlu0 0
      %3679 = vperm.xlu0 %3678, %v3657
      %v3680 = vpop.permute.xlu0 %3679
      %3683 = vset.pattern.permute.xlu0 0
      %3684 = vperm.xlu0 %3683, %v3658
      %v3685 = vpop.permute.xlu0 %3684
      %3688 = vset.pattern.permute.xlu0 0
      %3689 = vperm.xlu0 %3688, %v3659
      %v3690 = vpop.permute.xlu0 %3689
      %3693 = vset.pattern.permute.xlu0 0
      %3694 = vperm.xlu0 %3693, %v3660
      %v3695 = vpop.permute.xlu0 %3694
      %3698 = vset.pattern.permute.xlu0 0
      %3699 = vperm.xlu0 %3698, %v3661
      %v3700 = vpop.permute.xlu0 %3699
      %v3702 = vmul.f32 %v3652, %v3665
      %v3703 = vmul.f32 %v3651, %v3670
      %v3704 = vmul.f32 %v3650, %v3675
      %v3705 = vmul.f32 %v3649, %v3680
      %v3706 = vmul.f32 %v3648, %v3685
      %v3707 = vmul.f32 %v3647, %v3690
      %v3708 = vmul.f32 %v3646, %v3695
      %v3709 = vmul.f32 %v3645, %v3700
      %s3710 = scalar_lea.vmem %s12, 2
      %v3711 = vld [vmem:[%s3710] sm:$0x1]
      %v3713 = vlaneseq
      %v3714 = vshrl.u32 %v3713, 7
      %v3715 = vsub.s32 0, %v3714
      %v3716 = vrot.slane %v3711, %v3715
      %v3718 = vmul.f32 %v3702, %v3716
      %v3719 = vmul.f32 %v3703, %v3716
      %v3720 = vmul.f32 %v3704, %v3716
      %v3721 = vmul.f32 %v3705, %v3716
      %v3722 = vmul.f32 %v3706, %v3716
      %v3723 = vmul.f32 %v3707, %v3716
      %v3724 = vmul.f32 %v3708, %v3716
      %v3725 = vmul.f32 %v3709, %v3716
      %v3726 = vadd.f32 %v3628, %v3718
      %v3727 = vadd.f32 %v3629, %v3719
      %v3728 = vadd.f32 %v3630, %v3720
      %v3729 = vadd.f32 %v3631, %v3721
      %v3730 = vadd.f32 %v3632, %v3722
      %v3731 = vadd.f32 %v3633, %v3723
      %v3732 = vadd.f32 %v3634, %v3724
      %v3733 = vadd.f32 %v3635, %v3725
      %s3734 = scalar_lea.vmem %s16, 192
      %v3735 = vld [vmem:[%s3734] sm:$0xff]
      %v3736 = vld [vmem:[%s3734 + $0x8] sm:$0xff]
      %v3737 = vld [vmem:[%s3734 + $0x10] sm:$0xff]
      %v3738 = vld [vmem:[%s3734 + $0x18] sm:$0xff]
      %v3739 = vld [vmem:[%s3734 + $0x20] sm:$0xff]
      %v3740 = vld [vmem:[%s3734 + $0x28] sm:$0xff]
      %v3741 = vld [vmem:[%s3734 + $0x30] sm:$0xff]
      %v3742 = vld [vmem:[%s3734 + $0x38] sm:$0xff]
      %3744 = vset.pattern.permute.xlu0 0
      %3745 = vperm.xlu0 %3744, %v3735
      %v3746 = vpop.permute.xlu0 %3745
      %3749 = vset.pattern.permute.xlu0 0
      %3750 = vperm.xlu0 %3749, %v3736
      %v3751 = vpop.permute.xlu0 %3750
      %3754 = vset.pattern.permute.xlu0 0
      %3755 = vperm.xlu0 %3754, %v3737
      %v3756 = vpop.permute.xlu0 %3755
      %3759 = vset.pattern.permute.xlu0 0
      %3760 = vperm.xlu0 %3759, %v3738
      %v3761 = vpop.permute.xlu0 %3760
      %3764 = vset.pattern.permute.xlu0 0
      %3765 = vperm.xlu0 %3764, %v3739
      %v3766 = vpop.permute.xlu0 %3765
      %3769 = vset.pattern.permute.xlu0 0
      %3770 = vperm.xlu0 %3769, %v3740
      %v3771 = vpop.permute.xlu0 %3770
      %3774 = vset.pattern.permute.xlu0 0
      %3775 = vperm.xlu0 %3774, %v3741
      %v3776 = vpop.permute.xlu0 %3775
      %3779 = vset.pattern.permute.xlu0 0
      %3780 = vperm.xlu0 %3779, %v3742
      %v3781 = vpop.permute.xlu0 %3780
      %v3783 = vmul.f32 %v3475, %v3746
      %v3784 = vmul.f32 %v3474, %v3751
      %v3785 = vmul.f32 %v3473, %v3756
      %v3786 = vmul.f32 %v3472, %v3761
      %v3787 = vmul.f32 %v3471, %v3766
      %v3788 = vmul.f32 %v3470, %v3771
      %v3789 = vmul.f32 %v3469, %v3776
      %v3790 = vmul.f32 %v3468, %v3781
      %s3791 = scalar_lea.vmem %s12, 3
      %v3792 = vld [vmem:[%s3791] sm:$0x1]
      %v3794 = vlaneseq
      %v3795 = vshrl.u32 %v3794, 7
      %v3796 = vsub.s32 0, %v3795
      %v3797 = vrot.slane %v3792, %v3796
      %v3799 = vmul.f32 %v3783, %v3797
      %v3800 = vmul.f32 %v3784, %v3797
      %v3801 = vmul.f32 %v3785, %v3797
      %v3802 = vmul.f32 %v3786, %v3797
      %v3803 = vmul.f32 %v3787, %v3797
      %v3804 = vmul.f32 %v3788, %v3797
      %v3805 = vmul.f32 %v3789, %v3797
      %v3806 = vmul.f32 %v3790, %v3797
      %v3807 = vadd.f32 %v3726, %v3799
      %v3808 = vadd.f32 %v3727, %v3800
      %v3809 = vadd.f32 %v3728, %v3801
      %v3810 = vadd.f32 %v3729, %v3802
      %v3811 = vadd.f32 %v3730, %v3803
      %v3812 = vadd.f32 %v3731, %v3804
      %v3813 = vadd.f32 %v3732, %v3805
      %v3814 = vadd.f32 %v3733, %v3806
      %s3815 = scalar_lea.vmem %s16, 320
      %v3816 = vld [vmem:[%s3815] sm:$0xff]
      %v3817 = vld [vmem:[%s3815 + $0x8] sm:$0xff]
      %v3818 = vld [vmem:[%s3815 + $0x10] sm:$0xff]
      %v3819 = vld [vmem:[%s3815 + $0x18] sm:$0xff]
      %v3820 = vld [vmem:[%s3815 + $0x20] sm:$0xff]
      %v3821 = vld [vmem:[%s3815 + $0x28] sm:$0xff]
      %v3822 = vld [vmem:[%s3815 + $0x30] sm:$0xff]
      %v3823 = vld [vmem:[%s3815 + $0x38] sm:$0xff]
      %3825 = vset.pattern.permute.xlu0 0
      %3826 = vperm.xlu0 %3825, %v3816
      %v3827 = vpop.permute.xlu0 %3826
      %3830 = vset.pattern.permute.xlu0 0
      %3831 = vperm.xlu0 %3830, %v3817
      %v3832 = vpop.permute.xlu0 %3831
      %3835 = vset.pattern.permute.xlu0 0
      %3836 = vperm.xlu0 %3835, %v3818
      %v3837 = vpop.permute.xlu0 %3836
      %3840 = vset.pattern.permute.xlu0 0
      %3841 = vperm.xlu0 %3840, %v3819
      %v3842 = vpop.permute.xlu0 %3841
      %3845 = vset.pattern.permute.xlu0 0
      %3846 = vperm.xlu0 %3845, %v3820
      %v3847 = vpop.permute.xlu0 %3846
      %3850 = vset.pattern.permute.xlu0 0
      %3851 = vperm.xlu0 %3850, %v3821
      %v3852 = vpop.permute.xlu0 %3851
      %3855 = vset.pattern.permute.xlu0 0
      %3856 = vperm.xlu0 %3855, %v3822
      %v3857 = vpop.permute.xlu0 %3856
      %3860 = vset.pattern.permute.xlu0 0
      %3861 = vperm.xlu0 %3860, %v3823
      %v3862 = vpop.permute.xlu0 %3861
      %v3864 = vmul.f32 %v3651, %v3827
      %v3865 = vmul.f32 %v3650, %v3832
      %v3866 = vmul.f32 %v3649, %v3837
      %v3867 = vmul.f32 %v3648, %v3842
      %v3868 = vmul.f32 %v3647, %v3847
      %v3869 = vmul.f32 %v3646, %v3852
      %v3870 = vmul.f32 %v3645, %v3857
      %v3871 = vmul.f32 %v3652, %v3862
      %s3872 = scalar_lea.vmem %s12, 5
      %v3873 = vld [vmem:[%s3872] sm:$0x1]
      %v3875 = vlaneseq
      %v3876 = vshrl.u32 %v3875, 7
      %v3877 = vsub.s32 0, %v3876
      %v3878 = vrot.slane %v3873, %v3877
      %v3880 = vmul.f32 %v3864, %v3878
      %v3881 = vmul.f32 %v3865, %v3878
      %v3882 = vmul.f32 %v3866, %v3878
      %v3883 = vmul.f32 %v3867, %v3878
      %v3884 = vmul.f32 %v3868, %v3878
      %v3885 = vmul.f32 %v3869, %v3878
      %v3886 = vmul.f32 %v3870, %v3878
      %v3887 = vmul.f32 %v3871, %v3878
      %v3888 = vadd.f32 %v3807, %v3880
      %v3889 = vadd.f32 %v3808, %v3881
      %v3890 = vadd.f32 %v3809, %v3882
      %v3891 = vadd.f32 %v3810, %v3883
      %v3892 = vadd.f32 %v3811, %v3884
      %v3893 = vadd.f32 %v3812, %v3885
      %v3894 = vadd.f32 %v3813, %v3886
      %v3895 = vadd.f32 %v3814, %v3887
      %s3896 = scalar_lea.vmem %s16, 384
      %v3897 = vld [vmem:[%s3896] sm:$0xff]
      %v3898 = vld [vmem:[%s3896 + $0x8] sm:$0xff]
      %v3899 = vld [vmem:[%s3896 + $0x10] sm:$0xff]
      %v3900 = vld [vmem:[%s3896 + $0x18] sm:$0xff]
      %v3901 = vld [vmem:[%s3896 + $0x20] sm:$0xff]
      %v3902 = vld [vmem:[%s3896 + $0x28] sm:$0xff]
      %v3903 = vld [vmem:[%s3896 + $0x30] sm:$0xff]
      %v3904 = vld [vmem:[%s3896 + $0x38] sm:$0xff]
      %3906 = vset.pattern.permute.xlu0 0
      %3907 = vperm.xlu0 %3906, %v3897
      %v3908 = vpop.permute.xlu0 %3907
      %3911 = vset.pattern.permute.xlu0 0
      %3912 = vperm.xlu0 %3911, %v3898
      %v3913 = vpop.permute.xlu0 %3912
      %3916 = vset.pattern.permute.xlu0 0
      %3917 = vperm.xlu0 %3916, %v3899
      %v3918 = vpop.permute.xlu0 %3917
      %3921 = vset.pattern.permute.xlu0 0
      %3922 = vperm.xlu0 %3921, %v3900
      %v3923 = vpop.permute.xlu0 %3922
      %3926 = vset.pattern.permute.xlu0 0
      %3927 = vperm.xlu0 %3926, %v3901
      %v3928 = vpop.permute.xlu0 %3927
      %3931 = vset.pattern.permute.xlu0 0
      %3932 = vperm.xlu0 %3931, %v3902
      %v3933 = vpop.permute.xlu0 %3932
      %3936 = vset.pattern.permute.xlu0 0
      %3937 = vperm.xlu0 %3936, %v3903
      %v3938 = vpop.permute.xlu0 %3937
      %3941 = vset.pattern.permute.xlu0 0
      %3942 = vperm.xlu0 %3941, %v3904
      %v3943 = vpop.permute.xlu0 %3942
      %v3945 = vmul.f32 %v3474, %v3908
      %v3946 = vmul.f32 %v3473, %v3913
      %v3947 = vmul.f32 %v3472, %v3918
      %v3948 = vmul.f32 %v3471, %v3923
      %v3949 = vmul.f32 %v3470, %v3928
      %v3950 = vmul.f32 %v3469, %v3933
      %v3951 = vmul.f32 %v3468, %v3938
      %v3952 = vmul.f32 %v3475, %v3943
      %s3953 = scalar_lea.vmem %s12, 6
      %v3954 = vld [vmem:[%s3953] sm:$0x1]
      %v3956 = vlaneseq
      %v3957 = vshrl.u32 %v3956, 7
      %v3958 = vsub.s32 0, %v3957
      %v3959 = vrot.slane %v3954, %v3958
      %v3961 = vmul.f32 %v3945, %v3959
      %v3962 = vmul.f32 %v3946, %v3959
      %v3963 = vmul.f32 %v3947, %v3959
      %v3964 = vmul.f32 %v3948, %v3959
      %v3965 = vmul.f32 %v3949, %v3959
      %v3966 = vmul.f32 %v3950, %v3959
      %v3967 = vmul.f32 %v3951, %v3959
      %v3968 = vmul.f32 %v3952, %v3959
      %v3969 = vadd.f32 %v3888, %v3961
      %v3970 = vadd.f32 %v3889, %v3962
      %v3971 = vadd.f32 %v3890, %v3963
      %v3972 = vadd.f32 %v3891, %v3964
      %v3973 = vadd.f32 %v3892, %v3965
      %v3974 = vadd.f32 %v3893, %v3966
      %v3975 = vadd.f32 %v3894, %v3967
      %v3976 = vadd.f32 %v3895, %v3968
      %s3977 = scalar_lea.vmem %s16, 448
      %v3978 = vld [vmem:[%s3977] sm:$0xff]
      %v3979 = vld [vmem:[%s3977 + $0x8] sm:$0xff]
      %v3980 = vld [vmem:[%s3977 + $0x10] sm:$0xff]
      %v3981 = vld [vmem:[%s3977 + $0x18] sm:$0xff]
      %v3982 = vld [vmem:[%s3977 + $0x20] sm:$0xff]
      %v3983 = vld [vmem:[%s3977 + $0x28] sm:$0xff]
      %v3984 = vld [vmem:[%s3977 + $0x30] sm:$0xff]
      %v3985 = vld [vmem:[%s3977 + $0x38] sm:$0xff]
      %3987 = vset.pattern.permute.xlu0 0
      %3988 = vperm.xlu0 %3987, %v3978
      %v3989 = vpop.permute.xlu0 %3988
      %3992 = vset.pattern.permute.xlu0 0
      %3993 = vperm.xlu0 %3992, %v3979
      %v3994 = vpop.permute.xlu0 %3993
      %3997 = vset.pattern.permute.xlu0 0
      %3998 = vperm.xlu0 %3997, %v3980
      %v3999 = vpop.permute.xlu0 %3998
      %4002 = vset.pattern.permute.xlu0 0
      %4003 = vperm.xlu0 %4002, %v3981
      %v4004 = vpop.permute.xlu0 %4003
      %4007 = vset.pattern.permute.xlu0 0
      %4008 = vperm.xlu0 %4007, %v3982
      %v4009 = vpop.permute.xlu0 %4008
      %4012 = vset.pattern.permute.xlu0 0
      %4013 = vperm.xlu0 %4012, %v3983
      %v4014 = vpop.permute.xlu0 %4013
      %4017 = vset.pattern.permute.xlu0 0
      %4018 = vperm.xlu0 %4017, %v3984
      %v4019 = vpop.permute.xlu0 %4018
      %4022 = vset.pattern.permute.xlu0 0
      %4023 = vperm.xlu0 %4022, %v3985
      %v4024 = vpop.permute.xlu0 %4023
      %v4026 = vmul.f32 %v3399, %v3989
      %v4027 = vmul.f32 %v3404, %v3994
      %v4028 = vmul.f32 %v3407, %v3999
      %v4029 = vmul.f32 %v3412, %v4004
      %v4030 = vmul.f32 %v3415, %v4009
      %v4031 = vmul.f32 %v3420, %v4014
      %v4032 = vmul.f32 %v3423, %v4019
      %v4033 = vmul.f32 %v3396, %v4024
      %s4034 = scalar_lea.vmem %s12, 7
      %v4035 = vld [vmem:[%s4034] sm:$0x1]
      %v4037 = vlaneseq
      %v4038 = vshrl.u32 %v4037, 7
      %v4039 = vsub.s32 0, %v4038
      %v4040 = vrot.slane %v4035, %v4039
      %v4042 = vmul.f32 %v4026, %v4040
      %v4043 = vmul.f32 %v4027, %v4040
      %v4044 = vmul.f32 %v4028, %v4040
      %v4045 = vmul.f32 %v4029, %v4040
      %v4046 = vmul.f32 %v4030, %v4040
      %v4047 = vmul.f32 %v4031, %v4040
      %v4048 = vmul.f32 %v4032, %v4040
      %v4049 = vmul.f32 %v4033, %v4040
      %v4050 = vadd.f32 %v3969, %v4042
      %v4051 = vadd.f32 %v3970, %v4043
      %v4052 = vadd.f32 %v3971, %v4044
      %v4053 = vadd.f32 %v3972, %v4045
      %v4054 = vadd.f32 %v3973, %v4046
      %v4055 = vadd.f32 %v3974, %v4047
      %v4056 = vadd.f32 %v3975, %v4048
      %v4057 = vadd.f32 %v3976, %v4049
      %s4058 = scalar_lea.vmem %s16, 512
      %v4059 = vld [vmem:[%s4058] sm:$0xff]
      %v4060 = vld [vmem:[%s4058 + $0x8] sm:$0xff]
      %v4061 = vld [vmem:[%s4058 + $0x10] sm:$0xff]
      %v4062 = vld [vmem:[%s4058 + $0x18] sm:$0xff]
      %v4063 = vld [vmem:[%s4058 + $0x20] sm:$0xff]
      %v4064 = vld [vmem:[%s4058 + $0x28] sm:$0xff]
      %v4065 = vld [vmem:[%s4058 + $0x30] sm:$0xff]
      %v4066 = vld [vmem:[%s4058 + $0x38] sm:$0xff]
      %4068 = vset.pattern.permute.xlu0 0
      %4069 = vperm.xlu0 %4068, %v4059
      %v4070 = vpop.permute.xlu0 %4069
      %4073 = vset.pattern.permute.xlu0 0
      %4074 = vperm.xlu0 %4073, %v4060
      %v4075 = vpop.permute.xlu0 %4074
      %4078 = vset.pattern.permute.xlu0 0
      %4079 = vperm.xlu0 %4078, %v4061
      %v4080 = vpop.permute.xlu0 %4079
      %4083 = vset.pattern.permute.xlu0 0
      %4084 = vperm.xlu0 %4083, %v4062
      %v4085 = vpop.permute.xlu0 %4084
      %4088 = vset.pattern.permute.xlu0 0
      %4089 = vperm.xlu0 %4088, %v4063
      %v4090 = vpop.permute.xlu0 %4089
      %4093 = vset.pattern.permute.xlu0 0
      %4094 = vperm.xlu0 %4093, %v4064
      %v4095 = vpop.permute.xlu0 %4094
      %4098 = vset.pattern.permute.xlu0 0
      %4099 = vperm.xlu0 %4098, %v4065
      %v4100 = vpop.permute.xlu0 %4099
      %4103 = vset.pattern.permute.xlu0 0
      %4104 = vperm.xlu0 %4103, %v4066
      %v4105 = vpop.permute.xlu0 %4104
      %v4107 = vmul.f32 %v3650, %v4070
      %v4108 = vmul.f32 %v3649, %v4075
      %v4109 = vmul.f32 %v3648, %v4080
      %v4110 = vmul.f32 %v3647, %v4085
      %v4111 = vmul.f32 %v3646, %v4090
      %v4112 = vmul.f32 %v3645, %v4095
      %v4113 = vmul.f32 %v3652, %v4100
      %v4114 = vmul.f32 %v3651, %v4105
      %s4115 = scalar_lea.vmem %s12, 8
      %v4116 = vld [vmem:[%s4115] sm:$0x1]
      %v4118 = vlaneseq
      %v4119 = vshrl.u32 %v4118, 7
      %v4120 = vsub.s32 0, %v4119
      %v4121 = vrot.slane %v4116, %v4120
      %v4123 = vmul.f32 %v4107, %v4121
      %v4124 = vmul.f32 %v4108, %v4121
      %v4125 = vmul.f32 %v4109, %v4121
      %v4126 = vmul.f32 %v4110, %v4121
      %v4127 = vmul.f32 %v4111, %v4121
      %v4128 = vmul.f32 %v4112, %v4121
      %v4129 = vmul.f32 %v4113, %v4121
      %v4130 = vmul.f32 %v4114, %v4121
      %v4131 = vadd.f32 %v4050, %v4123
      %v4132 = vadd.f32 %v4051, %v4124
      %v4133 = vadd.f32 %v4052, %v4125
      %v4134 = vadd.f32 %v4053, %v4126
      %v4135 = vadd.f32 %v4054, %v4127
      %v4136 = vadd.f32 %v4055, %v4128
      %v4137 = vadd.f32 %v4056, %v4129
      %v4138 = vadd.f32 %v4057, %v4130
      %v4139 = vmul.f32 %v4131, 0.5
      %v4140 = vmul.f32 %v4132, 0.5
      %v4141 = vmul.f32 %v4133, 0.5
      %v4142 = vmul.f32 %v4134, 0.5
      %v4143 = vmul.f32 %v4135, 0.5
      %v4144 = vmul.f32 %v4136, 0.5
      %v4145 = vmul.f32 %v4137, 0.5
      %v4146 = vmul.f32 %v4138, 0.5
      %v4147 = vmul.f32 %v4131, 0.044715
      %v4148 = vmul.f32 %v4132, 0.044715
      %v4149 = vmul.f32 %v4133, 0.044715
      %v4150 = vmul.f32 %v4134, 0.044715
      %v4151 = vmul.f32 %v4135, 0.044715
      %v4152 = vmul.f32 %v4136, 0.044715
      %v4153 = vmul.f32 %v4137, 0.044715
      %v4154 = vmul.f32 %v4138, 0.044715
      %v4155 = vmul.f32 %v4147, %v4131
      %v4156 = vmul.f32 %v4148, %v4132
      %v4157 = vmul.f32 %v4149, %v4133
      %v4158 = vmul.f32 %v4150, %v4134
      %v4159 = vmul.f32 %v4151, %v4135
      %v4160 = vmul.f32 %v4152, %v4136
      %v4161 = vmul.f32 %v4153, %v4137
      %v4162 = vmul.f32 %v4154, %v4138
      %v4163 = vmul.f32 %v4155, %v4131
      %v4164 = vmul.f32 %v4156, %v4132
      %v4165 = vmul.f32 %v4157, %v4133
      %v4166 = vmul.f32 %v4158, %v4134
      %v4167 = vmul.f32 %v4159, %v4135
      %v4168 = vmul.f32 %v4160, %v4136
      %v4169 = vmul.f32 %v4161, %v4137
      %v4170 = vmul.f32 %v4162, %v4138
      %v4171 = vadd.f32 %v4131, %v4163
      %v4172 = vadd.f32 %v4132, %v4164
      %v4173 = vadd.f32 %v4133, %v4165
      %v4174 = vadd.f32 %v4134, %v4166
      %v4175 = vadd.f32 %v4135, %v4167
      %v4176 = vadd.f32 %v4136, %v4168
      %v4177 = vadd.f32 %v4137, %v4169
      %v4178 = vadd.f32 %v4138, %v4170
      %v4179 = vmul.f32 %v4171, 0.7978846
      %v4180 = vmul.f32 %v4172, 0.7978846
      %v4181 = vmul.f32 %v4173, 0.7978846
      %v4182 = vmul.f32 %v4174, 0.7978846
      %v4183 = vmul.f32 %v4175, 0.7978846
      %v4184 = vmul.f32 %v4176, 0.7978846
      %v4185 = vmul.f32 %v4177, 0.7978846
      %v4186 = vmul.f32 %v4178, 0.7978846
      %v4187 = vtanh.pop %v4179
      %v4188 = vtanh.pop %v4180
      %v4189 = vtanh.pop %v4181
      %v4190 = vtanh.pop %v4182
      %v4191 = vtanh.pop %v4183
      %v4192 = vtanh.pop %v4184
      %v4193 = vtanh.pop %v4185
      %v4194 = vtanh.pop %v4186
      %v4195 = vadd.f32 %v4187, 1.0
      %v4196 = vadd.f32 %v4188, 1.0
      %v4197 = vadd.f32 %v4189, 1.0
      %v4198 = vadd.f32 %v4190, 1.0
      %v4199 = vadd.f32 %v4191, 1.0
      %v4200 = vadd.f32 %v4192, 1.0
      %v4201 = vadd.f32 %v4193, 1.0
      %v4202 = vadd.f32 %v4194, 1.0
      %v4203 = vmul.f32 %v4139, %v4195
      %v4204 = vmul.f32 %v4140, %v4196
      %v4205 = vmul.f32 %v4141, %v4197
      %v4206 = vmul.f32 %v4142, %v4198
      %v4207 = vmul.f32 %v4143, %v4199
      %v4208 = vmul.f32 %v4144, %v4200
      %v4209 = vmul.f32 %v4145, %v4201
      %v4210 = vmul.f32 %v4146, %v4202
      %v4211 = vpack.c.bf16 %v4204, %v4203
      %v4212 = vpack.c.bf16 %v4206, %v4205
      %v4213 = vpack.c.bf16 %v4208, %v4207
      %v4214 = vpack.c.bf16 %v4210, %v4209
      %v4215 = vld [vmem:[%s14] sm:$0xf]
      %v4216 = vld [vmem:[%s14 + $0x4] sm:$0xf]
      %v4217 = vld [vmem:[%s14 + $0x8] sm:$0xf]
      %v4218 = vld [vmem:[%s14 + $0xc] sm:$0xf]
      %v4219 = vld [vmem:[%s14 + $0x10] sm:$0xf]
      %v4220 = vld [vmem:[%s14 + $0x14] sm:$0xf]
      %v4221 = vld [vmem:[%s14 + $0x18] sm:$0xf]
      %v4222 = vld [vmem:[%s14 + $0x1c] sm:$0xf]
      %v4223 = vld [vmem:[%s14 + $0x20] sm:$0xf]
      %v4224 = vld [vmem:[%s14 + $0x24] sm:$0xf]
      %v4225 = vld [vmem:[%s14 + $0x28] sm:$0xf]
      %v4226 = vld [vmem:[%s14 + $0x2c] sm:$0xf]
      %v4227 = vld [vmem:[%s14 + $0x30] sm:$0xf]
      %v4228 = vld [vmem:[%s14 + $0x34] sm:$0xf]
      %v4229 = vld [vmem:[%s14 + $0x38] sm:$0xf]
      %v4230 = vld [vmem:[%s14 + $0x3c] sm:$0xf]
      %v4247 = vunpack.c.l.b16 %v4215
      %v4248 = vunpack.c.l.b16 %v4216
      %v4249 = vunpack.c.l.b16 %v4217
      %v4250 = vunpack.c.l.b16 %v4218
      %v4251 = vunpack.c.l.b16 %v4219
      %v4252 = vunpack.c.l.b16 %v4220
      %v4253 = vunpack.c.l.b16 %v4221
      %v4254 = vunpack.c.l.b16 %v4222
      %v4255 = vunpack.c.l.b16 %v4223
      %v4256 = vunpack.c.l.b16 %v4224
      %v4257 = vunpack.c.l.b16 %v4225
      %v4258 = vunpack.c.l.b16 %v4226
      %v4259 = vunpack.c.l.b16 %v4227
      %v4260 = vunpack.c.l.b16 %v4228
      %v4261 = vunpack.c.l.b16 %v4229
      %v4262 = vunpack.c.l.b16 %v4230
      %v4263 = vpack.c.b16 %v4248, %v4247
      %v4264 = vpack.c.b16 %v4250, %v4249
      %v4265 = vpack.c.b16 %v4252, %v4251
      %v4266 = vpack.c.b16 %v4254, %v4253
      %v4267 = vpack.c.b16 %v4256, %v4255
      %v4268 = vpack.c.b16 %v4258, %v4257
      %v4269 = vpack.c.b16 %v4260, %v4259
      %v4270 = vpack.c.b16 %v4262, %v4261
      %4279 = vmatprep.subr.bf16.mxu0 0
      %4280 = vmatpush1.bf16.msra.mxu0 %v4270
      %4281 = vmatprep.subr.bf16.mxu0 0
      %4282 = vmatpush1.bf16.msra.mxu0 %v4269
      %4283 = vmatprep.subr.bf16.mxu0 0
      %4284 = vmatpush1.bf16.msra.mxu0 %v4268
      %4285 = vmatprep.subr.bf16.mxu0 0
      %4286 = vmatpush1.bf16.msra.mxu0 %v4267
      %4287 = vmatprep.subr.bf16.mxu0 0
      %4288 = vmatpush1.bf16.msra.mxu0 %v4266
      %4289 = vmatprep.subr.bf16.mxu0 0
      %4290 = vmatpush1.bf16.msra.mxu0 %v4265
      %4291 = vmatprep.subr.bf16.mxu0 0
      %4292 = vmatpush1.bf16.msra.mxu0 %v4264
      %4293 = vmatprep.subr.bf16.mxu0 0
      %4294 = vmatpush1.bf16.msra.mxu0 %v4263
      %4295 = vmatprep.subr.bf16.mxu0 0
      %4296 = vmatpush2.bf16.msra.mxu0 0
      %4297 = vmatprep.subr.bf16.mxu0 0
      %4298 = vmatpush2.bf16.msra.mxu0 0
      %4299 = vmatprep.subr.bf16.mxu0 0
      %4300 = vmatpush2.bf16.msra.mxu0 0
      %4301 = vmatprep.subr.bf16.mxu0 0
      %4302 = vmatpush2.bf16.msra.mxu0 0
      %4303 = vmatprep.subr.bf16.mxu0 0
      %4304 = vmatpush2.bf16.msra.mxu0 0
      %4305 = vmatprep.subr.bf16.mxu0 0
      %4306 = vmatpush2.bf16.msra.mxu0 0
      %4307 = vmatprep.subr.bf16.mxu0 0
      %4308 = vmatpush2.bf16.msra.mxu0 0
      %4309 = vmatprep.subr.bf16.mxu0 0
      %4310 = vmatpush2.bf16.msra.mxu0 0
      %4311 = vmatprep.mubr.bf16.mxu0 0
      %4312 = vmatmul.mubr.bf16.gmra.mxu0 %v4211
      %v4313 = vpop.f32.mrf.mxu0
      %v4314 = vadd.f32 0.0, %v4313
      %v4315 = vpop.f32.mrf.mxu0
      %v4316 = vpop.f32.mrf.mxu0
      %v4317 = vadd.f32 0.0, %v4316
      %v4318 = vpop.f32.mrf.mxu0
      %4319 = vmatprep.mubr.bf16.mxu0 0
      %4320 = vmatmul.mubr.bf16.gmra.mxu0 %v4212
      %v4321 = vpop.f32.mrf.mxu0
      %v4322 = vadd.f32 0.0, %v4321
      %v4323 = vpop.f32.mrf.mxu0
      %v4324 = vpop.f32.mrf.mxu0
      %v4325 = vadd.f32 0.0, %v4324
      %v4326 = vpop.f32.mrf.mxu0
      %4327 = vmatprep.mubr.bf16.mxu0 0
      %4328 = vmatmul.mubr.bf16.gmra.mxu0 %v4213
      %v4329 = vpop.f32.mrf.mxu0
      %v4330 = vadd.f32 0.0, %v4329
      %v4331 = vpop.f32.mrf.mxu0
      %v4332 = vpop.f32.mrf.mxu0
      %v4333 = vadd.f32 0.0, %v4332
      %v4334 = vpop.f32.mrf.mxu0
      %4335 = vmatprep.mubr.bf16.mxu0 0
      %4336 = vmatmul.mubr.bf16.gmra.mxu0 %v4214
      %v4337 = vpop.f32.mrf.mxu0
      %v4338 = vadd.f32 0.0, %v4337
      %v4339 = vpop.f32.mrf.mxu0
      %v4340 = vpop.f32.mrf.mxu0
      %v4341 = vadd.f32 0.0, %v4340
      %v4342 = vpop.f32.mrf.mxu0
      %4343 = vdwg.mxu0
      %v4344 = vadd.f32 %v3180, %v4314
      %v4345 = vadd.f32 %v3181, %v4317
      %v4346 = vadd.f32 %v3182, %v4322
      %v4347 = vadd.f32 %v3183, %v4325
      %v4348 = vadd.f32 %v3184, %v4330
      %v4349 = vadd.f32 %v3185, %v4333
      %v4350 = vadd.f32 %v3186, %v4338
      %v4351 = vadd.f32 %v3187, %v4341
      %v4352 = vld [vmem:[%s15] sm:$0x1]
      %v4354 = vlaneseq
      %v4355 = vshrl.u32 %v4354, 7
      %v4356 = vsub.s32 0, %v4355
      %v4357 = vrot.slane %v4352, %v4356
      %v4359 = vadd.f32 %v4344, %v4357
      %v4360 = vadd.f32 %v4345, %v4357
      %v4361 = vadd.f32 %v4346, %v4357
      %v4362 = vadd.f32 %v4347, %v4357
      %v4363 = vadd.f32 %v4348, %v4357
      %v4364 = vadd.f32 %v4349, %v4357
      %v4365 = vadd.f32 %v4350, %v4357
      %v4366 = vadd.f32 %v4351, %v4357
      %4367 = vst.msk [vmem:[%s548] sm:$0xff] %vm560, %v4359
      %4368 = vst.msk [vmem:[%s548 + $0x8] sm:$0xff] %vm560, %v4360
      %4369 = vst.msk [vmem:[%s548 + $0x10] sm:$0xff] %vm560, %v4361
      %4370 = vst.msk [vmem:[%s548 + $0x18] sm:$0xff] %vm560, %v4362
      %4371 = vst.msk [vmem:[%s548 + $0x20] sm:$0xff] %vm560, %v4363
      %4372 = vst.msk [vmem:[%s548 + $0x28] sm:$0xff] %vm560, %v4364
      %4373 = vst.msk [vmem:[%s548 + $0x30] sm:$0xff] %vm560, %v4365
      %4374 = vst.msk [vmem:[%s548 + $0x38] sm:$0xff] %vm560, %v4366
      %p4375 = scmp.lt.s32.totalorder %s28, 1
      %s4376 = scalar_select %p4375, %s28, 1
      %s4377 = smul.addr %s4376, 8
      %s4378 = smul.addr %s4377, 8
      %s4379 = scalar_lea.vmem %s17, %s4378
      // Predicated region
      $region89: #{tpu_custom_call.1} parent=87 // pred_check
        %p4380 = pneg %p408
      $region90: #{tpu_custom_call.1} parent=87 // pred_check_branch
        %4382 = sbr.rel (%p4380) target = $region92
      $region91: #{tpu_custom_call.1} parent=87 // pred_region
        _
      $region92: #{tpu_custom_call.1} parent=87 // pred_fallthru
        _
    $region88: #{tpu_custom_call.1} parent=5 // pred_fallthru
      _
    %p4383 = scmp.le.s32.totalorder 2, %s23
    // Predicated region
    $region93: #{tpu_custom_call.1} parent=5 // pred_check
      %p4384 = pneg %p4383
    $region94: #{tpu_custom_call.1} parent=5 // pred_check_branch
      %4386 = sbr.rel (%p4384) target = $region96
    $region95: #{tpu_custom_call.1} parent=5 // pred_region
      %s4387 = ssub.s32 %s23, 2
      // Predicated region
      $region97: #{tpu_custom_call.1} parent=95 // pred_check
        %p4388 = pneg %p414
      $region98: #{tpu_custom_call.1} parent=95 // pred_check_branch
        %4390 = sbr.rel (%p4388) target = $region100
      $region99: #{tpu_custom_call.1} parent=95 // pred_region
        %p4391 = scmp.lt.s32.totalorder %s29, 1
        %s4392 = scalar_select %p4391, %s29, 1
        %s4393 = smul.addr %s4392, 8
        %s4394 = smul.addr %s4393, 8
        %s4395 = scalar_lea.vmem %s17, %s4394
      $region100: #{tpu_custom_call.1} parent=95 // pred_fallthru
        _
    $region96: #{tpu_custom_call.1} parent=5 // pred_fallthru
      _
  $region6: #{tpu_custom_call.1} parent=0 // loop_footer
    %s27 = sadd.s32 1, %s23
  $region7: #{tpu_custom_call.1} parent=0 // loop_footer_branch
    %22 = sbr.rel target = $region3
  $region8: #{tpu_custom_call.1} parent=0 // loop_exit
    _

</llo_original>
